<compile_context>
chip_gen: v7x
topology: tpu7x:2x2x1
jax: 0.10.0
libtpu: 0.0.40
codegen_flags: <defaults>
</compile_context>

<pallas_src>
import functools

import jax
import jax.numpy as jnp
from jax.experimental import pallas as pl
from jax.experimental.pallas import tpu as pltpu


def _round_up(x, m):
    return (x + m - 1) // m * m


# ----------------------------------------------------------------------------
# Fused kernel: conv(7x7/s2) + BN(eval) + ReLU + global-avg-pool + fc per image
# ----------------------------------------------------------------------------
def _make_fused_kernel(OH, OW, K4, OCP, NCP, row_chunk):
    inv_hw = 1.0 / float(OH * OW)

    def kernel(xs_ref, w_ref, scale_ref, shift_ref, fcw_ref, fcb_ref, o_ref):
        # xs_ref   : (PH, PW, K4)  bf16  space-to-depth input of one image
        # w_ref    : (16, K4, OCP) f32   conv weights per (a, b) shift
        # scale_ref: (1, OCP) f32   BN scale   shift_ref: (1, OCP) f32  BN shift
        # fcw_ref  : (OCP, NCP) f32        fcb_ref: (1, NCP) f32
        # o_ref    : (1, NCP) f32   per-image logits
        scale = scale_ref[...]
        shift = shift_ref[...]
        gap = jnp.zeros((1, OCP), jnp.float32)

        # Static chunking over output rows keeps the live conv-output accumulator
        # bounded (~row_chunk*OW rows) independent of image size.
        for r0 in range(0, OH, row_chunk):
            rows = min(row_chunk, OH - r0)
            acc = jnp.zeros((rows * OW, OCP), jnp.float32)
            # 7x7/stride-2 conv == 4x4 stride-1 conv on the space-to-depth input:
            # 16 shifted matmuls against the VMEM-resident image block.
            for a in range(4):
                for b in range(4):
                    slab = xs_ref[pl.ds(r0 + a, rows), pl.ds(b, OW), :]
                    slab = slab.astype(jnp.float32).reshape(rows * OW, K4)
                    acc = acc + jnp.dot(
                        slab, w_ref[a * 4 + b],
                        preferred_element_type=jnp.float32)
            y = jnp.maximum(acc * scale + shift, 0.0)        # BN(eval) + ReLU
            gap = gap + jnp.sum(y, axis=0, keepdims=True)    # fused GAP partial sum

        feat = gap * inv_hw                                   # (1, OCP)
        logits = jnp.dot(feat, fcw_ref[...],
                         preferred_element_type=jnp.float32) + fcb_ref[...]
        o_ref[...] = logits.astype(o_ref.dtype)

    return kernel


# ----------------------------------------------------------------------------
# Parameters (synthetic, deterministic)
# ----------------------------------------------------------------------------
def make_params(key, in_ch, feat_dim, num_class):
    k = jax.random.split(key, 6)
    conv_w = 0.05 * jax.random.normal(k[0], (feat_dim, in_ch, 7, 7), jnp.float32)
    bn_gamma = 1.0 + 0.01 * jax.random.normal(k[1], (feat_dim,), jnp.float32)
    bn_beta = 0.01 * jax.random.normal(k[2], (feat_dim,), jnp.float32)
    bn_mean = 0.01 * jax.random.normal(k[3], (feat_dim,), jnp.float32)
    bn_var = jnp.abs(1.0 + 0.01 * jax.random.normal(k[4], (feat_dim,), jnp.float32))
    fc_w = 0.05 * jax.random.normal(k[5], (num_class, feat_dim), jnp.float32)
    fc_b = jnp.linspace(-0.1, 0.1, num_class, dtype=jnp.float32)
    return dict(conv_w=conv_w, bn_gamma=bn_gamma, bn_beta=bn_beta,
                bn_mean=bn_mean, bn_var=bn_var, fc_w=fc_w, fc_b=fc_b)


# ----------------------------------------------------------------------------
# Forward (host-side layout plumbing only; single pallas_call)
# ----------------------------------------------------------------------------
@functools.partial(jax.jit, static_argnames=("num_segments", "new_length", "num_class"))
def tsn_forward(x, params, *, num_segments, new_length, num_class):
    B = x.shape[0]
    H, W = x.shape[-2], x.shape[-1]
    C = 3 * new_length
    xin = x.reshape(-1, C, H, W)                      # (N, C, H, W)
    N = xin.shape[0]

    # conv stem geometry: 7x7, stride 2, pad 3
    OH = (H + 2 * 3 - 7) // 2 + 1
    OW = (W + 2 * 3 - 7) // 2 + 1
    PH, PW = OH + 3, OW + 3                           # s2d spatial extents
    pb = 2 * PH - H - 3                               # extra bottom/right zero pad
    pr = 2 * PW - W - 3

    # Space-to-depth (stride-2 phase decomposition). Pure layout transform:
    # exactly the raw padded input bytes, no im2col inflation. Stream as bf16.
    x_pad = jnp.pad(xin, ((0, 0), (0, 0), (3, pb), (3, pr)))   # (N, C, 2PH, 2PW)
    xs = x_pad.reshape(N, C, PH, 2, PW, 2)
    xs = xs.transpose(0, 2, 4, 3, 5, 1).reshape(N, PH, PW, 4 * C)
    xs = xs.astype(jnp.bfloat16)
    K4 = 4 * C

    OC = params["conv_w"].shape[0]
    OCP = _round_up(OC, 128)                          # lane-dense feature dim
    NCP = _round_up(num_class, 128)                   # lane-dense class dim

    # Conv weights -> 16 per-shift matrices (K4, OCP), zero padded.
    w = jnp.pad(params["conv_w"], ((0, OCP - OC), (0, 0), (0, 1), (0, 1)))  # (OCP,C,8,8)
    w = w.reshape(OCP, C, 4, 2, 4, 2)                 # [oc, c, a, dh, b, dw]
    w = w.transpose(2, 4, 3, 5, 1, 0).reshape(16, K4, OCP).astype(jnp.float32)

    # BN(eval) folded into scale/shift, zero padded.
    eps = 1e-5
    scale = params["bn_gamma"] / jnp.sqrt(params["bn_var"] + eps)
    shift = params["bn_beta"] - params["bn_mean"] * scale
    scale = jnp.pad(scale, (0, OCP - OC))[None, :].astype(jnp.float32)
    shift = jnp.pad(shift, (0, OCP - OC))[None, :].astype(jnp.float32)

    # Final fc (the replaced last layer), zero padded to lane-dense dims.
    fcw = jnp.pad(params["fc_w"].T,
                  ((0, OCP - OC), (0, NCP - num_class))).astype(jnp.float32)
    fcb = jnp.pad(params["fc_b"], (0, NCP - num_class))[None, :].astype(jnp.float32)

    row_chunk = max(1, min(OH, 512 // max(OW, 1)))    # ~512 output rows per matmul
    kernel = _make_fused_kernel(OH, OW, K4, OCP, NCP, row_chunk)

    out = pl.pallas_call(
        kernel,
        out_shape=jax.ShapeDtypeStruct((N, 1, NCP), jnp.float32),
        grid_spec=pltpu.PrefetchScalarGridSpec(
            num_scalar_prefetch=0,
            grid=(N,),
            in_specs=[
                pl.BlockSpec((None, PH, PW, K4), lambda n: (n, 0, 0, 0)),
                pl.BlockSpec((16, K4, OCP), lambda n: (0, 0, 0)),
                pl.BlockSpec((1, OCP), lambda n: (0, 0)),
                pl.BlockSpec((1, OCP), lambda n: (0, 0)),
                pl.BlockSpec((OCP, NCP), lambda n: (0, 0)),
                pl.BlockSpec((1, NCP), lambda n: (0, 0)),
            ],
            out_specs=pl.BlockSpec((None, 1, NCP), lambda n: (n, 0, 0)),
        ),
        compiler_params=pltpu.CompilerParams(
            dimension_semantics=("parallel",),
            vmem_limit_bytes=32 * 1024 * 1024,
        ),
    )(xs, w, scale, shift, fcw, fcb)

    # avg consensus over segments + strip class padding (tiny; plain JAX).
    logits = out.reshape(B, num_segments, NCP)
    return jnp.mean(logits, axis=1)[:, :num_class]    # (B, num_class)


# ----------------------------------------------------------------------------
# Pure-JAX reference (same bf16-rounded input so the check is apples-to-apples)
# ----------------------------------------------------------------------------
def tsn_reference(x, params, *, num_segments, new_length, num_class):
    B = x.shape[0]
    H, W = x.shape[-2], x.shape[-1]
    C = 3 * new_length
    xin = x.reshape(-1, C, H, W).astype(jnp.bfloat16).astype(jnp.float32)
    y = jax.lax.conv_general_dilated(
        xin, params["conv_w"], window_strides=(2, 2),
        padding=((3, 3), (3, 3)),
        dimension_numbers=("NCHW", "OIHW", "NCHW"),
        precision=jax.lax.Precision.HIGHEST)
    eps = 1e-5
    g = params["bn_gamma"][None, :, None, None]
    b = params["bn_beta"][None, :, None, None]
    m = params["bn_mean"][None, :, None, None]
    v = params["bn_var"][None, :, None, None]
    y = g * (y - m) / jnp.sqrt(v + eps) + b
    y = jnp.maximum(y, 0.0)
    feats = jnp.mean(y, axis=(2, 3))                             # (N, feat)
    logits = feats @ params["fc_w"].T + params["fc_b"][None, :]  # (N, num_class)
    logits = logits.reshape(B, num_segments, num_class)
    return jnp.mean(logits, axis=1)


if __name__ == "__main__":
    B = 2
    num_segments = 4
    new_length = 1
    num_class = 10
    feat_dim = 32
    H = W = 16

    key = jax.random.PRNGKey(0)
    kx, kp = jax.random.split(key)
    x = jax.random.normal(kx, (B, num_segments * 3 * new_length, H, W), jnp.float32)
    params = make_params(kp, 3 * new_length, feat_dim, num_class)

    out = tsn_forward(x, params, num_segments=num_segments,
                      new_length=new_length, num_class=num_class)
    out = jax.block_until_ready(out)

    ref = tsn_reference(x, params, num_segments=num_segments,
                        new_length=new_length, num_class=num_class)
    assert out.shape == (B, num_class)
    max_diff = float(jnp.max(jnp.abs(out - ref)))
    assert jnp.allclose(out, ref, rtol=2e-3, atol=2e-3), f"max diff {max_diff}"

    print("KERNEL_OK")
</pallas_src>

<mosaic_0001>
module attributes {stable_mosaic.version = 11 : i64} {
  func.func @kernel(%arg0: i32, %arg1: memref<1x11x11x12xbf16, #tpu.memory_space<vmem>>, %arg2: memref<16x12x128xf32, #tpu.memory_space<vmem>>, %arg3: memref<1x128xf32, #tpu.memory_space<vmem>>, %arg4: memref<1x128xf32, #tpu.memory_space<vmem>>, %arg5: memref<128x128xf32, #tpu.memory_space<vmem>>, %arg6: memref<1x128xf32, #tpu.memory_space<vmem>>, %arg7: memref<1x1x128xf32, #tpu.memory_space<vmem>>) attributes {dimension_semantics = [#tpu.dimension_semantics<parallel>], iteration_bounds = array<i64: 8>, scalar_prefetch = 0 : i64, scratch_operands = 0 : i64, tpu.core_type = #tpu.core_type<tc>, window_params = [{transform_indices = @transform_0, window_bounds = array<i64: 1, 11, 11, 12>}, {pipeline_mode = #tpu.pipeline_mode<synchronous>, transform_indices = @transform_1, window_bounds = array<i64: 16, 12, 128>}, {pipeline_mode = #tpu.pipeline_mode<synchronous>, transform_indices = @transform_2, window_bounds = array<i64: 1, 128>}, {pipeline_mode = #tpu.pipeline_mode<synchronous>, transform_indices = @transform_3, window_bounds = array<i64: 1, 128>}, {pipeline_mode = #tpu.pipeline_mode<synchronous>, transform_indices = @transform_4, window_bounds = array<i64: 128, 128>}, {pipeline_mode = #tpu.pipeline_mode<synchronous>, transform_indices = @transform_5, window_bounds = array<i64: 1, 128>}, {transform_indices = @transform_6, window_bounds = array<i64: 1, 1, 128>}]} {
    %c0 = arith.constant 0 : index
    %c0_0 = arith.constant 0 : index
    %0 = vector.load %arg3[%c0, %c0_0] : memref<1x128xf32, #tpu.memory_space<vmem>>, vector<1x128xf32>
    %c0_1 = arith.constant 0 : index
    %c0_2 = arith.constant 0 : index
    %1 = vector.load %arg4[%c0_1, %c0_2] : memref<1x128xf32, #tpu.memory_space<vmem>>, vector<1x128xf32>
    %cst = arith.constant 0.000000e+00 : f32
    %2 = vector.broadcast %cst : f32 to vector<1x128xf32>
    %cst_3 = arith.constant 0.000000e+00 : f32
    %3 = vector.broadcast %cst_3 : f32 to vector<64x128xf32>
    %c0_4 = arith.constant 0 : index
    %c0_5 = arith.constant 0 : index
    %c0_6 = arith.constant 0 : index
    %c0_7 = arith.constant 0 : index
    %4 = vector.load %arg1[%c0_4, %c0_5, %c0_6, %c0_7] : memref<1x11x11x12xbf16, #tpu.memory_space<vmem>>, vector<1x8x8x12xbf16>
    %5 = vector.shape_cast %4 : vector<1x8x8x12xbf16> to vector<8x8x12xbf16>
    %6 = arith.extf %5 : vector<8x8x12xbf16> to vector<8x8x12xf32>
    %7 = vector.shape_cast %6 : vector<8x8x12xf32> to vector<64x12xf32>
    %c0_8 = arith.constant 0 : index
    %c0_9 = arith.constant 0 : index
    %c0_10 = arith.constant 0 : index
    %8 = vector.load %arg2[%c0_8, %c0_9, %c0_10] : memref<16x12x128xf32, #tpu.memory_space<vmem>>, vector<1x12x128xf32>
    %9 = vector.shape_cast %8 : vector<1x12x128xf32> to vector<12x128xf32>
    %cst_11 = arith.constant dense<0.000000e+00> : vector<64x128xf32>
    %10 = tpu.matmul %7, %9, %cst_11 {dimension_numbers = #tpu.dot_dimension_numbers<[1], [0], [0], [1], [0, 0, 1, 1], [], []>} : vector<64x12xf32>, vector<12x128xf32>, vector<64x128xf32> -> vector<64x128xf32>
    %11 = arith.addf %3, %10 : vector<64x128xf32>
    %c0_12 = arith.constant 0 : index
    %c0_13 = arith.constant 0 : index
    %c1 = arith.constant 1 : index
    %c0_14 = arith.constant 0 : index
    %12 = vector.load %arg1[%c0_12, %c0_13, %c1, %c0_14] : memref<1x11x11x12xbf16, #tpu.memory_space<vmem>>, vector<1x8x8x12xbf16>
    %13 = vector.shape_cast %12 : vector<1x8x8x12xbf16> to vector<8x8x12xbf16>
    %14 = arith.extf %13 : vector<8x8x12xbf16> to vector<8x8x12xf32>
    %15 = vector.shape_cast %14 : vector<8x8x12xf32> to vector<64x12xf32>
    %c1_15 = arith.constant 1 : index
    %c0_16 = arith.constant 0 : index
    %c0_17 = arith.constant 0 : index
    %16 = vector.load %arg2[%c1_15, %c0_16, %c0_17] : memref<16x12x128xf32, #tpu.memory_space<vmem>>, vector<1x12x128xf32>
    %17 = vector.shape_cast %16 : vector<1x12x128xf32> to vector<12x128xf32>
    %cst_18 = arith.constant dense<0.000000e+00> : vector<64x128xf32>
    %18 = tpu.matmul %15, %17, %cst_18 {dimension_numbers = #tpu.dot_dimension_numbers<[1], [0], [0], [1], [0, 0, 1, 1], [], []>} : vector<64x12xf32>, vector<12x128xf32>, vector<64x128xf32> -> vector<64x128xf32>
    %19 = arith.addf %11, %18 : vector<64x128xf32>
    %c0_19 = arith.constant 0 : index
    %c0_20 = arith.constant 0 : index
    %c2 = arith.constant 2 : index
    %c0_21 = arith.constant 0 : index
    %20 = vector.load %arg1[%c0_19, %c0_20, %c2, %c0_21] : memref<1x11x11x12xbf16, #tpu.memory_space<vmem>>, vector<1x8x8x12xbf16>
    %21 = vector.shape_cast %20 : vector<1x8x8x12xbf16> to vector<8x8x12xbf16>
    %22 = arith.extf %21 : vector<8x8x12xbf16> to vector<8x8x12xf32>
    %23 = vector.shape_cast %22 : vector<8x8x12xf32> to vector<64x12xf32>
    %c2_22 = arith.constant 2 : index
    %c0_23 = arith.constant 0 : index
    %c0_24 = arith.constant 0 : index
    %24 = vector.load %arg2[%c2_22, %c0_23, %c0_24] : memref<16x12x128xf32, #tpu.memory_space<vmem>>, vector<1x12x128xf32>
    %25 = vector.shape_cast %24 : vector<1x12x128xf32> to vector<12x128xf32>
    %cst_25 = arith.constant dense<0.000000e+00> : vector<64x128xf32>
    %26 = tpu.matmul %23, %25, %cst_25 {dimension_numbers = #tpu.dot_dimension_numbers<[1], [0], [0], [1], [0, 0, 1, 1], [], []>} : vector<64x12xf32>, vector<12x128xf32>, vector<64x128xf32> -> vector<64x128xf32>
    %27 = arith.addf %19, %26 : vector<64x128xf32>
    %c0_26 = arith.constant 0 : index
    %c0_27 = arith.constant 0 : index
    %c3 = arith.constant 3 : index
    %c0_28 = arith.constant 0 : index
    %28 = vector.load %arg1[%c0_26, %c0_27, %c3, %c0_28] : memref<1x11x11x12xbf16, #tpu.memory_space<vmem>>, vector<1x8x8x12xbf16>
    %29 = vector.shape_cast %28 : vector<1x8x8x12xbf16> to vector<8x8x12xbf16>
    %30 = arith.extf %29 : vector<8x8x12xbf16> to vector<8x8x12xf32>
    %31 = vector.shape_cast %30 : vector<8x8x12xf32> to vector<64x12xf32>
    %c3_29 = arith.constant 3 : index
    %c0_30 = arith.constant 0 : index
    %c0_31 = arith.constant 0 : index
    %32 = vector.load %arg2[%c3_29, %c0_30, %c0_31] : memref<16x12x128xf32, #tpu.memory_space<vmem>>, vector<1x12x128xf32>
    %33 = vector.shape_cast %32 : vector<1x12x128xf32> to vector<12x128xf32>
    %cst_32 = arith.constant dense<0.000000e+00> : vector<64x128xf32>
    %34 = tpu.matmul %31, %33, %cst_32 {dimension_numbers = #tpu.dot_dimension_numbers<[1], [0], [0], [1], [0, 0, 1, 1], [], []>} : vector<64x12xf32>, vector<12x128xf32>, vector<64x128xf32> -> vector<64x128xf32>
    %35 = arith.addf %27, %34 : vector<64x128xf32>
    %c0_33 = arith.constant 0 : index
    %c1_34 = arith.constant 1 : index
    %c0_35 = arith.constant 0 : index
    %c0_36 = arith.constant 0 : index
    %36 = vector.load %arg1[%c0_33, %c1_34, %c0_35, %c0_36] : memref<1x11x11x12xbf16, #tpu.memory_space<vmem>>, vector<1x8x8x12xbf16>
    %37 = vector.shape_cast %36 : vector<1x8x8x12xbf16> to vector<8x8x12xbf16>
    %38 = arith.extf %37 : vector<8x8x12xbf16> to vector<8x8x12xf32>
    %39 = vector.shape_cast %38 : vector<8x8x12xf32> to vector<64x12xf32>
    %c4 = arith.constant 4 : index
    %c0_37 = arith.constant 0 : index
    %c0_38 = arith.constant 0 : index
    %40 = vector.load %arg2[%c4, %c0_37, %c0_38] : memref<16x12x128xf32, #tpu.memory_space<vmem>>, vector<1x12x128xf32>
    %41 = vector.shape_cast %40 : vector<1x12x128xf32> to vector<12x128xf32>
    %cst_39 = arith.constant dense<0.000000e+00> : vector<64x128xf32>
    %42 = tpu.matmul %39, %41, %cst_39 {dimension_numbers = #tpu.dot_dimension_numbers<[1], [0], [0], [1], [0, 0, 1, 1], [], []>} : vector<64x12xf32>, vector<12x128xf32>, vector<64x128xf32> -> vector<64x128xf32>
    %43 = arith.addf %35, %42 : vector<64x128xf32>
    %c0_40 = arith.constant 0 : index
    %c1_41 = arith.constant 1 : index
    %c1_42 = arith.constant 1 : index
    %c0_43 = arith.constant 0 : index
    %44 = vector.load %arg1[%c0_40, %c1_41, %c1_42, %c0_43] : memref<1x11x11x12xbf16, #tpu.memory_space<vmem>>, vector<1x8x8x12xbf16>
    %45 = vector.shape_cast %44 : vector<1x8x8x12xbf16> to vector<8x8x12xbf16>
    %46 = arith.extf %45 : vector<8x8x12xbf16> to vector<8x8x12xf32>
    %47 = vector.shape_cast %46 : vector<8x8x12xf32> to vector<64x12xf32>
    %c5 = arith.constant 5 : index
    %c0_44 = arith.constant 0 : index
    %c0_45 = arith.constant 0 : index
    %48 = vector.load %arg2[%c5, %c0_44, %c0_45] : memref<16x12x128xf32, #tpu.memory_space<vmem>>, vector<1x12x128xf32>
    %49 = vector.shape_cast %48 : vector<1x12x128xf32> to vector<12x128xf32>
    %cst_46 = arith.constant dense<0.000000e+00> : vector<64x128xf32>
    %50 = tpu.matmul %47, %49, %cst_46 {dimension_numbers = #tpu.dot_dimension_numbers<[1], [0], [0], [1], [0, 0, 1, 1], [], []>} : vector<64x12xf32>, vector<12x128xf32>, vector<64x128xf32> -> vector<64x128xf32>
    %51 = arith.addf %43, %50 : vector<64x128xf32>
    %c0_47 = arith.constant 0 : index
    %c1_48 = arith.constant 1 : index
    %c2_49 = arith.constant 2 : index
    %c0_50 = arith.constant 0 : index
    %52 = vector.load %arg1[%c0_47, %c1_48, %c2_49, %c0_50] : memref<1x11x11x12xbf16, #tpu.memory_space<vmem>>, vector<1x8x8x12xbf16>
    %53 = vector.shape_cast %52 : vector<1x8x8x12xbf16> to vector<8x8x12xbf16>
    %54 = arith.extf %53 : vector<8x8x12xbf16> to vector<8x8x12xf32>
    %55 = vector.shape_cast %54 : vector<8x8x12xf32> to vector<64x12xf32>
    %c6 = arith.constant 6 : index
    %c0_51 = arith.constant 0 : index
    %c0_52 = arith.constant 0 : index
    %56 = vector.load %arg2[%c6, %c0_51, %c0_52] : memref<16x12x128xf32, #tpu.memory_space<vmem>>, vector<1x12x128xf32>
    %57 = vector.shape_cast %56 : vector<1x12x128xf32> to vector<12x128xf32>
    %cst_53 = arith.constant dense<0.000000e+00> : vector<64x128xf32>
    %58 = tpu.matmul %55, %57, %cst_53 {dimension_numbers = #tpu.dot_dimension_numbers<[1], [0], [0], [1], [0, 0, 1, 1], [], []>} : vector<64x12xf32>, vector<12x128xf32>, vector<64x128xf32> -> vector<64x128xf32>
    %59 = arith.addf %51, %58 : vector<64x128xf32>
    %c0_54 = arith.constant 0 : index
    %c1_55 = arith.constant 1 : index
    %c3_56 = arith.constant 3 : index
    %c0_57 = arith.constant 0 : index
    %60 = vector.load %arg1[%c0_54, %c1_55, %c3_56, %c0_57] : memref<1x11x11x12xbf16, #tpu.memory_space<vmem>>, vector<1x8x8x12xbf16>
    %61 = vector.shape_cast %60 : vector<1x8x8x12xbf16> to vector<8x8x12xbf16>
    %62 = arith.extf %61 : vector<8x8x12xbf16> to vector<8x8x12xf32>
    %63 = vector.shape_cast %62 : vector<8x8x12xf32> to vector<64x12xf32>
    %c7 = arith.constant 7 : index
    %c0_58 = arith.constant 0 : index
    %c0_59 = arith.constant 0 : index
    %64 = vector.load %arg2[%c7, %c0_58, %c0_59] : memref<16x12x128xf32, #tpu.memory_space<vmem>>, vector<1x12x128xf32>
    %65 = vector.shape_cast %64 : vector<1x12x128xf32> to vector<12x128xf32>
    %cst_60 = arith.constant dense<0.000000e+00> : vector<64x128xf32>
    %66 = tpu.matmul %63, %65, %cst_60 {dimension_numbers = #tpu.dot_dimension_numbers<[1], [0], [0], [1], [0, 0, 1, 1], [], []>} : vector<64x12xf32>, vector<12x128xf32>, vector<64x128xf32> -> vector<64x128xf32>
    %67 = arith.addf %59, %66 : vector<64x128xf32>
    %c0_61 = arith.constant 0 : index
    %c2_62 = arith.constant 2 : index
    %c0_63 = arith.constant 0 : index
    %c0_64 = arith.constant 0 : index
    %68 = vector.load %arg1[%c0_61, %c2_62, %c0_63, %c0_64] : memref<1x11x11x12xbf16, #tpu.memory_space<vmem>>, vector<1x8x8x12xbf16>
    %69 = vector.shape_cast %68 : vector<1x8x8x12xbf16> to vector<8x8x12xbf16>
    %70 = arith.extf %69 : vector<8x8x12xbf16> to vector<8x8x12xf32>
    %71 = vector.shape_cast %70 : vector<8x8x12xf32> to vector<64x12xf32>
    %c8 = arith.constant 8 : index
    %c0_65 = arith.constant 0 : index
    %c0_66 = arith.constant 0 : index
    %72 = vector.load %arg2[%c8, %c0_65, %c0_66] : memref<16x12x128xf32, #tpu.memory_space<vmem>>, vector<1x12x128xf32>
    %73 = vector.shape_cast %72 : vector<1x12x128xf32> to vector<12x128xf32>
    %cst_67 = arith.constant dense<0.000000e+00> : vector<64x128xf32>
    %74 = tpu.matmul %71, %73, %cst_67 {dimension_numbers = #tpu.dot_dimension_numbers<[1], [0], [0], [1], [0, 0, 1, 1], [], []>} : vector<64x12xf32>, vector<12x128xf32>, vector<64x128xf32> -> vector<64x128xf32>
    %75 = arith.addf %67, %74 : vector<64x128xf32>
    %c0_68 = arith.constant 0 : index
    %c2_69 = arith.constant 2 : index
    %c1_70 = arith.constant 1 : index
    %c0_71 = arith.constant 0 : index
    %76 = vector.load %arg1[%c0_68, %c2_69, %c1_70, %c0_71] : memref<1x11x11x12xbf16, #tpu.memory_space<vmem>>, vector<1x8x8x12xbf16>
    %77 = vector.shape_cast %76 : vector<1x8x8x12xbf16> to vector<8x8x12xbf16>
    %78 = arith.extf %77 : vector<8x8x12xbf16> to vector<8x8x12xf32>
    %79 = vector.shape_cast %78 : vector<8x8x12xf32> to vector<64x12xf32>
    %c9 = arith.constant 9 : index
    %c0_72 = arith.constant 0 : index
    %c0_73 = arith.constant 0 : index
    %80 = vector.load %arg2[%c9, %c0_72, %c0_73] : memref<16x12x128xf32, #tpu.memory_space<vmem>>, vector<1x12x128xf32>
    %81 = vector.shape_cast %80 : vector<1x12x128xf32> to vector<12x128xf32>
    %cst_74 = arith.constant dense<0.000000e+00> : vector<64x128xf32>
    %82 = tpu.matmul %79, %81, %cst_74 {dimension_numbers = #tpu.dot_dimension_numbers<[1], [0], [0], [1], [0, 0, 1, 1], [], []>} : vector<64x12xf32>, vector<12x128xf32>, vector<64x128xf32> -> vector<64x128xf32>
    %83 = arith.addf %75, %82 : vector<64x128xf32>
    %c0_75 = arith.constant 0 : index
    %c2_76 = arith.constant 2 : index
    %c2_77 = arith.constant 2 : index
    %c0_78 = arith.constant 0 : index
    %84 = vector.load %arg1[%c0_75, %c2_76, %c2_77, %c0_78] : memref<1x11x11x12xbf16, #tpu.memory_space<vmem>>, vector<1x8x8x12xbf16>
    %85 = vector.shape_cast %84 : vector<1x8x8x12xbf16> to vector<8x8x12xbf16>
    %86 = arith.extf %85 : vector<8x8x12xbf16> to vector<8x8x12xf32>
    %87 = vector.shape_cast %86 : vector<8x8x12xf32> to vector<64x12xf32>
    %c10 = arith.constant 10 : index
    %c0_79 = arith.constant 0 : index
    %c0_80 = arith.constant 0 : index
    %88 = vector.load %arg2[%c10, %c0_79, %c0_80] : memref<16x12x128xf32, #tpu.memory_space<vmem>>, vector<1x12x128xf32>
    %89 = vector.shape_cast %88 : vector<1x12x128xf32> to vector<12x128xf32>
    %cst_81 = arith.constant dense<0.000000e+00> : vector<64x128xf32>
    %90 = tpu.matmul %87, %89, %cst_81 {dimension_numbers = #tpu.dot_dimension_numbers<[1], [0], [0], [1], [0, 0, 1, 1], [], []>} : vector<64x12xf32>, vector<12x128xf32>, vector<64x128xf32> -> vector<64x128xf32>
    %91 = arith.addf %83, %90 : vector<64x128xf32>
    %c0_82 = arith.constant 0 : index
    %c2_83 = arith.constant 2 : index
    %c3_84 = arith.constant 3 : index
    %c0_85 = arith.constant 0 : index
    %92 = vector.load %arg1[%c0_82, %c2_83, %c3_84, %c0_85] : memref<1x11x11x12xbf16, #tpu.memory_space<vmem>>, vector<1x8x8x12xbf16>
    %93 = vector.shape_cast %92 : vector<1x8x8x12xbf16> to vector<8x8x12xbf16>
    %94 = arith.extf %93 : vector<8x8x12xbf16> to vector<8x8x12xf32>
    %95 = vector.shape_cast %94 : vector<8x8x12xf32> to vector<64x12xf32>
    %c11 = arith.constant 11 : index
    %c0_86 = arith.constant 0 : index
    %c0_87 = arith.constant 0 : index
    %96 = vector.load %arg2[%c11, %c0_86, %c0_87] : memref<16x12x128xf32, #tpu.memory_space<vmem>>, vector<1x12x128xf32>
    %97 = vector.shape_cast %96 : vector<1x12x128xf32> to vector<12x128xf32>
    %cst_88 = arith.constant dense<0.000000e+00> : vector<64x128xf32>
    %98 = tpu.matmul %95, %97, %cst_88 {dimension_numbers = #tpu.dot_dimension_numbers<[1], [0], [0], [1], [0, 0, 1, 1], [], []>} : vector<64x12xf32>, vector<12x128xf32>, vector<64x128xf32> -> vector<64x128xf32>
    %99 = arith.addf %91, %98 : vector<64x128xf32>
    %c0_89 = arith.constant 0 : index
    %c3_90 = arith.constant 3 : index
    %c0_91 = arith.constant 0 : index
    %c0_92 = arith.constant 0 : index
    %100 = vector.load %arg1[%c0_89, %c3_90, %c0_91, %c0_92] : memref<1x11x11x12xbf16, #tpu.memory_space<vmem>>, vector<1x8x8x12xbf16>
    %101 = vector.shape_cast %100 : vector<1x8x8x12xbf16> to vector<8x8x12xbf16>
    %102 = arith.extf %101 : vector<8x8x12xbf16> to vector<8x8x12xf32>
    %103 = vector.shape_cast %102 : vector<8x8x12xf32> to vector<64x12xf32>
    %c12 = arith.constant 12 : index
    %c0_93 = arith.constant 0 : index
    %c0_94 = arith.constant 0 : index
    %104 = vector.load %arg2[%c12, %c0_93, %c0_94] : memref<16x12x128xf32, #tpu.memory_space<vmem>>, vector<1x12x128xf32>
    %105 = vector.shape_cast %104 : vector<1x12x128xf32> to vector<12x128xf32>
    %cst_95 = arith.constant dense<0.000000e+00> : vector<64x128xf32>
    %106 = tpu.matmul %103, %105, %cst_95 {dimension_numbers = #tpu.dot_dimension_numbers<[1], [0], [0], [1], [0, 0, 1, 1], [], []>} : vector<64x12xf32>, vector<12x128xf32>, vector<64x128xf32> -> vector<64x128xf32>
    %107 = arith.addf %99, %106 : vector<64x128xf32>
    %c0_96 = arith.constant 0 : index
    %c3_97 = arith.constant 3 : index
    %c1_98 = arith.constant 1 : index
    %c0_99 = arith.constant 0 : index
    %108 = vector.load %arg1[%c0_96, %c3_97, %c1_98, %c0_99] : memref<1x11x11x12xbf16, #tpu.memory_space<vmem>>, vector<1x8x8x12xbf16>
    %109 = vector.shape_cast %108 : vector<1x8x8x12xbf16> to vector<8x8x12xbf16>
    %110 = arith.extf %109 : vector<8x8x12xbf16> to vector<8x8x12xf32>
    %111 = vector.shape_cast %110 : vector<8x8x12xf32> to vector<64x12xf32>
    %c13 = arith.constant 13 : index
    %c0_100 = arith.constant 0 : index
    %c0_101 = arith.constant 0 : index
    %112 = vector.load %arg2[%c13, %c0_100, %c0_101] : memref<16x12x128xf32, #tpu.memory_space<vmem>>, vector<1x12x128xf32>
    %113 = vector.shape_cast %112 : vector<1x12x128xf32> to vector<12x128xf32>
    %cst_102 = arith.constant dense<0.000000e+00> : vector<64x128xf32>
    %114 = tpu.matmul %111, %113, %cst_102 {dimension_numbers = #tpu.dot_dimension_numbers<[1], [0], [0], [1], [0, 0, 1, 1], [], []>} : vector<64x12xf32>, vector<12x128xf32>, vector<64x128xf32> -> vector<64x128xf32>
    %115 = arith.addf %107, %114 : vector<64x128xf32>
    %c0_103 = arith.constant 0 : index
    %c3_104 = arith.constant 3 : index
    %c2_105 = arith.constant 2 : index
    %c0_106 = arith.constant 0 : index
    %116 = vector.load %arg1[%c0_103, %c3_104, %c2_105, %c0_106] : memref<1x11x11x12xbf16, #tpu.memory_space<vmem>>, vector<1x8x8x12xbf16>
    %117 = vector.shape_cast %116 : vector<1x8x8x12xbf16> to vector<8x8x12xbf16>
    %118 = arith.extf %117 : vector<8x8x12xbf16> to vector<8x8x12xf32>
    %119 = vector.shape_cast %118 : vector<8x8x12xf32> to vector<64x12xf32>
    %c14 = arith.constant 14 : index
    %c0_107 = arith.constant 0 : index
    %c0_108 = arith.constant 0 : index
    %120 = vector.load %arg2[%c14, %c0_107, %c0_108] : memref<16x12x128xf32, #tpu.memory_space<vmem>>, vector<1x12x128xf32>
    %121 = vector.shape_cast %120 : vector<1x12x128xf32> to vector<12x128xf32>
    %cst_109 = arith.constant dense<0.000000e+00> : vector<64x128xf32>
    %122 = tpu.matmul %119, %121, %cst_109 {dimension_numbers = #tpu.dot_dimension_numbers<[1], [0], [0], [1], [0, 0, 1, 1], [], []>} : vector<64x12xf32>, vector<12x128xf32>, vector<64x128xf32> -> vector<64x128xf32>
    %123 = arith.addf %115, %122 : vector<64x128xf32>
    %c0_110 = arith.constant 0 : index
    %c3_111 = arith.constant 3 : index
    %c3_112 = arith.constant 3 : index
    %c0_113 = arith.constant 0 : index
    %124 = vector.load %arg1[%c0_110, %c3_111, %c3_112, %c0_113] : memref<1x11x11x12xbf16, #tpu.memory_space<vmem>>, vector<1x8x8x12xbf16>
    %125 = vector.shape_cast %124 : vector<1x8x8x12xbf16> to vector<8x8x12xbf16>
    %126 = arith.extf %125 : vector<8x8x12xbf16> to vector<8x8x12xf32>
    %127 = vector.shape_cast %126 : vector<8x8x12xf32> to vector<64x12xf32>
    %c15 = arith.constant 15 : index
    %c0_114 = arith.constant 0 : index
    %c0_115 = arith.constant 0 : index
    %128 = vector.load %arg2[%c15, %c0_114, %c0_115] : memref<16x12x128xf32, #tpu.memory_space<vmem>>, vector<1x12x128xf32>
    %129 = vector.shape_cast %128 : vector<1x12x128xf32> to vector<12x128xf32>
    %cst_116 = arith.constant dense<0.000000e+00> : vector<64x128xf32>
    %130 = tpu.matmul %127, %129, %cst_116 {dimension_numbers = #tpu.dot_dimension_numbers<[1], [0], [0], [1], [0, 0, 1, 1], [], []>} : vector<64x12xf32>, vector<12x128xf32>, vector<64x128xf32> -> vector<64x128xf32>
    %131 = arith.addf %123, %130 : vector<64x128xf32>
    %132 = vector.broadcast %0 : vector<1x128xf32> to vector<64x128xf32>
    %133 = arith.mulf %131, %132 : vector<64x128xf32>
    %134 = vector.broadcast %1 : vector<1x128xf32> to vector<64x128xf32>
    %135 = arith.addf %133, %134 : vector<64x128xf32>
    %cst_117 = arith.constant 0.000000e+00 : f32
    %136 = vector.broadcast %cst_117 : f32 to vector<64x128xf32>
    %137 = arith.maximumf %135, %136 : vector<64x128xf32>
    %cst_118 = arith.constant dense<0.000000e+00> : vector<128xf32>
    %138 = vector.multi_reduction <add>, %137, %cst_118 [0] : vector<64x128xf32> to vector<128xf32>
    %139 = vector.shape_cast %138 : vector<128xf32> to vector<1x128xf32>
    %140 = arith.addf %2, %139 : vector<1x128xf32>
    %cst_119 = arith.constant 1.562500e-02 : f32
    %141 = vector.broadcast %cst_119 : f32 to vector<1x128xf32>
    %142 = arith.mulf %140, %141 : vector<1x128xf32>
    %c0_120 = arith.constant 0 : index
    %c0_121 = arith.constant 0 : index
    %143 = vector.load %arg5[%c0_120, %c0_121] : memref<128x128xf32, #tpu.memory_space<vmem>>, vector<128x128xf32>
    %cst_122 = arith.constant dense<0.000000e+00> : vector<1x128xf32>
    %144 = tpu.matmul %142, %143, %cst_122 {dimension_numbers = #tpu.dot_dimension_numbers<[1], [0], [0], [1], [0, 0, 1, 1], [], []>} : vector<1x128xf32>, vector<128x128xf32>, vector<1x128xf32> -> vector<1x128xf32>
    %c0_123 = arith.constant 0 : index
    %c0_124 = arith.constant 0 : index
    %145 = vector.load %arg6[%c0_123, %c0_124] : memref<1x128xf32, #tpu.memory_space<vmem>>, vector<1x128xf32>
    %146 = arith.addf %144, %145 : vector<1x128xf32>
    %c0_125 = arith.constant 0 : index
    %c0_126 = arith.constant 0 : index
    %c0_127 = arith.constant 0 : index
    %147 = vector.load %arg7[%c0_125, %c0_126, %c0_127] : memref<1x1x128xf32, #tpu.memory_space<vmem>>, vector<1x1x128xf32>
    %148 = vector.shape_cast %147 : vector<1x1x128xf32> to vector<1x128xf32>
    %149 = vector.shape_cast %146 : vector<1x128xf32> to vector<1x1x128xf32>
    tpu.vector_store %arg7[%c0_125, %c0_126, %c0_127], %149 {strides = array<i32>} : memref<1x1x128xf32, #tpu.memory_space<vmem>>, vector<1x1x128xf32>,
    return
  }
  func.func @transform_0(%arg0: i32) -> (i32, i32, i32, i32) {
    %c0_i32 = arith.constant 0 : i32
    %c0_i32_0 = arith.constant 0 : i32
    %c0_i32_1 = arith.constant 0 : i32
    %c0_i32_2 = arith.constant 0 : i32
    return %arg0, %c0_i32, %c0_i32_0, %c0_i32_1 : i32, i32, i32, i32
  }
  func.func @transform_1(%arg0: i32) -> (i32, i32, i32) {
    %c0_i32 = arith.constant 0 : i32
    %c0_i32_0 = arith.constant 0 : i32
    %c0_i32_1 = arith.constant 0 : i32
    %c0_i32_2 = arith.constant 0 : i32
    return %c0_i32, %c0_i32_0, %c0_i32_1 : i32, i32, i32
  }
  func.func @transform_2(%arg0: i32) -> (i32, i32) {
    %c0_i32 = arith.constant 0 : i32
    %c0_i32_0 = arith.constant 0 : i32
    %c0_i32_1 = arith.constant 0 : i32
    return %c0_i32, %c0_i32_0 : i32, i32
  }
  func.func @transform_3(%arg0: i32) -> (i32, i32) {
    %c0_i32 = arith.constant 0 : i32
    %c0_i32_0 = arith.constant 0 : i32
    %c0_i32_1 = arith.constant 0 : i32
    return %c0_i32, %c0_i32_0 : i32, i32
  }
  func.func @transform_4(%arg0: i32) -> (i32, i32) {
    %c0_i32 = arith.constant 0 : i32
    %c0_i32_0 = arith.constant 0 : i32
    %c0_i32_1 = arith.constant 0 : i32
    return %c0_i32, %c0_i32_0 : i32, i32
  }
  func.func @transform_5(%arg0: i32) -> (i32, i32) {
    %c0_i32 = arith.constant 0 : i32
    %c0_i32_0 = arith.constant 0 : i32
    %c0_i32_1 = arith.constant 0 : i32
    return %c0_i32, %c0_i32_0 : i32, i32
  }
  func.func @transform_6(%arg0: i32) -> (i32, i32, i32) {
    %c0_i32 = arith.constant 0 : i32
    %c0_i32_0 = arith.constant 0 : i32
    %c0_i32_1 = arith.constant 0 : i32
    return %arg0, %c0_i32, %c0_i32_0 : i32, i32, i32
  }
}

</mosaic_0001>

<llo_original>
// kernel: tsn_forward.1
$region0: #{tsn_forward.1}
  #allocation0 [shape = 'u32[]', space=smem, size = 0x4, offset = 0x4, fixed_abs, tag = 'smem constant byte address 0x4 - core index']
  #allocation1 [shape = 'u32[144,128]{1,0:T(1,128)}', space=vmem, size = 0x12000, scoped, tag = 'internal scratch']
  %s0 = inlined_call_operand.vmem [shape: bf16[8,11,11,12], index: 0, kind: input, shape index: {}]
  %s1 = inlined_call_operand.vmem [shape: f32[16,12,128], index: 1, kind: input, shape index: {}]
  %s2 = inlined_call_operand.vmem [shape: f32[1,128], index: 2, kind: input, shape index: {}]
  %s3 = inlined_call_operand.vmem [shape: f32[1,128], index: 3, kind: input, shape index: {}]
  %s4 = inlined_call_operand.vmem [shape: f32[128,128], index: 4, kind: input, shape index: {}]
  %s5 = inlined_call_operand.vmem [shape: f32[1,128], index: 5, kind: input, shape index: {}]
  %s6 = inlined_call_operand.vmem [shape: f32[8,1,128], index: 6, kind: output, shape index: {}]
  %s7 = sld [smem:[#allocation0]]
  $region57: #{tsn_forward.1} parent=0
    _
  %s9 = ssub.s32 1, %s7
  %s10 = scalar_select 0, %s9, %s7
  loop: start=0, step=1, limit=10
  $region2: #{tsn_forward.1} parent=0 // loop_pre_header
    _
  $region3: #{tsn_forward.1} parent=0 // loop_header
    %s12 = sphi 0, %s16
    %p13 = scmp.ge.s32.totalorder %s12, 10
    %s22 = sphi 0, %s24
    %s25 = sphi 0, %s22
    %s26 = sphi 0, %s25
    %s42 = sphi 0, %s26
    %s46 = sphi 0, %s46
    %s48 = sphi 0, %s46
    %s49 = sphi 0, %s48
    %s63 = sphi 0, %s49
    %s67 = sphi 0, %s67
    %s69 = sphi 0, %s67
    %s70 = sphi 0, %s69
    %s84 = sphi 0, %s70
    %s88 = sphi 0, %s88
    %s90 = sphi 0, %s88
    %s91 = sphi 0, %s90
    %s105 = sphi 0, %s91
    %s109 = sphi 0, %s109
    %s111 = sphi 0, %s109
    %s112 = sphi 0, %s111
    %s126 = sphi 0, %s112
    %s130 = sphi 0, %s130
    %s132 = sphi 0, %s130
    %s133 = sphi 0, %s132
    %s147 = sphi 0, %s133
    %s153 = sphi 0, %s155
    %s156 = sphi 0, %s153
    %s157 = sphi 0, %s156
    %s173 = sphi 0, %s157
  $region4: #{tsn_forward.1} parent=0 // loop_header_branch
    %15 = sbr.rel (%p13) target = $region8
  $region5: #{tsn_forward.1} parent=0 // loop_body
    %s17 = ssub.s32 %s12, 1
    %s18 = ssub.s32 %s12, 2
    %s19 = sadd.s32 %s12, 1
    %s20 = ssub.s32 %s12, %s19
    %p21 = scmp.eq.s32.totalorder %s20, 0
    %s23 = sadd.s32 %s22, 1
    %s24 = scalar_select %p21, %s22, %s23
    %p27 = pneg %p21
    %p28 = scmp.eq.s32.totalorder %s12, 7
    %p29 = por %p27, %p28
    %p30 = scmp.ne.s32.totalorder %s22, %s25
    %p31 = scmp.eq.s32.totalorder %s12, 0
    %p32 = por %p30, %p31
    %p33 = scmp.ne.s32.totalorder %s22, %s25
    %p34 = scmp.eq.s32.totalorder %s17, 7
    %p35 = por %p33, %p34
    %p36 = scmp.ne.s32.totalorder %s25, %s26
    %p37 = scmp.eq.s32.totalorder %s17, 0
    %p38 = por %p36, %p37
    %p39 = scmp.ne.s32.totalorder %s25, %s26
    %p40 = scmp.eq.s32.totalorder %s18, 7
    %p41 = por %p39, %p40
    %p43 = scmp.ne.s32.totalorder %s26, %s42
    %p44 = scmp.eq.s32.totalorder %s18, 0
    %p45 = por %p43, %p44
    %s47 = sadd.s32 %s46, 1
    %p50 = scmp.eq.s32.totalorder %s12, 7
    %p51 = scmp.ne.s32.totalorder %s46, %s48
    %p52 = scmp.eq.s32.totalorder %s12, 0
    %p53 = por %p51, %p52
    %p54 = scmp.ne.s32.totalorder %s46, %s48
    %p55 = scmp.eq.s32.totalorder %s17, 7
    %p56 = por %p54, %p55
    %p57 = scmp.ne.s32.totalorder %s48, %s49
    %p58 = scmp.eq.s32.totalorder %s17, 0
    %p59 = por %p57, %p58
    %p60 = scmp.ne.s32.totalorder %s48, %s49
    %p61 = scmp.eq.s32.totalorder %s18, 7
    %p62 = por %p60, %p61
    %p64 = scmp.ne.s32.totalorder %s49, %s63
    %p65 = scmp.eq.s32.totalorder %s18, 0
    %p66 = por %p64, %p65
    %s68 = sadd.s32 %s67, 1
    %p71 = scmp.eq.s32.totalorder %s12, 7
    %p72 = scmp.ne.s32.totalorder %s67, %s69
    %p73 = scmp.eq.s32.totalorder %s12, 0
    %p74 = por %p72, %p73
    %p75 = scmp.ne.s32.totalorder %s67, %s69
    %p76 = scmp.eq.s32.totalorder %s17, 7
    %p77 = por %p75, %p76
    %p78 = scmp.ne.s32.totalorder %s69, %s70
    %p79 = scmp.eq.s32.totalorder %s17, 0
    %p80 = por %p78, %p79
    %p81 = scmp.ne.s32.totalorder %s69, %s70
    %p82 = scmp.eq.s32.totalorder %s18, 7
    %p83 = por %p81, %p82
    %p85 = scmp.ne.s32.totalorder %s70, %s84
    %p86 = scmp.eq.s32.totalorder %s18, 0
    %p87 = por %p85, %p86
    %s89 = sadd.s32 %s88, 1
    %p92 = scmp.eq.s32.totalorder %s12, 7
    %p93 = scmp.ne.s32.totalorder %s88, %s90
    %p94 = scmp.eq.s32.totalorder %s12, 0
    %p95 = por %p93, %p94
    %p96 = scmp.ne.s32.totalorder %s88, %s90
    %p97 = scmp.eq.s32.totalorder %s17, 7
    %p98 = por %p96, %p97
    %p99 = scmp.ne.s32.totalorder %s90, %s91
    %p100 = scmp.eq.s32.totalorder %s17, 0
    %p101 = por %p99, %p100
    %p102 = scmp.ne.s32.totalorder %s90, %s91
    %p103 = scmp.eq.s32.totalorder %s18, 7
    %p104 = por %p102, %p103
    %p106 = scmp.ne.s32.totalorder %s91, %s105
    %p107 = scmp.eq.s32.totalorder %s18, 0
    %p108 = por %p106, %p107
    %s110 = sadd.s32 %s109, 1
    %p113 = scmp.eq.s32.totalorder %s12, 7
    %p114 = scmp.ne.s32.totalorder %s109, %s111
    %p115 = scmp.eq.s32.totalorder %s12, 0
    %p116 = por %p114, %p115
    %p117 = scmp.ne.s32.totalorder %s109, %s111
    %p118 = scmp.eq.s32.totalorder %s17, 7
    %p119 = por %p117, %p118
    %p120 = scmp.ne.s32.totalorder %s111, %s112
    %p121 = scmp.eq.s32.totalorder %s17, 0
    %p122 = por %p120, %p121
    %p123 = scmp.ne.s32.totalorder %s111, %s112
    %p124 = scmp.eq.s32.totalorder %s18, 7
    %p125 = por %p123, %p124
    %p127 = scmp.ne.s32.totalorder %s112, %s126
    %p128 = scmp.eq.s32.totalorder %s18, 0
    %p129 = por %p127, %p128
    %s131 = sadd.s32 %s130, 1
    %p134 = scmp.eq.s32.totalorder %s12, 7
    %p135 = scmp.ne.s32.totalorder %s130, %s132
    %p136 = scmp.eq.s32.totalorder %s12, 0
    %p137 = por %p135, %p136
    %p138 = scmp.ne.s32.totalorder %s130, %s132
    %p139 = scmp.eq.s32.totalorder %s17, 7
    %p140 = por %p138, %p139
    %p141 = scmp.ne.s32.totalorder %s132, %s133
    %p142 = scmp.eq.s32.totalorder %s17, 0
    %p143 = por %p141, %p142
    %p144 = scmp.ne.s32.totalorder %s132, %s133
    %p145 = scmp.eq.s32.totalorder %s18, 7
    %p146 = por %p144, %p145
    %p148 = scmp.ne.s32.totalorder %s133, %s147
    %p149 = scmp.eq.s32.totalorder %s18, 0
    %p150 = por %p148, %p149
    %s151 = ssub.s32 %s12, %s19
    %p152 = scmp.eq.s32.totalorder %s151, 0
    %s154 = sadd.s32 %s153, 1
    %s155 = scalar_select %p152, %s153, %s154
    %p158 = pneg %p152
    %p159 = scmp.eq.s32.totalorder %s12, 7
    %p160 = por %p158, %p159
    %p161 = scmp.ne.s32.totalorder %s153, %s156
    %p162 = scmp.eq.s32.totalorder %s12, 0
    %p163 = por %p161, %p162
    %p164 = scmp.ne.s32.totalorder %s153, %s156
    %p165 = scmp.eq.s32.totalorder %s17, 7
    %p166 = por %p164, %p165
    %p167 = scmp.ne.s32.totalorder %s156, %s157
    %p168 = scmp.eq.s32.totalorder %s17, 0
    %p169 = por %p167, %p168
    %p170 = scmp.ne.s32.totalorder %s156, %s157
    %p171 = scmp.eq.s32.totalorder %s18, 7
    %p172 = por %p170, %p171
    %p174 = scmp.ne.s32.totalorder %s157, %s173
    %p175 = scmp.eq.s32.totalorder %s18, 0
    %p176 = por %p174, %p175
    %p177 = scmp.le.s32.totalorder 1, %s12
    %p178 = scmp.lt.s32.totalorder %s12, 9
    %p179 = pnand %p177, %p178
    %p180 = pneg %p179
    // Predicated region
    $region9: #{tsn_forward.1} parent=5 // pred_check
      _
    $region10: #{tsn_forward.1} parent=5 // pred_check_branch
      %182 = sbr.rel (%p179) target = $region12
    $region11: #{tsn_forward.1} parent=5 // pred_region
      %s183 = ssub.s32 %s12, 1
      // Predicated region
      $region13: #{tsn_forward.1} parent=11 // pred_check
        %p184 = pneg %p59
      $region14: #{tsn_forward.1} parent=11 // pred_check_branch
        %186 = sbr.rel (%p184) target = $region16
      $region15: #{tsn_forward.1} parent=11 // pred_region
        _
      $region16: #{tsn_forward.1} parent=11 // pred_fallthru
        _
      // Predicated region
      $region17: #{tsn_forward.1} parent=11 // pred_check
        %p187 = pneg %p80
      $region18: #{tsn_forward.1} parent=11 // pred_check_branch
        %189 = sbr.rel (%p187) target = $region20
      $region19: #{tsn_forward.1} parent=11 // pred_region
        _
      $region20: #{tsn_forward.1} parent=11 // pred_fallthru
        _
      // Predicated region
      $region21: #{tsn_forward.1} parent=11 // pred_check
        %p190 = pneg %p101
      $region22: #{tsn_forward.1} parent=11 // pred_check_branch
        %192 = sbr.rel (%p190) target = $region24
      $region23: #{tsn_forward.1} parent=11 // pred_region
        _
      $region24: #{tsn_forward.1} parent=11 // pred_fallthru
        _
      // Predicated region
      $region25: #{tsn_forward.1} parent=11 // pred_check
        %p193 = pneg %p122
      $region26: #{tsn_forward.1} parent=11 // pred_check_branch
        %195 = sbr.rel (%p193) target = $region28
      $region27: #{tsn_forward.1} parent=11 // pred_region
        _
      $region28: #{tsn_forward.1} parent=11 // pred_fallthru
        _
      // Predicated region
      $region29: #{tsn_forward.1} parent=11 // pred_check
        %p196 = pneg %p143
      $region30: #{tsn_forward.1} parent=11 // pred_check_branch
        %198 = sbr.rel (%p196) target = $region32
      $region31: #{tsn_forward.1} parent=11 // pred_region
        _
      $region32: #{tsn_forward.1} parent=11 // pred_fallthru
        _
    $region12: #{tsn_forward.1} parent=5 // pred_fallthru
      _
    %p199 = scmp.lt.s32.totalorder %s12, 8
    // Predicated region
    $region33: #{tsn_forward.1} parent=5 // pred_check
      %p200 = pneg %p199
    $region34: #{tsn_forward.1} parent=5 // pred_check_branch
      %202 = sbr.rel (%p200) target = $region36
    $region35: #{tsn_forward.1} parent=5 // pred_region
      // Predicated region
      $region37: #{tsn_forward.1} parent=35 // pred_check
        %p203 = pneg %p32
      $region38: #{tsn_forward.1} parent=35 // pred_check_branch
        %205 = sbr.rel (%p203) target = $region40
      $region39: #{tsn_forward.1} parent=35 // pred_region
        %p206 = scmp.lt.s32.totalorder %s12, 7
        %s207 = scalar_select %p206, %s12, 7
        %s208 = smul.addr %s207, 22
        %s209 = smul.addr %s208, 4
        %s210 = scalar_lea.vmem %s0, %s209
      $region40: #{tsn_forward.1} parent=35 // pred_fallthru
        _
    $region36: #{tsn_forward.1} parent=5 // pred_fallthru
      _
    %p211 = scmp.le.s32.totalorder 1, %s12
    %p212 = scmp.lt.s32.totalorder %s12, 9
    %p213 = pnand %p211, %p212
    %p214 = pneg %p213
    // Predicated region
    $region41: #{tsn_forward.1} parent=5 // pred_check
      _
    $region42: #{tsn_forward.1} parent=5 // pred_check_branch
      %216 = sbr.rel (%p213) target = $region44
    $region43: #{tsn_forward.1} parent=5 // pred_region
      %s217 = ssub.s32 %s12, 1
      %p218 = scmp.lt.s32.totalorder %s17, 7
      %s219 = scalar_select %p218, %s17, 7
      %s220 = smul.addr %s219, 22
      %s221 = smul.addr %s220, 4
      %s222 = scalar_lea.vmem %s0, %s221
      %p223 = pneg %p38
      %p224 = pneg %p35
      %p225 = pneg %p59
      %p226 = pneg %p56
      %p227 = pneg %p80
      %p228 = pneg %p77
      %p229 = pneg %p101
      %p230 = pneg %p98
      %p231 = pneg %p122
      %p232 = pneg %p119
      %p233 = pneg %p143
      %p234 = pneg %p140
      %p235 = pneg %p169
      %p236 = pneg %p166
      %p237 = scmp.lt.s32.totalorder %s17, 7
      %s238 = scalar_select %p237, %s17, 7
      %s239 = scalar_lea.vmem %s6, %s238
      %p240 = scmp.lt.s32.totalorder %s17, 7
      %s241 = scalar_select %p240, %s17, 7
      %s242 = smul.addr %s241, 22
      %s243 = smul.addr %s242, 4
      %s244 = scalar_lea.vmem %s0, %s243
      %p245 = scmp.lt.s32.totalorder %s17, 7
      %s246 = scalar_select %p245, %s17, 7
      %s247 = scalar_lea.vmem %s6, %s246
      %v248 = vld [vmem:[%s2] sm:$0x1]
      %v249 = vld [vmem:[%s3] sm:$0x1]
      %v250 = vld [vmem:[%s244] sm:$0xf]
      %v251 = vld [vmem:[%s244 + $0x8] sm:$0xf]
      %v252 = vld [vmem:[%s244 + $0x10] sm:$0xf]
      %v253 = vld [vmem:[%s244 + $0x18] sm:$0xf]
      %v254 = vld [vmem:[%s244 + $0x20] sm:$0xf]
      %v255 = vld [vmem:[%s244 + $0x28] sm:$0xf]
      %v256 = vld [vmem:[%s244 + $0x30] sm:$0xf]
      %v257 = vld [vmem:[%s244 + $0x38] sm:$0xf]
      %v258 = vunpack.c.l.bf16 %v250
      %v259 = vunpack.c.l.bf16 %v251
      %v260 = vunpack.c.l.bf16 %v252
      %v261 = vunpack.c.l.bf16 %v253
      %v262 = vunpack.c.l.bf16 %v254
      %v263 = vunpack.c.l.bf16 %v255
      %v264 = vunpack.c.l.bf16 %v256
      %v265 = vunpack.c.l.bf16 %v257
      %v266 = vld [vmem:[%s1] sm:$0xff]
      %v267 = vld [vmem:[%s1 + $0x8] sm:$0xf]
      %v268 = vld [vmem:[%s244 + $0x4] sm:$0x1]
      %v269 = vld [vmem:[%s244 + $0xc] sm:$0x1]
      %v270 = vld [vmem:[%s244 + $0x14] sm:$0x1]
      %v271 = vld [vmem:[%s244 + $0x1c] sm:$0x1]
      %v272 = vld [vmem:[%s244 + $0x24] sm:$0x1]
      %v273 = vld [vmem:[%s244 + $0x2c] sm:$0x1]
      %v274 = vld [vmem:[%s244 + $0x34] sm:$0x1]
      %v275 = vld [vmem:[%s244 + $0x3c] sm:$0x1]
      %v276 = vunpack.c.l.bf16 %v268
      %v277 = vunpack.c.l.bf16 %v269
      %v278 = vunpack.c.l.bf16 %v270
      %v279 = vunpack.c.l.bf16 %v271
      %v280 = vunpack.c.l.bf16 %v272
      %v281 = vunpack.c.l.bf16 %v273
      %v282 = vunpack.c.l.bf16 %v274
      %v283 = vunpack.c.l.bf16 %v275
      %vm300 = vcmask 1046528
      %v301 = vrot.slane %v258, 1
      %v302 = vrot.slane %v276, 1
      %v303 = vsel %vm300, %v301, %v302
      %v304 = vrot.slane %v259, 1
      %v305 = vrot.slane %v277, 1
      %v306 = vsel %vm300, %v304, %v305
      %v307 = vrot.slane %v260, 1
      %v308 = vrot.slane %v278, 1
      %v309 = vsel %vm300, %v307, %v308
      %v310 = vrot.slane %v261, 1
      %v311 = vrot.slane %v279, 1
      %v312 = vsel %vm300, %v310, %v311
      %v313 = vrot.slane %v262, 1
      %v314 = vrot.slane %v280, 1
      %v315 = vsel %vm300, %v313, %v314
      %v316 = vrot.slane %v263, 1
      %v317 = vrot.slane %v281, 1
      %v318 = vsel %vm300, %v316, %v317
      %v319 = vrot.slane %v264, 1
      %v320 = vrot.slane %v282, 1
      %v321 = vsel %vm300, %v319, %v320
      %v322 = vrot.slane %v265, 1
      %v323 = vrot.slane %v283, 1
      %v324 = vsel %vm300, %v322, %v323
      %s325 = scalar_lea.vmem %s1, 16
      %v326 = vld [vmem:[%s325] sm:$0xff]
      %v327 = vld [vmem:[%s325 + $0x8] sm:$0xf]
      %vm328 = vcmask 97280
      %v329 = vsel %vm328, %v303, 0
      %v331 = vsel %vm328, %v306, 0
      %v333 = vsel %vm328, %v309, 0
      %v335 = vsel %vm328, %v312, 0
      %v337 = vsel %vm328, %v315, 0
      %v339 = vsel %vm328, %v318, 0
      %v341 = vsel %vm328, %v321, 0
      %v343 = vsel %vm328, %v324, 0
      %vm345 = vcmask 1043456
      %v347 = vsel %vm345, %v327, 0
      %349 = vmatprep.subr.mxu0 0.0
      %350 = vmatpush1.msra.mxu0 %v326
      %351 = vmatprep.subr.mxu0 0.0
      %352 = vmatpush1.msra.mxu0 %v347
      %353 = vmatprep.subr.mxu0 0.0
      %354 = vmatpush1.msra.mxu0 0.0
      %355 = vmatprep.subr.mxu0 0.0
      %356 = vmatpush1.msra.mxu0 0.0
      %357 = vmatprep.subr.mxu0 0.0
      %358 = vmatpush1.msra.mxu0 0.0
      %359 = vmatprep.subr.mxu0 0.0
      %360 = vmatpush1.msra.mxu0 0.0
      %361 = vmatprep.subr.mxu0 0.0
      %362 = vmatpush1.msra.mxu0 0.0
      %363 = vmatprep.subr.mxu0 0.0
      %364 = vmatpush1.msra.mxu0 0.0
      %365 = vmatprep.subr.mxu0 0.0
      %366 = vmatpush1.msra.mxu0 0.0
      %367 = vmatprep.subr.mxu0 0.0
      %368 = vmatpush1.msra.mxu0 0.0
      %369 = vmatprep.subr.mxu0 0.0
      %370 = vmatpush1.msra.mxu0 0.0
      %371 = vmatprep.subr.mxu0 0.0
      %372 = vmatpush1.msra.mxu0 0.0
      %373 = vmatprep.subr.mxu0 0.0
      %374 = vmatpush1.msra.mxu0 0.0
      %375 = vmatprep.subr.mxu0 0.0
      %376 = vmatpush1.msra.mxu0 0.0
      %377 = vmatprep.subr.mxu0 0.0
      %378 = vmatpush1.msra.mxu0 0.0
      %379 = vmatprep.subr.mxu0 0.0
      %380 = vmatpush1.msra.mxu0 0.0
      %381 = vmatprep.subr.mxu0 0.0
      %382 = vmatpush1.msra.mxu0 0.0
      %383 = vmatprep.subr.mxu0 0.0
      %384 = vmatpush1.msra.mxu0 0.0
      %385 = vmatprep.subr.mxu0 0.0
      %386 = vmatpush1.msra.mxu0 0.0
      %387 = vmatprep.subr.mxu0 0.0
      %388 = vmatpush1.msra.mxu0 0.0
      %389 = vmatprep.subr.mxu0 0.0
      %390 = vmatpush1.msra.mxu0 0.0
      %391 = vmatprep.subr.mxu0 0.0
      %392 = vmatpush1.msra.mxu0 0.0
      %393 = vmatprep.subr.mxu0 0.0
      %394 = vmatpush1.msra.mxu0 0.0
      %395 = vmatprep.subr.mxu0 0.0
      %396 = vmatpush1.msra.mxu0 0.0
      %397 = vmatprep.subr.mxu0 0.0
      %398 = vmatpush1.msra.mxu0 0.0
      %399 = vmatprep.subr.mxu0 0.0
      %400 = vmatpush1.msra.mxu0 0.0
      %401 = vmatprep.subr.mxu0 0.0
      %402 = vmatpush1.msra.mxu0 0.0
      %403 = vmatprep.subr.mxu0 0.0
      %404 = vmatpush1.msra.mxu0 0.0
      %405 = vmatprep.subr.mxu0 0.0
      %406 = vmatpush1.msra.mxu0 0.0
      %407 = vmatprep.subr.mxu0 0.0
      %408 = vmatpush1.msra.mxu0 0.0
      %409 = vmatprep.subr.mxu0 0.0
      %410 = vmatpush1.msra.mxu0 0.0
      %411 = vmatprep.subr.mxu0 0.0
      %412 = vmatpush1.msra.mxu0 0.0
      %413 = vmatprep.mubr.f32.mxu0 0.0
      %414 = vmatmul.mubr.f32.gmra.mrb[0].mxu0 %v329
      %v415 = vpop.f32.mrb[0].mxu0
      %v416 = vadd.f32 0.0, %v415
      %v417 = vpop.f32.mrb[0].mxu0
      %418 = vmatprep.mubr.f32.mxu0 0.0
      %419 = vmatmul.mubr.f32.gmra.mrb[0].mxu0 %v331
      %v420 = vpop.f32.mrb[0].mxu0
      %v421 = vadd.f32 0.0, %v420
      %v422 = vpop.f32.mrb[0].mxu0
      %423 = vmatprep.mubr.f32.mxu0 0.0
      %424 = vmatmul.mubr.f32.gmra.mrb[0].mxu0 %v333
      %v425 = vpop.f32.mrb[0].mxu0
      %v426 = vadd.f32 0.0, %v425
      %v427 = vpop.f32.mrb[0].mxu0
      %428 = vmatprep.mubr.f32.mxu0 0.0
      %429 = vmatmul.mubr.f32.gmra.mrb[0].mxu0 %v335
      %v430 = vpop.f32.mrb[0].mxu0
      %v431 = vadd.f32 0.0, %v430
      %v432 = vpop.f32.mrb[0].mxu0
      %433 = vmatprep.mubr.f32.mxu0 0.0
      %434 = vmatmul.mubr.f32.gmra.mrb[0].mxu0 %v337
      %v435 = vpop.f32.mrb[0].mxu0
      %v436 = vadd.f32 0.0, %v435
      %v437 = vpop.f32.mrb[0].mxu0
      %438 = vmatprep.mubr.f32.mxu0 0.0
      %439 = vmatmul.mubr.f32.gmra.mrb[0].mxu0 %v339
      %v440 = vpop.f32.mrb[0].mxu0
      %v441 = vadd.f32 0.0, %v440
      %v442 = vpop.f32.mrb[0].mxu0
      %443 = vmatprep.mubr.f32.mxu0 0.0
      %444 = vmatmul.mubr.f32.gmra.mrb[0].mxu0 %v341
      %v445 = vpop.f32.mrb[0].mxu0
      %v446 = vadd.f32 0.0, %v445
      %v447 = vpop.f32.mrb[0].mxu0
      %448 = vmatprep.mubr.f32.mxu0 0.0
      %449 = vmatmul.mubr.f32.gmra.mrb[0].mxu0 %v343
      %v450 = vpop.f32.mrb[0].mxu0
      %v451 = vadd.f32 0.0, %v450
      %v452 = vpop.f32.mrb[0].mxu0
      %453 = vdwg.mxu0
      %v454 = vsel %vm328, %v258, 0
      %v456 = vsel %vm328, %v259, 0
      %v458 = vsel %vm328, %v260, 0
      %v460 = vsel %vm328, %v261, 0
      %v462 = vsel %vm328, %v262, 0
      %v464 = vsel %vm328, %v263, 0
      %v466 = vsel %vm328, %v264, 0
      %v468 = vsel %vm328, %v265, 0
      %v471 = vsel %vm345, %v267, 0
      %473 = vmatprep.subr.mxu0 0.0
      %474 = vmatpush1.msra.mxu0 %v266
      %475 = vmatprep.subr.mxu0 0.0
      %476 = vmatpush1.msra.mxu0 %v471
      %477 = vmatprep.subr.mxu0 0.0
      %478 = vmatpush1.msra.mxu0 0.0
      %479 = vmatprep.subr.mxu0 0.0
      %480 = vmatpush1.msra.mxu0 0.0
      %481 = vmatprep.subr.mxu0 0.0
      %482 = vmatpush1.msra.mxu0 0.0
      %483 = vmatprep.subr.mxu0 0.0
      %484 = vmatpush1.msra.mxu0 0.0
      %485 = vmatprep.subr.mxu0 0.0
      %486 = vmatpush1.msra.mxu0 0.0
      %487 = vmatprep.subr.mxu0 0.0
      %488 = vmatpush1.msra.mxu0 0.0
      %489 = vmatprep.subr.mxu0 0.0
      %490 = vmatpush1.msra.mxu0 0.0
      %491 = vmatprep.subr.mxu0 0.0
      %492 = vmatpush1.msra.mxu0 0.0
      %493 = vmatprep.subr.mxu0 0.0
      %494 = vmatpush1.msra.mxu0 0.0
      %495 = vmatprep.subr.mxu0 0.0
      %496 = vmatpush1.msra.mxu0 0.0
      %497 = vmatprep.subr.mxu0 0.0
      %498 = vmatpush1.msra.mxu0 0.0
      %499 = vmatprep.subr.mxu0 0.0
      %500 = vmatpush1.msra.mxu0 0.0
      %501 = vmatprep.subr.mxu0 0.0
      %502 = vmatpush1.msra.mxu0 0.0
      %503 = vmatprep.subr.mxu0 0.0
      %504 = vmatpush1.msra.mxu0 0.0
      %505 = vmatprep.subr.mxu0 0.0
      %506 = vmatpush1.msra.mxu0 0.0
      %507 = vmatprep.subr.mxu0 0.0
      %508 = vmatpush1.msra.mxu0 0.0
      %509 = vmatprep.subr.mxu0 0.0
      %510 = vmatpush1.msra.mxu0 0.0
      %511 = vmatprep.subr.mxu0 0.0
      %512 = vmatpush1.msra.mxu0 0.0
      %513 = vmatprep.subr.mxu0 0.0
      %514 = vmatpush1.msra.mxu0 0.0
      %515 = vmatprep.subr.mxu0 0.0
      %516 = vmatpush1.msra.mxu0 0.0
      %517 = vmatprep.subr.mxu0 0.0
      %518 = vmatpush1.msra.mxu0 0.0
      %519 = vmatprep.subr.mxu0 0.0
      %520 = vmatpush1.msra.mxu0 0.0
      %521 = vmatprep.subr.mxu0 0.0
      %522 = vmatpush1.msra.mxu0 0.0
      %523 = vmatprep.subr.mxu0 0.0
      %524 = vmatpush1.msra.mxu0 0.0
      %525 = vmatprep.subr.mxu0 0.0
      %526 = vmatpush1.msra.mxu0 0.0
      %527 = vmatprep.subr.mxu0 0.0
      %528 = vmatpush1.msra.mxu0 0.0
      %529 = vmatprep.subr.mxu0 0.0
      %530 = vmatpush1.msra.mxu0 0.0
      %531 = vmatprep.subr.mxu0 0.0
      %532 = vmatpush1.msra.mxu0 0.0
      %533 = vmatprep.subr.mxu0 0.0
      %534 = vmatpush1.msra.mxu0 0.0
      %535 = vmatprep.subr.mxu0 0.0
      %536 = vmatpush1.msra.mxu0 0.0
      %537 = vmatprep.mubr.f32.mxu0 0.0
      %538 = vmatmul.mubr.f32.gmra.mrb[0].mxu0 %v454
      %v539 = vpop.f32.mrb[0].mxu0
      %v540 = vadd.f32 %v416, %v539
      %v541 = vpop.f32.mrb[0].mxu0
      %542 = vmatprep.mubr.f32.mxu0 0.0
      %543 = vmatmul.mubr.f32.gmra.mrb[0].mxu0 %v456
      %v544 = vpop.f32.mrb[0].mxu0
      %v545 = vadd.f32 %v421, %v544
      %v546 = vpop.f32.mrb[0].mxu0
      %547 = vmatprep.mubr.f32.mxu0 0.0
      %548 = vmatmul.mubr.f32.gmra.mrb[0].mxu0 %v458
      %v549 = vpop.f32.mrb[0].mxu0
      %v550 = vadd.f32 %v426, %v549
      %v551 = vpop.f32.mrb[0].mxu0
      %552 = vmatprep.mubr.f32.mxu0 0.0
      %553 = vmatmul.mubr.f32.gmra.mrb[0].mxu0 %v460
      %v554 = vpop.f32.mrb[0].mxu0
      %v555 = vadd.f32 %v431, %v554
      %v556 = vpop.f32.mrb[0].mxu0
      %557 = vmatprep.mubr.f32.mxu0 0.0
      %558 = vmatmul.mubr.f32.gmra.mrb[0].mxu0 %v462
      %v559 = vpop.f32.mrb[0].mxu0
      %v560 = vadd.f32 %v436, %v559
      %v561 = vpop.f32.mrb[0].mxu0
      %562 = vmatprep.mubr.f32.mxu0 0.0
      %563 = vmatmul.mubr.f32.gmra.mrb[0].mxu0 %v464
      %v564 = vpop.f32.mrb[0].mxu0
      %v565 = vadd.f32 %v441, %v564
      %v566 = vpop.f32.mrb[0].mxu0
      %567 = vmatprep.mubr.f32.mxu0 0.0
      %568 = vmatmul.mubr.f32.gmra.mrb[0].mxu0 %v466
      %v569 = vpop.f32.mrb[0].mxu0
      %v570 = vadd.f32 %v446, %v569
      %v571 = vpop.f32.mrb[0].mxu0
      %572 = vmatprep.mubr.f32.mxu0 0.0
      %573 = vmatmul.mubr.f32.gmra.mrb[0].mxu0 %v468
      %v574 = vpop.f32.mrb[0].mxu0
      %v575 = vadd.f32 %v451, %v574
      %v576 = vpop.f32.mrb[0].mxu0
      %577 = vdwg.mxu0
      %v578 = vld [vmem:[%s244] sm:$0xe]
      %v579 = vld [vmem:[%s244 + $0x8] sm:$0xe]
      %v580 = vld [vmem:[%s244 + $0x10] sm:$0xe]
      %v581 = vld [vmem:[%s244 + $0x18] sm:$0xe]
      %v582 = vld [vmem:[%s244 + $0x20] sm:$0xe]
      %v583 = vld [vmem:[%s244 + $0x28] sm:$0xe]
      %v584 = vld [vmem:[%s244 + $0x30] sm:$0xe]
      %v585 = vld [vmem:[%s244 + $0x38] sm:$0xe]
      %v586 = vunpack.c.l.bf16 %v578
      %v587 = vunpack.c.l.bf16 %v579
      %v588 = vunpack.c.l.bf16 %v580
      %v589 = vunpack.c.l.bf16 %v581
      %v590 = vunpack.c.l.bf16 %v582
      %v591 = vunpack.c.l.bf16 %v583
      %v592 = vunpack.c.l.bf16 %v584
      %v593 = vunpack.c.l.bf16 %v585
      %vm602 = vcmask 1045504
      %v603 = vrot.slane %v586, 2
      %v604 = vrot.slane %v276, 2
      %v605 = vsel %vm602, %v603, %v604
      %v606 = vrot.slane %v587, 2
      %v607 = vrot.slane %v277, 2
      %v608 = vsel %vm602, %v606, %v607
      %v609 = vrot.slane %v588, 2
      %v610 = vrot.slane %v278, 2
      %v611 = vsel %vm602, %v609, %v610
      %v612 = vrot.slane %v589, 2
      %v613 = vrot.slane %v279, 2
      %v614 = vsel %vm602, %v612, %v613
      %v615 = vrot.slane %v590, 2
      %v616 = vrot.slane %v280, 2
      %v617 = vsel %vm602, %v615, %v616
      %v618 = vrot.slane %v591, 2
      %v619 = vrot.slane %v281, 2
      %v620 = vsel %vm602, %v618, %v619
      %v621 = vrot.slane %v592, 2
      %v622 = vrot.slane %v282, 2
      %v623 = vsel %vm602, %v621, %v622
      %v624 = vrot.slane %v593, 2
      %v625 = vrot.slane %v283, 2
      %v626 = vsel %vm602, %v624, %v625
      %s627 = scalar_lea.vmem %s1, 32
      %v628 = vld [vmem:[%s627] sm:$0xff]
      %v629 = vld [vmem:[%s627 + $0x8] sm:$0xf]
      %v630 = vsel %vm328, %v605, 0
      %v632 = vsel %vm328, %v608, 0
      %v634 = vsel %vm328, %v611, 0
      %v636 = vsel %vm328, %v614, 0
      %v638 = vsel %vm328, %v617, 0
      %v640 = vsel %vm328, %v620, 0
      %v642 = vsel %vm328, %v623, 0
      %v644 = vsel %vm328, %v626, 0
      %v647 = vsel %vm345, %v629, 0
      %649 = vmatprep.subr.mxu0 0.0
      %650 = vmatpush1.msra.mxu0 %v628
      %651 = vmatprep.subr.mxu0 0.0
      %652 = vmatpush1.msra.mxu0 %v647
      %653 = vmatprep.subr.mxu0 0.0
      %654 = vmatpush1.msra.mxu0 0.0
      %655 = vmatprep.subr.mxu0 0.0
      %656 = vmatpush1.msra.mxu0 0.0
      %657 = vmatprep.subr.mxu0 0.0
      %658 = vmatpush1.msra.mxu0 0.0
      %659 = vmatprep.subr.mxu0 0.0
      %660 = vmatpush1.msra.mxu0 0.0
      %661 = vmatprep.subr.mxu0 0.0
      %662 = vmatpush1.msra.mxu0 0.0
      %663 = vmatprep.subr.mxu0 0.0
      %664 = vmatpush1.msra.mxu0 0.0
      %665 = vmatprep.subr.mxu0 0.0
      %666 = vmatpush1.msra.mxu0 0.0
      %667 = vmatprep.subr.mxu0 0.0
      %668 = vmatpush1.msra.mxu0 0.0
      %669 = vmatprep.subr.mxu0 0.0
      %670 = vmatpush1.msra.mxu0 0.0
      %671 = vmatprep.subr.mxu0 0.0
      %672 = vmatpush1.msra.mxu0 0.0
      %673 = vmatprep.subr.mxu0 0.0
      %674 = vmatpush1.msra.mxu0 0.0
      %675 = vmatprep.subr.mxu0 0.0
      %676 = vmatpush1.msra.mxu0 0.0
      %677 = vmatprep.subr.mxu0 0.0
      %678 = vmatpush1.msra.mxu0 0.0
      %679 = vmatprep.subr.mxu0 0.0
      %680 = vmatpush1.msra.mxu0 0.0
      %681 = vmatprep.subr.mxu0 0.0
      %682 = vmatpush1.msra.mxu0 0.0
      %683 = vmatprep.subr.mxu0 0.0
      %684 = vmatpush1.msra.mxu0 0.0
      %685 = vmatprep.subr.mxu0 0.0
      %686 = vmatpush1.msra.mxu0 0.0
      %687 = vmatprep.subr.mxu0 0.0
      %688 = vmatpush1.msra.mxu0 0.0
      %689 = vmatprep.subr.mxu0 0.0
      %690 = vmatpush1.msra.mxu0 0.0
      %691 = vmatprep.subr.mxu0 0.0
      %692 = vmatpush1.msra.mxu0 0.0
      %693 = vmatprep.subr.mxu0 0.0
      %694 = vmatpush1.msra.mxu0 0.0
      %695 = vmatprep.subr.mxu0 0.0
      %696 = vmatpush1.msra.mxu0 0.0
      %697 = vmatprep.subr.mxu0 0.0
      %698 = vmatpush1.msra.mxu0 0.0
      %699 = vmatprep.subr.mxu0 0.0
      %700 = vmatpush1.msra.mxu0 0.0
      %701 = vmatprep.subr.mxu0 0.0
      %702 = vmatpush1.msra.mxu0 0.0
      %703 = vmatprep.subr.mxu0 0.0
      %704 = vmatpush1.msra.mxu0 0.0
      %705 = vmatprep.subr.mxu0 0.0
      %706 = vmatpush1.msra.mxu0 0.0
      %707 = vmatprep.subr.mxu0 0.0
      %708 = vmatpush1.msra.mxu0 0.0
      %709 = vmatprep.subr.mxu0 0.0
      %710 = vmatpush1.msra.mxu0 0.0
      %711 = vmatprep.subr.mxu0 0.0
      %712 = vmatpush1.msra.mxu0 0.0
      %713 = vmatprep.mubr.f32.mxu0 0.0
      %714 = vmatmul.mubr.f32.gmra.mrb[0].mxu0 %v630
      %v715 = vpop.f32.mrb[0].mxu0
      %v716 = vadd.f32 0.0, %v715
      %v717 = vpop.f32.mrb[0].mxu0
      %718 = vmatprep.mubr.f32.mxu0 0.0
      %719 = vmatmul.mubr.f32.gmra.mrb[0].mxu0 %v632
      %v720 = vpop.f32.mrb[0].mxu0
      %v721 = vadd.f32 0.0, %v720
      %v722 = vpop.f32.mrb[0].mxu0
      %723 = vmatprep.mubr.f32.mxu0 0.0
      %724 = vmatmul.mubr.f32.gmra.mrb[0].mxu0 %v634
      %v725 = vpop.f32.mrb[0].mxu0
      %v726 = vadd.f32 0.0, %v725
      %v727 = vpop.f32.mrb[0].mxu0
      %728 = vmatprep.mubr.f32.mxu0 0.0
      %729 = vmatmul.mubr.f32.gmra.mrb[0].mxu0 %v636
      %v730 = vpop.f32.mrb[0].mxu0
      %v731 = vadd.f32 0.0, %v730
      %v732 = vpop.f32.mrb[0].mxu0
      %733 = vmatprep.mubr.f32.mxu0 0.0
      %734 = vmatmul.mubr.f32.gmra.mrb[0].mxu0 %v638
      %v735 = vpop.f32.mrb[0].mxu0
      %v736 = vadd.f32 0.0, %v735
      %v737 = vpop.f32.mrb[0].mxu0
      %738 = vmatprep.mubr.f32.mxu0 0.0
      %739 = vmatmul.mubr.f32.gmra.mrb[0].mxu0 %v640
      %v740 = vpop.f32.mrb[0].mxu0
      %v741 = vadd.f32 0.0, %v740
      %v742 = vpop.f32.mrb[0].mxu0
      %743 = vmatprep.mubr.f32.mxu0 0.0
      %744 = vmatmul.mubr.f32.gmra.mrb[0].mxu0 %v642
      %v745 = vpop.f32.mrb[0].mxu0
      %v746 = vadd.f32 0.0, %v745
      %v747 = vpop.f32.mrb[0].mxu0
      %748 = vmatprep.mubr.f32.mxu0 0.0
      %749 = vmatmul.mubr.f32.gmra.mrb[0].mxu0 %v644
      %v750 = vpop.f32.mrb[0].mxu0
      %v751 = vadd.f32 0.0, %v750
      %v752 = vpop.f32.mrb[0].mxu0
      %753 = vdwg.mxu0
      %v754 = vadd.f32 %v540, %v716
      %v755 = vadd.f32 %v545, %v721
      %v756 = vadd.f32 %v550, %v726
      %v757 = vadd.f32 %v555, %v731
      %v758 = vadd.f32 %v560, %v736
      %v759 = vadd.f32 %v565, %v741
      %v760 = vadd.f32 %v570, %v746
      %v761 = vadd.f32 %v575, %v751
      %v762 = vld [vmem:[%s244 + $0x4] sm:$0x3]
      %v763 = vld [vmem:[%s244 + $0xc] sm:$0x3]
      %v764 = vld [vmem:[%s244 + $0x14] sm:$0x3]
      %v765 = vld [vmem:[%s244 + $0x1c] sm:$0x3]
      %v766 = vld [vmem:[%s244 + $0x24] sm:$0x3]
      %v767 = vld [vmem:[%s244 + $0x2c] sm:$0x3]
      %v768 = vld [vmem:[%s244 + $0x34] sm:$0x3]
      %v769 = vld [vmem:[%s244 + $0x3c] sm:$0x3]
      %v770 = vunpack.c.l.bf16 %v762
      %v771 = vunpack.c.l.bf16 %v763
      %v772 = vunpack.c.l.bf16 %v764
      %v773 = vunpack.c.l.bf16 %v765
      %v774 = vunpack.c.l.bf16 %v766
      %v775 = vunpack.c.l.bf16 %v767
      %v776 = vunpack.c.l.bf16 %v768
      %v777 = vunpack.c.l.bf16 %v769
      %vm786 = vcmask 1044480
      %v787 = vrot.slane %v586, 3
      %v788 = vrot.slane %v770, 3
      %v789 = vsel %vm786, %v787, %v788
      %v790 = vrot.slane %v587, 3
      %v791 = vrot.slane %v771, 3
      %v792 = vsel %vm786, %v790, %v791
      %v793 = vrot.slane %v588, 3
      %v794 = vrot.slane %v772, 3
      %v795 = vsel %vm786, %v793, %v794
      %v796 = vrot.slane %v589, 3
      %v797 = vrot.slane %v773, 3
      %v798 = vsel %vm786, %v796, %v797
      %v799 = vrot.slane %v590, 3
      %v800 = vrot.slane %v774, 3
      %v801 = vsel %vm786, %v799, %v800
      %v802 = vrot.slane %v591, 3
      %v803 = vrot.slane %v775, 3
      %v804 = vsel %vm786, %v802, %v803
      %v805 = vrot.slane %v592, 3
      %v806 = vrot.slane %v776, 3
      %v807 = vsel %vm786, %v805, %v806
      %v808 = vrot.slane %v593, 3
      %v809 = vrot.slane %v777, 3
      %v810 = vsel %vm786, %v808, %v809
      %s811 = scalar_lea.vmem %s1, 48
      %v812 = vld [vmem:[%s811] sm:$0xff]
      %v813 = vld [vmem:[%s811 + $0x8] sm:$0xf]
      %v814 = vsel %vm328, %v789, 0
      %v816 = vsel %vm328, %v792, 0
      %v818 = vsel %vm328, %v795, 0
      %v820 = vsel %vm328, %v798, 0
      %v822 = vsel %vm328, %v801, 0
      %v824 = vsel %vm328, %v804, 0
      %v826 = vsel %vm328, %v807, 0
      %v828 = vsel %vm328, %v810, 0
      %v831 = vsel %vm345, %v813, 0
      %833 = vmatprep.subr.mxu0 0.0
      %834 = vmatpush1.msra.mxu0 %v812
      %835 = vmatprep.subr.mxu0 0.0
      %836 = vmatpush1.msra.mxu0 %v831
      %837 = vmatprep.subr.mxu0 0.0
      %838 = vmatpush1.msra.mxu0 0.0
      %839 = vmatprep.subr.mxu0 0.0
      %840 = vmatpush1.msra.mxu0 0.0
      %841 = vmatprep.subr.mxu0 0.0
      %842 = vmatpush1.msra.mxu0 0.0
      %843 = vmatprep.subr.mxu0 0.0
      %844 = vmatpush1.msra.mxu0 0.0
      %845 = vmatprep.subr.mxu0 0.0
      %846 = vmatpush1.msra.mxu0 0.0
      %847 = vmatprep.subr.mxu0 0.0
      %848 = vmatpush1.msra.mxu0 0.0
      %849 = vmatprep.subr.mxu0 0.0
      %850 = vmatpush1.msra.mxu0 0.0
      %851 = vmatprep.subr.mxu0 0.0
      %852 = vmatpush1.msra.mxu0 0.0
      %853 = vmatprep.subr.mxu0 0.0
      %854 = vmatpush1.msra.mxu0 0.0
      %855 = vmatprep.subr.mxu0 0.0
      %856 = vmatpush1.msra.mxu0 0.0
      %857 = vmatprep.subr.mxu0 0.0
      %858 = vmatpush1.msra.mxu0 0.0
      %859 = vmatprep.subr.mxu0 0.0
      %860 = vmatpush1.msra.mxu0 0.0
      %861 = vmatprep.subr.mxu0 0.0
      %862 = vmatpush1.msra.mxu0 0.0
      %863 = vmatprep.subr.mxu0 0.0
      %864 = vmatpush1.msra.mxu0 0.0
      %865 = vmatprep.subr.mxu0 0.0
      %866 = vmatpush1.msra.mxu0 0.0
      %867 = vmatprep.subr.mxu0 0.0
      %868 = vmatpush1.msra.mxu0 0.0
      %869 = vmatprep.subr.mxu0 0.0
      %870 = vmatpush1.msra.mxu0 0.0
      %871 = vmatprep.subr.mxu0 0.0
      %872 = vmatpush1.msra.mxu0 0.0
      %873 = vmatprep.subr.mxu0 0.0
      %874 = vmatpush1.msra.mxu0 0.0
      %875 = vmatprep.subr.mxu0 0.0
      %876 = vmatpush1.msra.mxu0 0.0
      %877 = vmatprep.subr.mxu0 0.0
      %878 = vmatpush1.msra.mxu0 0.0
      %879 = vmatprep.subr.mxu0 0.0
      %880 = vmatpush1.msra.mxu0 0.0
      %881 = vmatprep.subr.mxu0 0.0
      %882 = vmatpush1.msra.mxu0 0.0
      %883 = vmatprep.subr.mxu0 0.0
      %884 = vmatpush1.msra.mxu0 0.0
      %885 = vmatprep.subr.mxu0 0.0
      %886 = vmatpush1.msra.mxu0 0.0
      %887 = vmatprep.subr.mxu0 0.0
      %888 = vmatpush1.msra.mxu0 0.0
      %889 = vmatprep.subr.mxu0 0.0
      %890 = vmatpush1.msra.mxu0 0.0
      %891 = vmatprep.subr.mxu0 0.0
      %892 = vmatpush1.msra.mxu0 0.0
      %893 = vmatprep.subr.mxu0 0.0
      %894 = vmatpush1.msra.mxu0 0.0
      %895 = vmatprep.subr.mxu0 0.0
      %896 = vmatpush1.msra.mxu0 0.0
      %897 = vmatprep.mubr.f32.mxu0 0.0
      %898 = vmatmul.mubr.f32.gmra.mrb[0].mxu0 %v814
      %v899 = vpop.f32.mrb[0].mxu0
      %v900 = vadd.f32 0.0, %v899
      %v901 = vpop.f32.mrb[0].mxu0
      %902 = vmatprep.mubr.f32.mxu0 0.0
      %903 = vmatmul.mubr.f32.gmra.mrb[0].mxu0 %v816
      %v904 = vpop.f32.mrb[0].mxu0
      %v905 = vadd.f32 0.0, %v904
      %v906 = vpop.f32.mrb[0].mxu0
      %907 = vmatprep.mubr.f32.mxu0 0.0
      %908 = vmatmul.mubr.f32.gmra.mrb[0].mxu0 %v818
      %v909 = vpop.f32.mrb[0].mxu0
      %v910 = vadd.f32 0.0, %v909
      %v911 = vpop.f32.mrb[0].mxu0
      %912 = vmatprep.mubr.f32.mxu0 0.0
      %913 = vmatmul.mubr.f32.gmra.mrb[0].mxu0 %v820
      %v914 = vpop.f32.mrb[0].mxu0
      %v915 = vadd.f32 0.0, %v914
      %v916 = vpop.f32.mrb[0].mxu0
      %917 = vmatprep.mubr.f32.mxu0 0.0
      %918 = vmatmul.mubr.f32.gmra.mrb[0].mxu0 %v822
      %v919 = vpop.f32.mrb[0].mxu0
      %v920 = vadd.f32 0.0, %v919
      %v921 = vpop.f32.mrb[0].mxu0
      %922 = vmatprep.mubr.f32.mxu0 0.0
      %923 = vmatmul.mubr.f32.gmra.mrb[0].mxu0 %v824
      %v924 = vpop.f32.mrb[0].mxu0
      %v925 = vadd.f32 0.0, %v924
      %v926 = vpop.f32.mrb[0].mxu0
      %927 = vmatprep.mubr.f32.mxu0 0.0
      %928 = vmatmul.mubr.f32.gmra.mrb[0].mxu0 %v826
      %v929 = vpop.f32.mrb[0].mxu0
      %v930 = vadd.f32 0.0, %v929
      %v931 = vpop.f32.mrb[0].mxu0
      %932 = vmatprep.mubr.f32.mxu0 0.0
      %933 = vmatmul.mubr.f32.gmra.mrb[0].mxu0 %v828
      %v934 = vpop.f32.mrb[0].mxu0
      %v935 = vadd.f32 0.0, %v934
      %v936 = vpop.f32.mrb[0].mxu0
      %937 = vdwg.mxu0
      %v938 = vadd.f32 %v754, %v900
      %v939 = vadd.f32 %v755, %v905
      %v940 = vadd.f32 %v756, %v910
      %v941 = vadd.f32 %v757, %v915
      %v942 = vadd.f32 %v758, %v920
      %v943 = vadd.f32 %v759, %v925
      %v944 = vadd.f32 %v760, %v930
      %v945 = vadd.f32 %v761, %v935
      %s946 = scalar_lea.vmem %s244, 8
      %v947 = vld [vmem:[%s946] sm:$0xf]
      %v948 = vld [vmem:[%s946 + $0x8] sm:$0xf]
      %v949 = vld [vmem:[%s946 + $0x10] sm:$0xf]
      %v950 = vld [vmem:[%s946 + $0x18] sm:$0xf]
      %v951 = vld [vmem:[%s946 + $0x20] sm:$0xf]
      %v952 = vld [vmem:[%s946 + $0x28] sm:$0xf]
      %v953 = vld [vmem:[%s946 + $0x30] sm:$0xf]
      %v954 = vld [vmem:[%s946 + $0x38] sm:$0xf]
      %v955 = vunpack.c.l.bf16 %v947
      %v956 = vunpack.c.l.bf16 %v948
      %v957 = vunpack.c.l.bf16 %v949
      %v958 = vunpack.c.l.bf16 %v950
      %v959 = vunpack.c.l.bf16 %v951
      %v960 = vunpack.c.l.bf16 %v952
      %v961 = vunpack.c.l.bf16 %v953
      %v962 = vunpack.c.l.bf16 %v954
      %s963 = scalar_lea.vmem %s1, 64
      %v964 = vld [vmem:[%s963] sm:$0xff]
      %v965 = vld [vmem:[%s963 + $0x8] sm:$0xf]
      %v967 = vsel %vm328, %v955, 0
      %v970 = vsel %vm328, %v956, 0
      %v973 = vsel %vm328, %v957, 0
      %v976 = vsel %vm328, %v958, 0
      %v979 = vsel %vm328, %v959, 0
      %v982 = vsel %vm328, %v960, 0
      %v985 = vsel %vm328, %v961, 0
      %v988 = vsel %vm328, %v962, 0
      %v991 = vsel %vm345, %v965, 0
      %993 = vmatprep.subr.mxu0 0.0
      %994 = vmatpush1.msra.mxu0 %v964
      %995 = vmatprep.subr.mxu0 0.0
      %996 = vmatpush1.msra.mxu0 %v991
      %997 = vmatprep.subr.mxu0 0.0
      %998 = vmatpush1.msra.mxu0 0.0
      %999 = vmatprep.subr.mxu0 0.0
      %1000 = vmatpush1.msra.mxu0 0.0
      %1001 = vmatprep.subr.mxu0 0.0
      %1002 = vmatpush1.msra.mxu0 0.0
      %1003 = vmatprep.subr.mxu0 0.0
      %1004 = vmatpush1.msra.mxu0 0.0
      %1005 = vmatprep.subr.mxu0 0.0
      %1006 = vmatpush1.msra.mxu0 0.0
      %1007 = vmatprep.subr.mxu0 0.0
      %1008 = vmatpush1.msra.mxu0 0.0
      %1009 = vmatprep.subr.mxu0 0.0
      %1010 = vmatpush1.msra.mxu0 0.0
      %1011 = vmatprep.subr.mxu0 0.0
      %1012 = vmatpush1.msra.mxu0 0.0
      %1013 = vmatprep.subr.mxu0 0.0
      %1014 = vmatpush1.msra.mxu0 0.0
      %1015 = vmatprep.subr.mxu0 0.0
      %1016 = vmatpush1.msra.mxu0 0.0
      %1017 = vmatprep.subr.mxu0 0.0
      %1018 = vmatpush1.msra.mxu0 0.0
      %1019 = vmatprep.subr.mxu0 0.0
      %1020 = vmatpush1.msra.mxu0 0.0
      %1021 = vmatprep.subr.mxu0 0.0
      %1022 = vmatpush1.msra.mxu0 0.0
      %1023 = vmatprep.subr.mxu0 0.0
      %1024 = vmatpush1.msra.mxu0 0.0
      %1025 = vmatprep.subr.mxu0 0.0
      %1026 = vmatpush1.msra.mxu0 0.0
      %1027 = vmatprep.subr.mxu0 0.0
      %1028 = vmatpush1.msra.mxu0 0.0
      %1029 = vmatprep.subr.mxu0 0.0
      %1030 = vmatpush1.msra.mxu0 0.0
      %1031 = vmatprep.subr.mxu0 0.0
      %1032 = vmatpush1.msra.mxu0 0.0
      %1033 = vmatprep.subr.mxu0 0.0
      %1034 = vmatpush1.msra.mxu0 0.0
      %1035 = vmatprep.subr.mxu0 0.0
      %1036 = vmatpush1.msra.mxu0 0.0
      %1037 = vmatprep.subr.mxu0 0.0
      %1038 = vmatpush1.msra.mxu0 0.0
      %1039 = vmatprep.subr.mxu0 0.0
      %1040 = vmatpush1.msra.mxu0 0.0
      %1041 = vmatprep.subr.mxu0 0.0
      %1042 = vmatpush1.msra.mxu0 0.0
      %1043 = vmatprep.subr.mxu0 0.0
      %1044 = vmatpush1.msra.mxu0 0.0
      %1045 = vmatprep.subr.mxu0 0.0
      %1046 = vmatpush1.msra.mxu0 0.0
      %1047 = vmatprep.subr.mxu0 0.0
      %1048 = vmatpush1.msra.mxu0 0.0
      %1049 = vmatprep.subr.mxu0 0.0
      %1050 = vmatpush1.msra.mxu0 0.0
      %1051 = vmatprep.subr.mxu0 0.0
      %1052 = vmatpush1.msra.mxu0 0.0
      %1053 = vmatprep.subr.mxu0 0.0
      %1054 = vmatpush1.msra.mxu0 0.0
      %1055 = vmatprep.subr.mxu0 0.0
      %1056 = vmatpush1.msra.mxu0 0.0
      %1057 = vmatprep.mubr.f32.mxu0 0.0
      %1058 = vmatmul.mubr.f32.gmra.mrb[0].mxu0 %v967
      %v1059 = vpop.f32.mrb[0].mxu0
      %v1060 = vadd.f32 0.0, %v1059
      %v1061 = vpop.f32.mrb[0].mxu0
      %1062 = vmatprep.mubr.f32.mxu0 0.0
      %1063 = vmatmul.mubr.f32.gmra.mrb[0].mxu0 %v970
      %v1064 = vpop.f32.mrb[0].mxu0
      %v1065 = vadd.f32 0.0, %v1064
      %v1066 = vpop.f32.mrb[0].mxu0
      %1067 = vmatprep.mubr.f32.mxu0 0.0
      %1068 = vmatmul.mubr.f32.gmra.mrb[0].mxu0 %v973
      %v1069 = vpop.f32.mrb[0].mxu0
      %v1070 = vadd.f32 0.0, %v1069
      %v1071 = vpop.f32.mrb[0].mxu0
      %1072 = vmatprep.mubr.f32.mxu0 0.0
      %1073 = vmatmul.mubr.f32.gmra.mrb[0].mxu0 %v976
      %v1074 = vpop.f32.mrb[0].mxu0
      %v1075 = vadd.f32 0.0, %v1074
      %v1076 = vpop.f32.mrb[0].mxu0
      %1077 = vmatprep.mubr.f32.mxu0 0.0
      %1078 = vmatmul.mubr.f32.gmra.mrb[0].mxu0 %v979
      %v1079 = vpop.f32.mrb[0].mxu0
      %v1080 = vadd.f32 0.0, %v1079
      %v1081 = vpop.f32.mrb[0].mxu0
      %1082 = vmatprep.mubr.f32.mxu0 0.0
      %1083 = vmatmul.mubr.f32.gmra.mrb[0].mxu0 %v982
      %v1084 = vpop.f32.mrb[0].mxu0
      %v1085 = vadd.f32 0.0, %v1084
      %v1086 = vpop.f32.mrb[0].mxu0
      %1087 = vmatprep.mubr.f32.mxu0 0.0
      %1088 = vmatmul.mubr.f32.gmra.mrb[0].mxu0 %v985
      %v1089 = vpop.f32.mrb[0].mxu0
      %v1090 = vadd.f32 0.0, %v1089
      %v1091 = vpop.f32.mrb[0].mxu0
      %1092 = vmatprep.mubr.f32.mxu0 0.0
      %1093 = vmatmul.mubr.f32.gmra.mrb[0].mxu0 %v988
      %v1094 = vpop.f32.mrb[0].mxu0
      %v1095 = vadd.f32 0.0, %v1094
      %v1096 = vpop.f32.mrb[0].mxu0
      %1097 = vdwg.mxu0
      %v1098 = vadd.f32 %v938, %v1060
      %v1099 = vadd.f32 %v939, %v1065
      %v1100 = vadd.f32 %v940, %v1070
      %v1101 = vadd.f32 %v941, %v1075
      %v1102 = vadd.f32 %v942, %v1080
      %v1103 = vadd.f32 %v943, %v1085
      %v1104 = vadd.f32 %v944, %v1090
      %v1105 = vadd.f32 %v945, %v1095
      %v1106 = vld [vmem:[%s946] sm:$0xf]
      %v1107 = vld [vmem:[%s946 + $0x4] sm:$0x1]
      %v1108 = vld [vmem:[%s946 + $0x8] sm:$0xf]
      %v1109 = vld [vmem:[%s946 + $0xc] sm:$0x1]
      %v1110 = vld [vmem:[%s946 + $0x10] sm:$0xf]
      %v1111 = vld [vmem:[%s946 + $0x14] sm:$0x1]
      %v1112 = vld [vmem:[%s946 + $0x18] sm:$0xf]
      %v1113 = vld [vmem:[%s946 + $0x1c] sm:$0x1]
      %v1114 = vld [vmem:[%s946 + $0x20] sm:$0xf]
      %v1115 = vld [vmem:[%s946 + $0x24] sm:$0x1]
      %v1116 = vld [vmem:[%s946 + $0x28] sm:$0xf]
      %v1117 = vld [vmem:[%s946 + $0x2c] sm:$0x1]
      %v1118 = vld [vmem:[%s946 + $0x30] sm:$0xf]
      %v1119 = vld [vmem:[%s946 + $0x34] sm:$0x1]
      %v1120 = vld [vmem:[%s946 + $0x38] sm:$0xf]
      %v1121 = vld [vmem:[%s946 + $0x3c] sm:$0x1]
      %v1122 = vunpack.c.l.bf16 %v1106
      %v1123 = vunpack.c.l.bf16 %v1107
      %v1124 = vunpack.c.l.bf16 %v1108
      %v1125 = vunpack.c.l.bf16 %v1109
      %v1126 = vunpack.c.l.bf16 %v1110
      %v1127 = vunpack.c.l.bf16 %v1111
      %v1128 = vunpack.c.l.bf16 %v1112
      %v1129 = vunpack.c.l.bf16 %v1113
      %v1130 = vunpack.c.l.bf16 %v1114
      %v1131 = vunpack.c.l.bf16 %v1115
      %v1132 = vunpack.c.l.bf16 %v1116
      %v1133 = vunpack.c.l.bf16 %v1117
      %v1134 = vunpack.c.l.bf16 %v1118
      %v1135 = vunpack.c.l.bf16 %v1119
      %v1136 = vunpack.c.l.bf16 %v1120
      %v1137 = vunpack.c.l.bf16 %v1121
      %v1154 = vrot.slane %v1122, 1
      %v1155 = vrot.slane %v1123, 1
      %v1156 = vsel %vm300, %v1154, %v1155
      %v1157 = vrot.slane %v1124, 1
      %v1158 = vrot.slane %v1125, 1
      %v1159 = vsel %vm300, %v1157, %v1158
      %v1160 = vrot.slane %v1126, 1
      %v1161 = vrot.slane %v1127, 1
      %v1162 = vsel %vm300, %v1160, %v1161
      %v1163 = vrot.slane %v1128, 1
      %v1164 = vrot.slane %v1129, 1
      %v1165 = vsel %vm300, %v1163, %v1164
      %v1166 = vrot.slane %v1130, 1
      %v1167 = vrot.slane %v1131, 1
      %v1168 = vsel %vm300, %v1166, %v1167
      %v1169 = vrot.slane %v1132, 1
      %v1170 = vrot.slane %v1133, 1
      %v1171 = vsel %vm300, %v1169, %v1170
      %v1172 = vrot.slane %v1134, 1
      %v1173 = vrot.slane %v1135, 1
      %v1174 = vsel %vm300, %v1172, %v1173
      %v1175 = vrot.slane %v1136, 1
      %v1176 = vrot.slane %v1137, 1
      %v1177 = vsel %vm300, %v1175, %v1176
      %s1178 = scalar_lea.vmem %s1, 80
      %v1179 = vld [vmem:[%s1178] sm:$0xff]
      %v1180 = vld [vmem:[%s1178 + $0x8] sm:$0xf]
      %v1181 = vsel %vm328, %v1156, 0
      %v1183 = vsel %vm328, %v1159, 0
      %v1185 = vsel %vm328, %v1162, 0
      %v1187 = vsel %vm328, %v1165, 0
      %v1189 = vsel %vm328, %v1168, 0
      %v1191 = vsel %vm328, %v1171, 0
      %v1193 = vsel %vm328, %v1174, 0
      %v1195 = vsel %vm328, %v1177, 0
      %v1198 = vsel %vm345, %v1180, 0
      %1200 = vmatprep.subr.mxu0 0.0
      %1201 = vmatpush1.msra.mxu0 %v1179
      %1202 = vmatprep.subr.mxu0 0.0
      %1203 = vmatpush1.msra.mxu0 %v1198
      %1204 = vmatprep.subr.mxu0 0.0
      %1205 = vmatpush1.msra.mxu0 0.0
      %1206 = vmatprep.subr.mxu0 0.0
      %1207 = vmatpush1.msra.mxu0 0.0
      %1208 = vmatprep.subr.mxu0 0.0
      %1209 = vmatpush1.msra.mxu0 0.0
      %1210 = vmatprep.subr.mxu0 0.0
      %1211 = vmatpush1.msra.mxu0 0.0
      %1212 = vmatprep.subr.mxu0 0.0
      %1213 = vmatpush1.msra.mxu0 0.0
      %1214 = vmatprep.subr.mxu0 0.0
      %1215 = vmatpush1.msra.mxu0 0.0
      %1216 = vmatprep.subr.mxu0 0.0
      %1217 = vmatpush1.msra.mxu0 0.0
      %1218 = vmatprep.subr.mxu0 0.0
      %1219 = vmatpush1.msra.mxu0 0.0
      %1220 = vmatprep.subr.mxu0 0.0
      %1221 = vmatpush1.msra.mxu0 0.0
      %1222 = vmatprep.subr.mxu0 0.0
      %1223 = vmatpush1.msra.mxu0 0.0
      %1224 = vmatprep.subr.mxu0 0.0
      %1225 = vmatpush1.msra.mxu0 0.0
      %1226 = vmatprep.subr.mxu0 0.0
      %1227 = vmatpush1.msra.mxu0 0.0
      %1228 = vmatprep.subr.mxu0 0.0
      %1229 = vmatpush1.msra.mxu0 0.0
      %1230 = vmatprep.subr.mxu0 0.0
      %1231 = vmatpush1.msra.mxu0 0.0
      %1232 = vmatprep.subr.mxu0 0.0
      %1233 = vmatpush1.msra.mxu0 0.0
      %1234 = vmatprep.subr.mxu0 0.0
      %1235 = vmatpush1.msra.mxu0 0.0
      %1236 = vmatprep.subr.mxu0 0.0
      %1237 = vmatpush1.msra.mxu0 0.0
      %1238 = vmatprep.subr.mxu0 0.0
      %1239 = vmatpush1.msra.mxu0 0.0
      %1240 = vmatprep.subr.mxu0 0.0
      %1241 = vmatpush1.msra.mxu0 0.0
      %1242 = vmatprep.subr.mxu0 0.0
      %1243 = vmatpush1.msra.mxu0 0.0
      %1244 = vmatprep.subr.mxu0 0.0
      %1245 = vmatpush1.msra.mxu0 0.0
      %1246 = vmatprep.subr.mxu0 0.0
      %1247 = vmatpush1.msra.mxu0 0.0
      %1248 = vmatprep.subr.mxu0 0.0
      %1249 = vmatpush1.msra.mxu0 0.0
      %1250 = vmatprep.subr.mxu0 0.0
      %1251 = vmatpush1.msra.mxu0 0.0
      %1252 = vmatprep.subr.mxu0 0.0
      %1253 = vmatpush1.msra.mxu0 0.0
      %1254 = vmatprep.subr.mxu0 0.0
      %1255 = vmatpush1.msra.mxu0 0.0
      %1256 = vmatprep.subr.mxu0 0.0
      %1257 = vmatpush1.msra.mxu0 0.0
      %1258 = vmatprep.subr.mxu0 0.0
      %1259 = vmatpush1.msra.mxu0 0.0
      %1260 = vmatprep.subr.mxu0 0.0
      %1261 = vmatpush1.msra.mxu0 0.0
      %1262 = vmatprep.subr.mxu0 0.0
      %1263 = vmatpush1.msra.mxu0 0.0
      %1264 = vmatprep.mubr.f32.mxu0 0.0
      %1265 = vmatmul.mubr.f32.gmra.mrb[0].mxu0 %v1181
      %v1266 = vpop.f32.mrb[0].mxu0
      %v1267 = vadd.f32 0.0, %v1266
      %v1268 = vpop.f32.mrb[0].mxu0
      %1269 = vmatprep.mubr.f32.mxu0 0.0
      %1270 = vmatmul.mubr.f32.gmra.mrb[0].mxu0 %v1183
      %v1271 = vpop.f32.mrb[0].mxu0
      %v1272 = vadd.f32 0.0, %v1271
      %v1273 = vpop.f32.mrb[0].mxu0
      %1274 = vmatprep.mubr.f32.mxu0 0.0
      %1275 = vmatmul.mubr.f32.gmra.mrb[0].mxu0 %v1185
      %v1276 = vpop.f32.mrb[0].mxu0
      %v1277 = vadd.f32 0.0, %v1276
      %v1278 = vpop.f32.mrb[0].mxu0
      %1279 = vmatprep.mubr.f32.mxu0 0.0
      %1280 = vmatmul.mubr.f32.gmra.mrb[0].mxu0 %v1187
      %v1281 = vpop.f32.mrb[0].mxu0
      %v1282 = vadd.f32 0.0, %v1281
      %v1283 = vpop.f32.mrb[0].mxu0
      %1284 = vmatprep.mubr.f32.mxu0 0.0
      %1285 = vmatmul.mubr.f32.gmra.mrb[0].mxu0 %v1189
      %v1286 = vpop.f32.mrb[0].mxu0
      %v1287 = vadd.f32 0.0, %v1286
      %v1288 = vpop.f32.mrb[0].mxu0
      %1289 = vmatprep.mubr.f32.mxu0 0.0
      %1290 = vmatmul.mubr.f32.gmra.mrb[0].mxu0 %v1191
      %v1291 = vpop.f32.mrb[0].mxu0
      %v1292 = vadd.f32 0.0, %v1291
      %v1293 = vpop.f32.mrb[0].mxu0
      %1294 = vmatprep.mubr.f32.mxu0 0.0
      %1295 = vmatmul.mubr.f32.gmra.mrb[0].mxu0 %v1193
      %v1296 = vpop.f32.mrb[0].mxu0
      %v1297 = vadd.f32 0.0, %v1296
      %v1298 = vpop.f32.mrb[0].mxu0
      %1299 = vmatprep.mubr.f32.mxu0 0.0
      %1300 = vmatmul.mubr.f32.gmra.mrb[0].mxu0 %v1195
      %v1301 = vpop.f32.mrb[0].mxu0
      %v1302 = vadd.f32 0.0, %v1301
      %v1303 = vpop.f32.mrb[0].mxu0
      %1304 = vdwg.mxu0
      %v1305 = vadd.f32 %v1098, %v1267
      %v1306 = vadd.f32 %v1099, %v1272
      %v1307 = vadd.f32 %v1100, %v1277
      %v1308 = vadd.f32 %v1101, %v1282
      %v1309 = vadd.f32 %v1102, %v1287
      %v1310 = vadd.f32 %v1103, %v1292
      %v1311 = vadd.f32 %v1104, %v1297
      %v1312 = vadd.f32 %v1105, %v1302
      %v1313 = vld [vmem:[%s946] sm:$0xe]
      %v1314 = vld [vmem:[%s946 + $0x8] sm:$0xe]
      %v1315 = vld [vmem:[%s946 + $0x10] sm:$0xe]
      %v1316 = vld [vmem:[%s946 + $0x18] sm:$0xe]
      %v1317 = vld [vmem:[%s946 + $0x20] sm:$0xe]
      %v1318 = vld [vmem:[%s946 + $0x28] sm:$0xe]
      %v1319 = vld [vmem:[%s946 + $0x30] sm:$0xe]
      %v1320 = vld [vmem:[%s946 + $0x38] sm:$0xe]
      %v1321 = vunpack.c.l.bf16 %v1313
      %v1322 = vunpack.c.l.bf16 %v1314
      %v1323 = vunpack.c.l.bf16 %v1315
      %v1324 = vunpack.c.l.bf16 %v1316
      %v1325 = vunpack.c.l.bf16 %v1317
      %v1326 = vunpack.c.l.bf16 %v1318
      %v1327 = vunpack.c.l.bf16 %v1319
      %v1328 = vunpack.c.l.bf16 %v1320
      %v1337 = vrot.slane %v1321, 2
      %v1338 = vrot.slane %v1123, 2
      %v1339 = vsel %vm602, %v1337, %v1338
      %v1340 = vrot.slane %v1322, 2
      %v1341 = vrot.slane %v1125, 2
      %v1342 = vsel %vm602, %v1340, %v1341
      %v1343 = vrot.slane %v1323, 2
      %v1344 = vrot.slane %v1127, 2
      %v1345 = vsel %vm602, %v1343, %v1344
      %v1346 = vrot.slane %v1324, 2
      %v1347 = vrot.slane %v1129, 2
      %v1348 = vsel %vm602, %v1346, %v1347
      %v1349 = vrot.slane %v1325, 2
      %v1350 = vrot.slane %v1131, 2
      %v1351 = vsel %vm602, %v1349, %v1350
      %v1352 = vrot.slane %v1326, 2
      %v1353 = vrot.slane %v1133, 2
      %v1354 = vsel %vm602, %v1352, %v1353
      %v1355 = vrot.slane %v1327, 2
      %v1356 = vrot.slane %v1135, 2
      %v1357 = vsel %vm602, %v1355, %v1356
      %v1358 = vrot.slane %v1328, 2
      %v1359 = vrot.slane %v1137, 2
      %v1360 = vsel %vm602, %v1358, %v1359
      %s1361 = scalar_lea.vmem %s1, 96
      %v1362 = vld [vmem:[%s1361] sm:$0xff]
      %v1363 = vld [vmem:[%s1361 + $0x8] sm:$0xf]
      %v1364 = vsel %vm328, %v1339, 0
      %v1366 = vsel %vm328, %v1342, 0
      %v1368 = vsel %vm328, %v1345, 0
      %v1370 = vsel %vm328, %v1348, 0
      %v1372 = vsel %vm328, %v1351, 0
      %v1374 = vsel %vm328, %v1354, 0
      %v1376 = vsel %vm328, %v1357, 0
      %v1378 = vsel %vm328, %v1360, 0
      %v1381 = vsel %vm345, %v1363, 0
      %1383 = vmatprep.subr.mxu0 0.0
      %1384 = vmatpush1.msra.mxu0 %v1362
      %1385 = vmatprep.subr.mxu0 0.0
      %1386 = vmatpush1.msra.mxu0 %v1381
      %1387 = vmatprep.subr.mxu0 0.0
      %1388 = vmatpush1.msra.mxu0 0.0
      %1389 = vmatprep.subr.mxu0 0.0
      %1390 = vmatpush1.msra.mxu0 0.0
      %1391 = vmatprep.subr.mxu0 0.0
      %1392 = vmatpush1.msra.mxu0 0.0
      %1393 = vmatprep.subr.mxu0 0.0
      %1394 = vmatpush1.msra.mxu0 0.0
      %1395 = vmatprep.subr.mxu0 0.0
      %1396 = vmatpush1.msra.mxu0 0.0
      %1397 = vmatprep.subr.mxu0 0.0
      %1398 = vmatpush1.msra.mxu0 0.0
      %1399 = vmatprep.subr.mxu0 0.0
      %1400 = vmatpush1.msra.mxu0 0.0
      %1401 = vmatprep.subr.mxu0 0.0
      %1402 = vmatpush1.msra.mxu0 0.0
      %1403 = vmatprep.subr.mxu0 0.0
      %1404 = vmatpush1.msra.mxu0 0.0
      %1405 = vmatprep.subr.mxu0 0.0
      %1406 = vmatpush1.msra.mxu0 0.0
      %1407 = vmatprep.subr.mxu0 0.0
      %1408 = vmatpush1.msra.mxu0 0.0
      %1409 = vmatprep.subr.mxu0 0.0
      %1410 = vmatpush1.msra.mxu0 0.0
      %1411 = vmatprep.subr.mxu0 0.0
      %1412 = vmatpush1.msra.mxu0 0.0
      %1413 = vmatprep.subr.mxu0 0.0
      %1414 = vmatpush1.msra.mxu0 0.0
      %1415 = vmatprep.subr.mxu0 0.0
      %1416 = vmatpush1.msra.mxu0 0.0
      %1417 = vmatprep.subr.mxu0 0.0
      %1418 = vmatpush1.msra.mxu0 0.0
      %1419 = vmatprep.subr.mxu0 0.0
      %1420 = vmatpush1.msra.mxu0 0.0
      %1421 = vmatprep.subr.mxu0 0.0
      %1422 = vmatpush1.msra.mxu0 0.0
      %1423 = vmatprep.subr.mxu0 0.0
      %1424 = vmatpush1.msra.mxu0 0.0
      %1425 = vmatprep.subr.mxu0 0.0
      %1426 = vmatpush1.msra.mxu0 0.0
      %1427 = vmatprep.subr.mxu0 0.0
      %1428 = vmatpush1.msra.mxu0 0.0
      %1429 = vmatprep.subr.mxu0 0.0
      %1430 = vmatpush1.msra.mxu0 0.0
      %1431 = vmatprep.subr.mxu0 0.0
      %1432 = vmatpush1.msra.mxu0 0.0
      %1433 = vmatprep.subr.mxu0 0.0
      %1434 = vmatpush1.msra.mxu0 0.0
      %1435 = vmatprep.subr.mxu0 0.0
      %1436 = vmatpush1.msra.mxu0 0.0
      %1437 = vmatprep.subr.mxu0 0.0
      %1438 = vmatpush1.msra.mxu0 0.0
      %1439 = vmatprep.subr.mxu0 0.0
      %1440 = vmatpush1.msra.mxu0 0.0
      %1441 = vmatprep.subr.mxu0 0.0
      %1442 = vmatpush1.msra.mxu0 0.0
      %1443 = vmatprep.subr.mxu0 0.0
      %1444 = vmatpush1.msra.mxu0 0.0
      %1445 = vmatprep.subr.mxu0 0.0
      %1446 = vmatpush1.msra.mxu0 0.0
      %1447 = vmatprep.mubr.f32.mxu0 0.0
      %1448 = vmatmul.mubr.f32.gmra.mrb[0].mxu0 %v1364
      %v1449 = vpop.f32.mrb[0].mxu0
      %v1450 = vadd.f32 0.0, %v1449
      %v1451 = vpop.f32.mrb[0].mxu0
      %1452 = vmatprep.mubr.f32.mxu0 0.0
      %1453 = vmatmul.mubr.f32.gmra.mrb[0].mxu0 %v1366
      %v1454 = vpop.f32.mrb[0].mxu0
      %v1455 = vadd.f32 0.0, %v1454
      %v1456 = vpop.f32.mrb[0].mxu0
      %1457 = vmatprep.mubr.f32.mxu0 0.0
      %1458 = vmatmul.mubr.f32.gmra.mrb[0].mxu0 %v1368
      %v1459 = vpop.f32.mrb[0].mxu0
      %v1460 = vadd.f32 0.0, %v1459
      %v1461 = vpop.f32.mrb[0].mxu0
      %1462 = vmatprep.mubr.f32.mxu0 0.0
      %1463 = vmatmul.mubr.f32.gmra.mrb[0].mxu0 %v1370
      %v1464 = vpop.f32.mrb[0].mxu0
      %v1465 = vadd.f32 0.0, %v1464
      %v1466 = vpop.f32.mrb[0].mxu0
      %1467 = vmatprep.mubr.f32.mxu0 0.0
      %1468 = vmatmul.mubr.f32.gmra.mrb[0].mxu0 %v1372
      %v1469 = vpop.f32.mrb[0].mxu0
      %v1470 = vadd.f32 0.0, %v1469
      %v1471 = vpop.f32.mrb[0].mxu0
      %1472 = vmatprep.mubr.f32.mxu0 0.0
      %1473 = vmatmul.mubr.f32.gmra.mrb[0].mxu0 %v1374
      %v1474 = vpop.f32.mrb[0].mxu0
      %v1475 = vadd.f32 0.0, %v1474
      %v1476 = vpop.f32.mrb[0].mxu0
      %1477 = vmatprep.mubr.f32.mxu0 0.0
      %1478 = vmatmul.mubr.f32.gmra.mrb[0].mxu0 %v1376
      %v1479 = vpop.f32.mrb[0].mxu0
      %v1480 = vadd.f32 0.0, %v1479
      %v1481 = vpop.f32.mrb[0].mxu0
      %1482 = vmatprep.mubr.f32.mxu0 0.0
      %1483 = vmatmul.mubr.f32.gmra.mrb[0].mxu0 %v1378
      %v1484 = vpop.f32.mrb[0].mxu0
      %v1485 = vadd.f32 0.0, %v1484
      %v1486 = vpop.f32.mrb[0].mxu0
      %1487 = vdwg.mxu0
      %v1488 = vadd.f32 %v1305, %v1450
      %v1489 = vadd.f32 %v1306, %v1455
      %v1490 = vadd.f32 %v1307, %v1460
      %v1491 = vadd.f32 %v1308, %v1465
      %v1492 = vadd.f32 %v1309, %v1470
      %v1493 = vadd.f32 %v1310, %v1475
      %v1494 = vadd.f32 %v1311, %v1480
      %v1495 = vadd.f32 %v1312, %v1485
      %v1496 = vld [vmem:[%s946 + $0x4] sm:$0x3]
      %v1497 = vld [vmem:[%s946 + $0xc] sm:$0x3]
      %v1498 = vld [vmem:[%s946 + $0x14] sm:$0x3]
      %v1499 = vld [vmem:[%s946 + $0x1c] sm:$0x3]
      %v1500 = vld [vmem:[%s946 + $0x24] sm:$0x3]
      %v1501 = vld [vmem:[%s946 + $0x2c] sm:$0x3]
      %v1502 = vld [vmem:[%s946 + $0x34] sm:$0x3]
      %v1503 = vld [vmem:[%s946 + $0x3c] sm:$0x3]
      %v1504 = vunpack.c.l.bf16 %v1496
      %v1505 = vunpack.c.l.bf16 %v1497
      %v1506 = vunpack.c.l.bf16 %v1498
      %v1507 = vunpack.c.l.bf16 %v1499
      %v1508 = vunpack.c.l.bf16 %v1500
      %v1509 = vunpack.c.l.bf16 %v1501
      %v1510 = vunpack.c.l.bf16 %v1502
      %v1511 = vunpack.c.l.bf16 %v1503
      %v1520 = vrot.slane %v1321, 3
      %v1521 = vrot.slane %v1504, 3
      %v1522 = vsel %vm786, %v1520, %v1521
      %v1523 = vrot.slane %v1322, 3
      %v1524 = vrot.slane %v1505, 3
      %v1525 = vsel %vm786, %v1523, %v1524
      %v1526 = vrot.slane %v1323, 3
      %v1527 = vrot.slane %v1506, 3
      %v1528 = vsel %vm786, %v1526, %v1527
      %v1529 = vrot.slane %v1324, 3
      %v1530 = vrot.slane %v1507, 3
      %v1531 = vsel %vm786, %v1529, %v1530
      %v1532 = vrot.slane %v1325, 3
      %v1533 = vrot.slane %v1508, 3
      %v1534 = vsel %vm786, %v1532, %v1533
      %v1535 = vrot.slane %v1326, 3
      %v1536 = vrot.slane %v1509, 3
      %v1537 = vsel %vm786, %v1535, %v1536
      %v1538 = vrot.slane %v1327, 3
      %v1539 = vrot.slane %v1510, 3
      %v1540 = vsel %vm786, %v1538, %v1539
      %v1541 = vrot.slane %v1328, 3
      %v1542 = vrot.slane %v1511, 3
      %v1543 = vsel %vm786, %v1541, %v1542
      %s1544 = scalar_lea.vmem %s1, 112
      %v1545 = vld [vmem:[%s1544] sm:$0xff]
      %v1546 = vld [vmem:[%s1544 + $0x8] sm:$0xf]
      %v1547 = vsel %vm328, %v1522, 0
      %v1549 = vsel %vm328, %v1525, 0
      %v1551 = vsel %vm328, %v1528, 0
      %v1553 = vsel %vm328, %v1531, 0
      %v1555 = vsel %vm328, %v1534, 0
      %v1557 = vsel %vm328, %v1537, 0
      %v1559 = vsel %vm328, %v1540, 0
      %v1561 = vsel %vm328, %v1543, 0
      %v1564 = vsel %vm345, %v1546, 0
      %1566 = vmatprep.subr.mxu0 0.0
      %1567 = vmatpush1.msra.mxu0 %v1545
      %1568 = vmatprep.subr.mxu0 0.0
      %1569 = vmatpush1.msra.mxu0 %v1564
      %1570 = vmatprep.subr.mxu0 0.0
      %1571 = vmatpush1.msra.mxu0 0.0
      %1572 = vmatprep.subr.mxu0 0.0
      %1573 = vmatpush1.msra.mxu0 0.0
      %1574 = vmatprep.subr.mxu0 0.0
      %1575 = vmatpush1.msra.mxu0 0.0
      %1576 = vmatprep.subr.mxu0 0.0
      %1577 = vmatpush1.msra.mxu0 0.0
      %1578 = vmatprep.subr.mxu0 0.0
      %1579 = vmatpush1.msra.mxu0 0.0
      %1580 = vmatprep.subr.mxu0 0.0
      %1581 = vmatpush1.msra.mxu0 0.0
      %1582 = vmatprep.subr.mxu0 0.0
      %1583 = vmatpush1.msra.mxu0 0.0
      %1584 = vmatprep.subr.mxu0 0.0
      %1585 = vmatpush1.msra.mxu0 0.0
      %1586 = vmatprep.subr.mxu0 0.0
      %1587 = vmatpush1.msra.mxu0 0.0
      %1588 = vmatprep.subr.mxu0 0.0
      %1589 = vmatpush1.msra.mxu0 0.0
      %1590 = vmatprep.subr.mxu0 0.0
      %1591 = vmatpush1.msra.mxu0 0.0
      %1592 = vmatprep.subr.mxu0 0.0
      %1593 = vmatpush1.msra.mxu0 0.0
      %1594 = vmatprep.subr.mxu0 0.0
      %1595 = vmatpush1.msra.mxu0 0.0
      %1596 = vmatprep.subr.mxu0 0.0
      %1597 = vmatpush1.msra.mxu0 0.0
      %1598 = vmatprep.subr.mxu0 0.0
      %1599 = vmatpush1.msra.mxu0 0.0
      %1600 = vmatprep.subr.mxu0 0.0
      %1601 = vmatpush1.msra.mxu0 0.0
      %1602 = vmatprep.subr.mxu0 0.0
      %1603 = vmatpush1.msra.mxu0 0.0
      %1604 = vmatprep.subr.mxu0 0.0
      %1605 = vmatpush1.msra.mxu0 0.0
      %1606 = vmatprep.subr.mxu0 0.0
      %1607 = vmatpush1.msra.mxu0 0.0
      %1608 = vmatprep.subr.mxu0 0.0
      %1609 = vmatpush1.msra.mxu0 0.0
      %1610 = vmatprep.subr.mxu0 0.0
      %1611 = vmatpush1.msra.mxu0 0.0
      %1612 = vmatprep.subr.mxu0 0.0
      %1613 = vmatpush1.msra.mxu0 0.0
      %1614 = vmatprep.subr.mxu0 0.0
      %1615 = vmatpush1.msra.mxu0 0.0
      %1616 = vmatprep.subr.mxu0 0.0
      %1617 = vmatpush1.msra.mxu0 0.0
      %1618 = vmatprep.subr.mxu0 0.0
      %1619 = vmatpush1.msra.mxu0 0.0
      %1620 = vmatprep.subr.mxu0 0.0
      %1621 = vmatpush1.msra.mxu0 0.0
      %1622 = vmatprep.subr.mxu0 0.0
      %1623 = vmatpush1.msra.mxu0 0.0
      %1624 = vmatprep.subr.mxu0 0.0
      %1625 = vmatpush1.msra.mxu0 0.0
      %1626 = vmatprep.subr.mxu0 0.0
      %1627 = vmatpush1.msra.mxu0 0.0
      %1628 = vmatprep.subr.mxu0 0.0
      %1629 = vmatpush1.msra.mxu0 0.0
      %1630 = vmatprep.mubr.f32.mxu0 0.0
      %1631 = vmatmul.mubr.f32.gmra.mrb[0].mxu0 %v1547
      %v1632 = vpop.f32.mrb[0].mxu0
      %v1633 = vadd.f32 0.0, %v1632
      %v1634 = vpop.f32.mrb[0].mxu0
      %1635 = vmatprep.mubr.f32.mxu0 0.0
      %1636 = vmatmul.mubr.f32.gmra.mrb[0].mxu0 %v1549
      %v1637 = vpop.f32.mrb[0].mxu0
      %v1638 = vadd.f32 0.0, %v1637
      %v1639 = vpop.f32.mrb[0].mxu0
      %1640 = vmatprep.mubr.f32.mxu0 0.0
      %1641 = vmatmul.mubr.f32.gmra.mrb[0].mxu0 %v1551
      %v1642 = vpop.f32.mrb[0].mxu0
      %v1643 = vadd.f32 0.0, %v1642
      %v1644 = vpop.f32.mrb[0].mxu0
      %1645 = vmatprep.mubr.f32.mxu0 0.0
      %1646 = vmatmul.mubr.f32.gmra.mrb[0].mxu0 %v1553
      %v1647 = vpop.f32.mrb[0].mxu0
      %v1648 = vadd.f32 0.0, %v1647
      %v1649 = vpop.f32.mrb[0].mxu0
      %1650 = vmatprep.mubr.f32.mxu0 0.0
      %1651 = vmatmul.mubr.f32.gmra.mrb[0].mxu0 %v1555
      %v1652 = vpop.f32.mrb[0].mxu0
      %v1653 = vadd.f32 0.0, %v1652
      %v1654 = vpop.f32.mrb[0].mxu0
      %1655 = vmatprep.mubr.f32.mxu0 0.0
      %1656 = vmatmul.mubr.f32.gmra.mrb[0].mxu0 %v1557
      %v1657 = vpop.f32.mrb[0].mxu0
      %v1658 = vadd.f32 0.0, %v1657
      %v1659 = vpop.f32.mrb[0].mxu0
      %1660 = vmatprep.mubr.f32.mxu0 0.0
      %1661 = vmatmul.mubr.f32.gmra.mrb[0].mxu0 %v1559
      %v1662 = vpop.f32.mrb[0].mxu0
      %v1663 = vadd.f32 0.0, %v1662
      %v1664 = vpop.f32.mrb[0].mxu0
      %1665 = vmatprep.mubr.f32.mxu0 0.0
      %1666 = vmatmul.mubr.f32.gmra.mrb[0].mxu0 %v1561
      %v1667 = vpop.f32.mrb[0].mxu0
      %v1668 = vadd.f32 0.0, %v1667
      %v1669 = vpop.f32.mrb[0].mxu0
      %1670 = vdwg.mxu0
      %v1671 = vadd.f32 %v1488, %v1633
      %v1672 = vadd.f32 %v1489, %v1638
      %v1673 = vadd.f32 %v1490, %v1643
      %v1674 = vadd.f32 %v1491, %v1648
      %v1675 = vadd.f32 %v1492, %v1653
      %v1676 = vadd.f32 %v1493, %v1658
      %v1677 = vadd.f32 %v1494, %v1663
      %v1678 = vadd.f32 %v1495, %v1668
      %s1679 = scalar_lea.vmem %s244, 16
      %v1680 = vld [vmem:[%s1679] sm:$0xf]
      %v1681 = vld [vmem:[%s1679 + $0x8] sm:$0xf]
      %v1682 = vld [vmem:[%s1679 + $0x10] sm:$0xf]
      %v1683 = vld [vmem:[%s1679 + $0x18] sm:$0xf]
      %v1684 = vld [vmem:[%s1679 + $0x20] sm:$0xf]
      %v1685 = vld [vmem:[%s1679 + $0x28] sm:$0xf]
      %v1686 = vld [vmem:[%s1679 + $0x30] sm:$0xf]
      %v1687 = vld [vmem:[%s1679 + $0x38] sm:$0xf]
      %v1688 = vunpack.c.l.bf16 %v1680
      %v1689 = vunpack.c.l.bf16 %v1681
      %v1690 = vunpack.c.l.bf16 %v1682
      %v1691 = vunpack.c.l.bf16 %v1683
      %v1692 = vunpack.c.l.bf16 %v1684
      %v1693 = vunpack.c.l.bf16 %v1685
      %v1694 = vunpack.c.l.bf16 %v1686
      %v1695 = vunpack.c.l.bf16 %v1687
      %s1696 = scalar_lea.vmem %s1, 128
      %v1697 = vld [vmem:[%s1696] sm:$0xff]
      %v1698 = vld [vmem:[%s1696 + $0x8] sm:$0xf]
      %v1700 = vsel %vm328, %v1688, 0
      %v1703 = vsel %vm328, %v1689, 0
      %v1706 = vsel %vm328, %v1690, 0
      %v1709 = vsel %vm328, %v1691, 0
      %v1712 = vsel %vm328, %v1692, 0
      %v1715 = vsel %vm328, %v1693, 0
      %v1718 = vsel %vm328, %v1694, 0
      %v1721 = vsel %vm328, %v1695, 0
      %v1724 = vsel %vm345, %v1698, 0
      %1726 = vmatprep.subr.mxu0 0.0
      %1727 = vmatpush1.msra.mxu0 %v1697
      %1728 = vmatprep.subr.mxu0 0.0
      %1729 = vmatpush1.msra.mxu0 %v1724
      %1730 = vmatprep.subr.mxu0 0.0
      %1731 = vmatpush1.msra.mxu0 0.0
      %1732 = vmatprep.subr.mxu0 0.0
      %1733 = vmatpush1.msra.mxu0 0.0
      %1734 = vmatprep.subr.mxu0 0.0
      %1735 = vmatpush1.msra.mxu0 0.0
      %1736 = vmatprep.subr.mxu0 0.0
      %1737 = vmatpush1.msra.mxu0 0.0
      %1738 = vmatprep.subr.mxu0 0.0
      %1739 = vmatpush1.msra.mxu0 0.0
      %1740 = vmatprep.subr.mxu0 0.0
      %1741 = vmatpush1.msra.mxu0 0.0
      %1742 = vmatprep.subr.mxu0 0.0
      %1743 = vmatpush1.msra.mxu0 0.0
      %1744 = vmatprep.subr.mxu0 0.0
      %1745 = vmatpush1.msra.mxu0 0.0
      %1746 = vmatprep.subr.mxu0 0.0
      %1747 = vmatpush1.msra.mxu0 0.0
      %1748 = vmatprep.subr.mxu0 0.0
      %1749 = vmatpush1.msra.mxu0 0.0
      %1750 = vmatprep.subr.mxu0 0.0
      %1751 = vmatpush1.msra.mxu0 0.0
      %1752 = vmatprep.subr.mxu0 0.0
      %1753 = vmatpush1.msra.mxu0 0.0
      %1754 = vmatprep.subr.mxu0 0.0
      %1755 = vmatpush1.msra.mxu0 0.0
      %1756 = vmatprep.subr.mxu0 0.0
      %1757 = vmatpush1.msra.mxu0 0.0
      %1758 = vmatprep.subr.mxu0 0.0
      %1759 = vmatpush1.msra.mxu0 0.0
      %1760 = vmatprep.subr.mxu0 0.0
      %1761 = vmatpush1.msra.mxu0 0.0
      %1762 = vmatprep.subr.mxu0 0.0
      %1763 = vmatpush1.msra.mxu0 0.0
      %1764 = vmatprep.subr.mxu0 0.0
      %1765 = vmatpush1.msra.mxu0 0.0
      %1766 = vmatprep.subr.mxu0 0.0
      %1767 = vmatpush1.msra.mxu0 0.0
      %1768 = vmatprep.subr.mxu0 0.0
      %1769 = vmatpush1.msra.mxu0 0.0
      %1770 = vmatprep.subr.mxu0 0.0
      %1771 = vmatpush1.msra.mxu0 0.0
      %1772 = vmatprep.subr.mxu0 0.0
      %1773 = vmatpush1.msra.mxu0 0.0
      %1774 = vmatprep.subr.mxu0 0.0
      %1775 = vmatpush1.msra.mxu0 0.0
      %1776 = vmatprep.subr.mxu0 0.0
      %1777 = vmatpush1.msra.mxu0 0.0
      %1778 = vmatprep.subr.mxu0 0.0
      %1779 = vmatpush1.msra.mxu0 0.0
      %1780 = vmatprep.subr.mxu0 0.0
      %1781 = vmatpush1.msra.mxu0 0.0
      %1782 = vmatprep.subr.mxu0 0.0
      %1783 = vmatpush1.msra.mxu0 0.0
      %1784 = vmatprep.subr.mxu0 0.0
      %1785 = vmatpush1.msra.mxu0 0.0
      %1786 = vmatprep.subr.mxu0 0.0
      %1787 = vmatpush1.msra.mxu0 0.0
      %1788 = vmatprep.subr.mxu0 0.0
      %1789 = vmatpush1.msra.mxu0 0.0
      %1790 = vmatprep.mubr.f32.mxu0 0.0
      %1791 = vmatmul.mubr.f32.gmra.mrb[0].mxu0 %v1700
      %v1792 = vpop.f32.mrb[0].mxu0
      %v1793 = vadd.f32 0.0, %v1792
      %v1794 = vpop.f32.mrb[0].mxu0
      %1795 = vmatprep.mubr.f32.mxu0 0.0
      %1796 = vmatmul.mubr.f32.gmra.mrb[0].mxu0 %v1703
      %v1797 = vpop.f32.mrb[0].mxu0
      %v1798 = vadd.f32 0.0, %v1797
      %v1799 = vpop.f32.mrb[0].mxu0
      %1800 = vmatprep.mubr.f32.mxu0 0.0
      %1801 = vmatmul.mubr.f32.gmra.mrb[0].mxu0 %v1706
      %v1802 = vpop.f32.mrb[0].mxu0
      %v1803 = vadd.f32 0.0, %v1802
      %v1804 = vpop.f32.mrb[0].mxu0
      %1805 = vmatprep.mubr.f32.mxu0 0.0
      %1806 = vmatmul.mubr.f32.gmra.mrb[0].mxu0 %v1709
      %v1807 = vpop.f32.mrb[0].mxu0
      %v1808 = vadd.f32 0.0, %v1807
      %v1809 = vpop.f32.mrb[0].mxu0
      %1810 = vmatprep.mubr.f32.mxu0 0.0
      %1811 = vmatmul.mubr.f32.gmra.mrb[0].mxu0 %v1712
      %v1812 = vpop.f32.mrb[0].mxu0
      %v1813 = vadd.f32 0.0, %v1812
      %v1814 = vpop.f32.mrb[0].mxu0
      %1815 = vmatprep.mubr.f32.mxu0 0.0
      %1816 = vmatmul.mubr.f32.gmra.mrb[0].mxu0 %v1715
      %v1817 = vpop.f32.mrb[0].mxu0
      %v1818 = vadd.f32 0.0, %v1817
      %v1819 = vpop.f32.mrb[0].mxu0
      %1820 = vmatprep.mubr.f32.mxu0 0.0
      %1821 = vmatmul.mubr.f32.gmra.mrb[0].mxu0 %v1718
      %v1822 = vpop.f32.mrb[0].mxu0
      %v1823 = vadd.f32 0.0, %v1822
      %v1824 = vpop.f32.mrb[0].mxu0
      %1825 = vmatprep.mubr.f32.mxu0 0.0
      %1826 = vmatmul.mubr.f32.gmra.mrb[0].mxu0 %v1721
      %v1827 = vpop.f32.mrb[0].mxu0
      %v1828 = vadd.f32 0.0, %v1827
      %v1829 = vpop.f32.mrb[0].mxu0
      %1830 = vdwg.mxu0
      %v1831 = vadd.f32 %v1671, %v1793
      %v1832 = vadd.f32 %v1672, %v1798
      %v1833 = vadd.f32 %v1673, %v1803
      %v1834 = vadd.f32 %v1674, %v1808
      %v1835 = vadd.f32 %v1675, %v1813
      %v1836 = vadd.f32 %v1676, %v1818
      %v1837 = vadd.f32 %v1677, %v1823
      %v1838 = vadd.f32 %v1678, %v1828
      %v1839 = vld [vmem:[%s1679] sm:$0xf]
      %v1840 = vld [vmem:[%s1679 + $0x4] sm:$0x1]
      %v1841 = vld [vmem:[%s1679 + $0x8] sm:$0xf]
      %v1842 = vld [vmem:[%s1679 + $0xc] sm:$0x1]
      %v1843 = vld [vmem:[%s1679 + $0x10] sm:$0xf]
      %v1844 = vld [vmem:[%s1679 + $0x14] sm:$0x1]
      %v1845 = vld [vmem:[%s1679 + $0x18] sm:$0xf]
      %v1846 = vld [vmem:[%s1679 + $0x1c] sm:$0x1]
      %v1847 = vld [vmem:[%s1679 + $0x20] sm:$0xf]
      %v1848 = vld [vmem:[%s1679 + $0x24] sm:$0x1]
      %v1849 = vld [vmem:[%s1679 + $0x28] sm:$0xf]
      %v1850 = vld [vmem:[%s1679 + $0x2c] sm:$0x1]
      %v1851 = vld [vmem:[%s1679 + $0x30] sm:$0xf]
      %v1852 = vld [vmem:[%s1679 + $0x34] sm:$0x1]
      %v1853 = vld [vmem:[%s1679 + $0x38] sm:$0xf]
      %v1854 = vld [vmem:[%s1679 + $0x3c] sm:$0x1]
      %v1855 = vunpack.c.l.bf16 %v1839
      %v1856 = vunpack.c.l.bf16 %v1840
      %v1857 = vunpack.c.l.bf16 %v1841
      %v1858 = vunpack.c.l.bf16 %v1842
      %v1859 = vunpack.c.l.bf16 %v1843
      %v1860 = vunpack.c.l.bf16 %v1844
      %v1861 = vunpack.c.l.bf16 %v1845
      %v1862 = vunpack.c.l.bf16 %v1846
      %v1863 = vunpack.c.l.bf16 %v1847
      %v1864 = vunpack.c.l.bf16 %v1848
      %v1865 = vunpack.c.l.bf16 %v1849
      %v1866 = vunpack.c.l.bf16 %v1850
      %v1867 = vunpack.c.l.bf16 %v1851
      %v1868 = vunpack.c.l.bf16 %v1852
      %v1869 = vunpack.c.l.bf16 %v1853
      %v1870 = vunpack.c.l.bf16 %v1854
      %v1887 = vrot.slane %v1855, 1
      %v1888 = vrot.slane %v1856, 1
      %v1889 = vsel %vm300, %v1887, %v1888
      %v1890 = vrot.slane %v1857, 1
      %v1891 = vrot.slane %v1858, 1
      %v1892 = vsel %vm300, %v1890, %v1891
      %v1893 = vrot.slane %v1859, 1
      %v1894 = vrot.slane %v1860, 1
      %v1895 = vsel %vm300, %v1893, %v1894
      %v1896 = vrot.slane %v1861, 1
      %v1897 = vrot.slane %v1862, 1
      %v1898 = vsel %vm300, %v1896, %v1897
      %v1899 = vrot.slane %v1863, 1
      %v1900 = vrot.slane %v1864, 1
      %v1901 = vsel %vm300, %v1899, %v1900
      %v1902 = vrot.slane %v1865, 1
      %v1903 = vrot.slane %v1866, 1
      %v1904 = vsel %vm300, %v1902, %v1903
      %v1905 = vrot.slane %v1867, 1
      %v1906 = vrot.slane %v1868, 1
      %v1907 = vsel %vm300, %v1905, %v1906
      %v1908 = vrot.slane %v1869, 1
      %v1909 = vrot.slane %v1870, 1
      %v1910 = vsel %vm300, %v1908, %v1909
      %s1911 = scalar_lea.vmem %s1, 144
      %v1912 = vld [vmem:[%s1911] sm:$0xff]
      %v1913 = vld [vmem:[%s1911 + $0x8] sm:$0xf]
      %v1914 = vsel %vm328, %v1889, 0
      %v1916 = vsel %vm328, %v1892, 0
      %v1918 = vsel %vm328, %v1895, 0
      %v1920 = vsel %vm328, %v1898, 0
      %v1922 = vsel %vm328, %v1901, 0
      %v1924 = vsel %vm328, %v1904, 0
      %v1926 = vsel %vm328, %v1907, 0
      %v1928 = vsel %vm328, %v1910, 0
      %v1931 = vsel %vm345, %v1913, 0
      %1933 = vmatprep.subr.mxu0 0.0
      %1934 = vmatpush1.msra.mxu0 %v1912
      %1935 = vmatprep.subr.mxu0 0.0
      %1936 = vmatpush1.msra.mxu0 %v1931
      %1937 = vmatprep.subr.mxu0 0.0
      %1938 = vmatpush1.msra.mxu0 0.0
      %1939 = vmatprep.subr.mxu0 0.0
      %1940 = vmatpush1.msra.mxu0 0.0
      %1941 = vmatprep.subr.mxu0 0.0
      %1942 = vmatpush1.msra.mxu0 0.0
      %1943 = vmatprep.subr.mxu0 0.0
      %1944 = vmatpush1.msra.mxu0 0.0
      %1945 = vmatprep.subr.mxu0 0.0
      %1946 = vmatpush1.msra.mxu0 0.0
      %1947 = vmatprep.subr.mxu0 0.0
      %1948 = vmatpush1.msra.mxu0 0.0
      %1949 = vmatprep.subr.mxu0 0.0
      %1950 = vmatpush1.msra.mxu0 0.0
      %1951 = vmatprep.subr.mxu0 0.0
      %1952 = vmatpush1.msra.mxu0 0.0
      %1953 = vmatprep.subr.mxu0 0.0
      %1954 = vmatpush1.msra.mxu0 0.0
      %1955 = vmatprep.subr.mxu0 0.0
      %1956 = vmatpush1.msra.mxu0 0.0
      %1957 = vmatprep.subr.mxu0 0.0
      %1958 = vmatpush1.msra.mxu0 0.0
      %1959 = vmatprep.subr.mxu0 0.0
      %1960 = vmatpush1.msra.mxu0 0.0
      %1961 = vmatprep.subr.mxu0 0.0
      %1962 = vmatpush1.msra.mxu0 0.0
      %1963 = vmatprep.subr.mxu0 0.0
      %1964 = vmatpush1.msra.mxu0 0.0
      %1965 = vmatprep.subr.mxu0 0.0
      %1966 = vmatpush1.msra.mxu0 0.0
      %1967 = vmatprep.subr.mxu0 0.0
      %1968 = vmatpush1.msra.mxu0 0.0
      %1969 = vmatprep.subr.mxu0 0.0
      %1970 = vmatpush1.msra.mxu0 0.0
      %1971 = vmatprep.subr.mxu0 0.0
      %1972 = vmatpush1.msra.mxu0 0.0
      %1973 = vmatprep.subr.mxu0 0.0
      %1974 = vmatpush1.msra.mxu0 0.0
      %1975 = vmatprep.subr.mxu0 0.0
      %1976 = vmatpush1.msra.mxu0 0.0
      %1977 = vmatprep.subr.mxu0 0.0
      %1978 = vmatpush1.msra.mxu0 0.0
      %1979 = vmatprep.subr.mxu0 0.0
      %1980 = vmatpush1.msra.mxu0 0.0
      %1981 = vmatprep.subr.mxu0 0.0
      %1982 = vmatpush1.msra.mxu0 0.0
      %1983 = vmatprep.subr.mxu0 0.0
      %1984 = vmatpush1.msra.mxu0 0.0
      %1985 = vmatprep.subr.mxu0 0.0
      %1986 = vmatpush1.msra.mxu0 0.0
      %1987 = vmatprep.subr.mxu0 0.0
      %1988 = vmatpush1.msra.mxu0 0.0
      %1989 = vmatprep.subr.mxu0 0.0
      %1990 = vmatpush1.msra.mxu0 0.0
      %1991 = vmatprep.subr.mxu0 0.0
      %1992 = vmatpush1.msra.mxu0 0.0
      %1993 = vmatprep.subr.mxu0 0.0
      %1994 = vmatpush1.msra.mxu0 0.0
      %1995 = vmatprep.subr.mxu0 0.0
      %1996 = vmatpush1.msra.mxu0 0.0
      %1997 = vmatprep.mubr.f32.mxu0 0.0
      %1998 = vmatmul.mubr.f32.gmra.mrb[0].mxu0 %v1914
      %v1999 = vpop.f32.mrb[0].mxu0
      %v2000 = vadd.f32 0.0, %v1999
      %v2001 = vpop.f32.mrb[0].mxu0
      %2002 = vmatprep.mubr.f32.mxu0 0.0
      %2003 = vmatmul.mubr.f32.gmra.mrb[0].mxu0 %v1916
      %v2004 = vpop.f32.mrb[0].mxu0
      %v2005 = vadd.f32 0.0, %v2004
      %v2006 = vpop.f32.mrb[0].mxu0
      %2007 = vmatprep.mubr.f32.mxu0 0.0
      %2008 = vmatmul.mubr.f32.gmra.mrb[0].mxu0 %v1918
      %v2009 = vpop.f32.mrb[0].mxu0
      %v2010 = vadd.f32 0.0, %v2009
      %v2011 = vpop.f32.mrb[0].mxu0
      %2012 = vmatprep.mubr.f32.mxu0 0.0
      %2013 = vmatmul.mubr.f32.gmra.mrb[0].mxu0 %v1920
      %v2014 = vpop.f32.mrb[0].mxu0
      %v2015 = vadd.f32 0.0, %v2014
      %v2016 = vpop.f32.mrb[0].mxu0
      %2017 = vmatprep.mubr.f32.mxu0 0.0
      %2018 = vmatmul.mubr.f32.gmra.mrb[0].mxu0 %v1922
      %v2019 = vpop.f32.mrb[0].mxu0
      %v2020 = vadd.f32 0.0, %v2019
      %v2021 = vpop.f32.mrb[0].mxu0
      %2022 = vmatprep.mubr.f32.mxu0 0.0
      %2023 = vmatmul.mubr.f32.gmra.mrb[0].mxu0 %v1924
      %v2024 = vpop.f32.mrb[0].mxu0
      %v2025 = vadd.f32 0.0, %v2024
      %v2026 = vpop.f32.mrb[0].mxu0
      %2027 = vmatprep.mubr.f32.mxu0 0.0
      %2028 = vmatmul.mubr.f32.gmra.mrb[0].mxu0 %v1926
      %v2029 = vpop.f32.mrb[0].mxu0
      %v2030 = vadd.f32 0.0, %v2029
      %v2031 = vpop.f32.mrb[0].mxu0
      %2032 = vmatprep.mubr.f32.mxu0 0.0
      %2033 = vmatmul.mubr.f32.gmra.mrb[0].mxu0 %v1928
      %v2034 = vpop.f32.mrb[0].mxu0
      %v2035 = vadd.f32 0.0, %v2034
      %v2036 = vpop.f32.mrb[0].mxu0
      %2037 = vdwg.mxu0
      %v2038 = vadd.f32 %v1831, %v2000
      %v2039 = vadd.f32 %v1832, %v2005
      %v2040 = vadd.f32 %v1833, %v2010
      %v2041 = vadd.f32 %v1834, %v2015
      %v2042 = vadd.f32 %v1835, %v2020
      %v2043 = vadd.f32 %v1836, %v2025
      %v2044 = vadd.f32 %v1837, %v2030
      %v2045 = vadd.f32 %v1838, %v2035
      %v2046 = vld [vmem:[%s1679] sm:$0xe]
      %v2047 = vld [vmem:[%s1679 + $0x8] sm:$0xe]
      %v2048 = vld [vmem:[%s1679 + $0x10] sm:$0xe]
      %v2049 = vld [vmem:[%s1679 + $0x18] sm:$0xe]
      %v2050 = vld [vmem:[%s1679 + $0x20] sm:$0xe]
      %v2051 = vld [vmem:[%s1679 + $0x28] sm:$0xe]
      %v2052 = vld [vmem:[%s1679 + $0x30] sm:$0xe]
      %v2053 = vld [vmem:[%s1679 + $0x38] sm:$0xe]
      %v2054 = vunpack.c.l.bf16 %v2046
      %v2055 = vunpack.c.l.bf16 %v2047
      %v2056 = vunpack.c.l.bf16 %v2048
      %v2057 = vunpack.c.l.bf16 %v2049
      %v2058 = vunpack.c.l.bf16 %v2050
      %v2059 = vunpack.c.l.bf16 %v2051
      %v2060 = vunpack.c.l.bf16 %v2052
      %v2061 = vunpack.c.l.bf16 %v2053
      %v2070 = vrot.slane %v2054, 2
      %v2071 = vrot.slane %v1856, 2
      %v2072 = vsel %vm602, %v2070, %v2071
      %v2073 = vrot.slane %v2055, 2
      %v2074 = vrot.slane %v1858, 2
      %v2075 = vsel %vm602, %v2073, %v2074
      %v2076 = vrot.slane %v2056, 2
      %v2077 = vrot.slane %v1860, 2
      %v2078 = vsel %vm602, %v2076, %v2077
      %v2079 = vrot.slane %v2057, 2
      %v2080 = vrot.slane %v1862, 2
      %v2081 = vsel %vm602, %v2079, %v2080
      %v2082 = vrot.slane %v2058, 2
      %v2083 = vrot.slane %v1864, 2
      %v2084 = vsel %vm602, %v2082, %v2083
      %v2085 = vrot.slane %v2059, 2
      %v2086 = vrot.slane %v1866, 2
      %v2087 = vsel %vm602, %v2085, %v2086
      %v2088 = vrot.slane %v2060, 2
      %v2089 = vrot.slane %v1868, 2
      %v2090 = vsel %vm602, %v2088, %v2089
      %v2091 = vrot.slane %v2061, 2
      %v2092 = vrot.slane %v1870, 2
      %v2093 = vsel %vm602, %v2091, %v2092
      %s2094 = scalar_lea.vmem %s1, 160
      %v2095 = vld [vmem:[%s2094] sm:$0xff]
      %v2096 = vld [vmem:[%s2094 + $0x8] sm:$0xf]
      %v2097 = vsel %vm328, %v2072, 0
      %v2099 = vsel %vm328, %v2075, 0
      %v2101 = vsel %vm328, %v2078, 0
      %v2103 = vsel %vm328, %v2081, 0
      %v2105 = vsel %vm328, %v2084, 0
      %v2107 = vsel %vm328, %v2087, 0
      %v2109 = vsel %vm328, %v2090, 0
      %v2111 = vsel %vm328, %v2093, 0
      %v2114 = vsel %vm345, %v2096, 0
      %2116 = vmatprep.subr.mxu0 0.0
      %2117 = vmatpush1.msra.mxu0 %v2095
      %2118 = vmatprep.subr.mxu0 0.0
      %2119 = vmatpush1.msra.mxu0 %v2114
      %2120 = vmatprep.subr.mxu0 0.0
      %2121 = vmatpush1.msra.mxu0 0.0
      %2122 = vmatprep.subr.mxu0 0.0
      %2123 = vmatpush1.msra.mxu0 0.0
      %2124 = vmatprep.subr.mxu0 0.0
      %2125 = vmatpush1.msra.mxu0 0.0
      %2126 = vmatprep.subr.mxu0 0.0
      %2127 = vmatpush1.msra.mxu0 0.0
      %2128 = vmatprep.subr.mxu0 0.0
      %2129 = vmatpush1.msra.mxu0 0.0
      %2130 = vmatprep.subr.mxu0 0.0
      %2131 = vmatpush1.msra.mxu0 0.0
      %2132 = vmatprep.subr.mxu0 0.0
      %2133 = vmatpush1.msra.mxu0 0.0
      %2134 = vmatprep.subr.mxu0 0.0
      %2135 = vmatpush1.msra.mxu0 0.0
      %2136 = vmatprep.subr.mxu0 0.0
      %2137 = vmatpush1.msra.mxu0 0.0
      %2138 = vmatprep.subr.mxu0 0.0
      %2139 = vmatpush1.msra.mxu0 0.0
      %2140 = vmatprep.subr.mxu0 0.0
      %2141 = vmatpush1.msra.mxu0 0.0
      %2142 = vmatprep.subr.mxu0 0.0
      %2143 = vmatpush1.msra.mxu0 0.0
      %2144 = vmatprep.subr.mxu0 0.0
      %2145 = vmatpush1.msra.mxu0 0.0
      %2146 = vmatprep.subr.mxu0 0.0
      %2147 = vmatpush1.msra.mxu0 0.0
      %2148 = vmatprep.subr.mxu0 0.0
      %2149 = vmatpush1.msra.mxu0 0.0
      %2150 = vmatprep.subr.mxu0 0.0
      %2151 = vmatpush1.msra.mxu0 0.0
      %2152 = vmatprep.subr.mxu0 0.0
      %2153 = vmatpush1.msra.mxu0 0.0
      %2154 = vmatprep.subr.mxu0 0.0
      %2155 = vmatpush1.msra.mxu0 0.0
      %2156 = vmatprep.subr.mxu0 0.0
      %2157 = vmatpush1.msra.mxu0 0.0
      %2158 = vmatprep.subr.mxu0 0.0
      %2159 = vmatpush1.msra.mxu0 0.0
      %2160 = vmatprep.subr.mxu0 0.0
      %2161 = vmatpush1.msra.mxu0 0.0
      %2162 = vmatprep.subr.mxu0 0.0
      %2163 = vmatpush1.msra.mxu0 0.0
      %2164 = vmatprep.subr.mxu0 0.0
      %2165 = vmatpush1.msra.mxu0 0.0
      %2166 = vmatprep.subr.mxu0 0.0
      %2167 = vmatpush1.msra.mxu0 0.0
      %2168 = vmatprep.subr.mxu0 0.0
      %2169 = vmatpush1.msra.mxu0 0.0
      %2170 = vmatprep.subr.mxu0 0.0
      %2171 = vmatpush1.msra.mxu0 0.0
      %2172 = vmatprep.subr.mxu0 0.0
      %2173 = vmatpush1.msra.mxu0 0.0
      %2174 = vmatprep.subr.mxu0 0.0
      %2175 = vmatpush1.msra.mxu0 0.0
      %2176 = vmatprep.subr.mxu0 0.0
      %2177 = vmatpush1.msra.mxu0 0.0
      %2178 = vmatprep.subr.mxu0 0.0
      %2179 = vmatpush1.msra.mxu0 0.0
      %2180 = vmatprep.mubr.f32.mxu0 0.0
      %2181 = vmatmul.mubr.f32.gmra.mrb[0].mxu0 %v2097
      %v2182 = vpop.f32.mrb[0].mxu0
      %v2183 = vadd.f32 0.0, %v2182
      %v2184 = vpop.f32.mrb[0].mxu0
      %2185 = vmatprep.mubr.f32.mxu0 0.0
      %2186 = vmatmul.mubr.f32.gmra.mrb[0].mxu0 %v2099
      %v2187 = vpop.f32.mrb[0].mxu0
      %v2188 = vadd.f32 0.0, %v2187
      %v2189 = vpop.f32.mrb[0].mxu0
      %2190 = vmatprep.mubr.f32.mxu0 0.0
      %2191 = vmatmul.mubr.f32.gmra.mrb[0].mxu0 %v2101
      %v2192 = vpop.f32.mrb[0].mxu0
      %v2193 = vadd.f32 0.0, %v2192
      %v2194 = vpop.f32.mrb[0].mxu0
      %2195 = vmatprep.mubr.f32.mxu0 0.0
      %2196 = vmatmul.mubr.f32.gmra.mrb[0].mxu0 %v2103
      %v2197 = vpop.f32.mrb[0].mxu0
      %v2198 = vadd.f32 0.0, %v2197
      %v2199 = vpop.f32.mrb[0].mxu0
      %2200 = vmatprep.mubr.f32.mxu0 0.0
      %2201 = vmatmul.mubr.f32.gmra.mrb[0].mxu0 %v2105
      %v2202 = vpop.f32.mrb[0].mxu0
      %v2203 = vadd.f32 0.0, %v2202
      %v2204 = vpop.f32.mrb[0].mxu0
      %2205 = vmatprep.mubr.f32.mxu0 0.0
      %2206 = vmatmul.mubr.f32.gmra.mrb[0].mxu0 %v2107
      %v2207 = vpop.f32.mrb[0].mxu0
      %v2208 = vadd.f32 0.0, %v2207
      %v2209 = vpop.f32.mrb[0].mxu0
      %2210 = vmatprep.mubr.f32.mxu0 0.0
      %2211 = vmatmul.mubr.f32.gmra.mrb[0].mxu0 %v2109
      %v2212 = vpop.f32.mrb[0].mxu0
      %v2213 = vadd.f32 0.0, %v2212
      %v2214 = vpop.f32.mrb[0].mxu0
      %2215 = vmatprep.mubr.f32.mxu0 0.0
      %2216 = vmatmul.mubr.f32.gmra.mrb[0].mxu0 %v2111
      %v2217 = vpop.f32.mrb[0].mxu0
      %v2218 = vadd.f32 0.0, %v2217
      %v2219 = vpop.f32.mrb[0].mxu0
      %2220 = vdwg.mxu0
      %v2221 = vadd.f32 %v2038, %v2183
      %v2222 = vadd.f32 %v2039, %v2188
      %v2223 = vadd.f32 %v2040, %v2193
      %v2224 = vadd.f32 %v2041, %v2198
      %v2225 = vadd.f32 %v2042, %v2203
      %v2226 = vadd.f32 %v2043, %v2208
      %v2227 = vadd.f32 %v2044, %v2213
      %v2228 = vadd.f32 %v2045, %v2218
      %v2229 = vld [vmem:[%s1679 + $0x4] sm:$0x3]
      %v2230 = vld [vmem:[%s1679 + $0xc] sm:$0x3]
      %v2231 = vld [vmem:[%s1679 + $0x14] sm:$0x3]
      %v2232 = vld [vmem:[%s1679 + $0x1c] sm:$0x3]
      %v2233 = vld [vmem:[%s1679 + $0x24] sm:$0x3]
      %v2234 = vld [vmem:[%s1679 + $0x2c] sm:$0x3]
      %v2235 = vld [vmem:[%s1679 + $0x34] sm:$0x3]
      %v2236 = vld [vmem:[%s1679 + $0x3c] sm:$0x3]
      %v2237 = vunpack.c.l.bf16 %v2229
      %v2238 = vunpack.c.l.bf16 %v2230
      %v2239 = vunpack.c.l.bf16 %v2231
      %v2240 = vunpack.c.l.bf16 %v2232
      %v2241 = vunpack.c.l.bf16 %v2233
      %v2242 = vunpack.c.l.bf16 %v2234
      %v2243 = vunpack.c.l.bf16 %v2235
      %v2244 = vunpack.c.l.bf16 %v2236
      %v2253 = vrot.slane %v2054, 3
      %v2254 = vrot.slane %v2237, 3
      %v2255 = vsel %vm786, %v2253, %v2254
      %v2256 = vrot.slane %v2055, 3
      %v2257 = vrot.slane %v2238, 3
      %v2258 = vsel %vm786, %v2256, %v2257
      %v2259 = vrot.slane %v2056, 3
      %v2260 = vrot.slane %v2239, 3
      %v2261 = vsel %vm786, %v2259, %v2260
      %v2262 = vrot.slane %v2057, 3
      %v2263 = vrot.slane %v2240, 3
      %v2264 = vsel %vm786, %v2262, %v2263
      %v2265 = vrot.slane %v2058, 3
      %v2266 = vrot.slane %v2241, 3
      %v2267 = vsel %vm786, %v2265, %v2266
      %v2268 = vrot.slane %v2059, 3
      %v2269 = vrot.slane %v2242, 3
      %v2270 = vsel %vm786, %v2268, %v2269
      %v2271 = vrot.slane %v2060, 3
      %v2272 = vrot.slane %v2243, 3
      %v2273 = vsel %vm786, %v2271, %v2272
      %v2274 = vrot.slane %v2061, 3
      %v2275 = vrot.slane %v2244, 3
      %v2276 = vsel %vm786, %v2274, %v2275
      %s2277 = scalar_lea.vmem %s1, 176
      %v2278 = vld [vmem:[%s2277] sm:$0xff]
      %v2279 = vld [vmem:[%s2277 + $0x8] sm:$0xf]
      %v2280 = vsel %vm328, %v2255, 0
      %v2282 = vsel %vm328, %v2258, 0
      %v2284 = vsel %vm328, %v2261, 0
      %v2286 = vsel %vm328, %v2264, 0
      %v2288 = vsel %vm328, %v2267, 0
      %v2290 = vsel %vm328, %v2270, 0
      %v2292 = vsel %vm328, %v2273, 0
      %v2294 = vsel %vm328, %v2276, 0
      %v2297 = vsel %vm345, %v2279, 0
      %2299 = vmatprep.subr.mxu0 0.0
      %2300 = vmatpush1.msra.mxu0 %v2278
      %2301 = vmatprep.subr.mxu0 0.0
      %2302 = vmatpush1.msra.mxu0 %v2297
      %2303 = vmatprep.subr.mxu0 0.0
      %2304 = vmatpush1.msra.mxu0 0.0
      %2305 = vmatprep.subr.mxu0 0.0
      %2306 = vmatpush1.msra.mxu0 0.0
      %2307 = vmatprep.subr.mxu0 0.0
      %2308 = vmatpush1.msra.mxu0 0.0
      %2309 = vmatprep.subr.mxu0 0.0
      %2310 = vmatpush1.msra.mxu0 0.0
      %2311 = vmatprep.subr.mxu0 0.0
      %2312 = vmatpush1.msra.mxu0 0.0
      %2313 = vmatprep.subr.mxu0 0.0
      %2314 = vmatpush1.msra.mxu0 0.0
      %2315 = vmatprep.subr.mxu0 0.0
      %2316 = vmatpush1.msra.mxu0 0.0
      %2317 = vmatprep.subr.mxu0 0.0
      %2318 = vmatpush1.msra.mxu0 0.0
      %2319 = vmatprep.subr.mxu0 0.0
      %2320 = vmatpush1.msra.mxu0 0.0
      %2321 = vmatprep.subr.mxu0 0.0
      %2322 = vmatpush1.msra.mxu0 0.0
      %2323 = vmatprep.subr.mxu0 0.0
      %2324 = vmatpush1.msra.mxu0 0.0
      %2325 = vmatprep.subr.mxu0 0.0
      %2326 = vmatpush1.msra.mxu0 0.0
      %2327 = vmatprep.subr.mxu0 0.0
      %2328 = vmatpush1.msra.mxu0 0.0
      %2329 = vmatprep.subr.mxu0 0.0
      %2330 = vmatpush1.msra.mxu0 0.0
      %2331 = vmatprep.subr.mxu0 0.0
      %2332 = vmatpush1.msra.mxu0 0.0
      %2333 = vmatprep.subr.mxu0 0.0
      %2334 = vmatpush1.msra.mxu0 0.0
      %2335 = vmatprep.subr.mxu0 0.0
      %2336 = vmatpush1.msra.mxu0 0.0
      %2337 = vmatprep.subr.mxu0 0.0
      %2338 = vmatpush1.msra.mxu0 0.0
      %2339 = vmatprep.subr.mxu0 0.0
      %2340 = vmatpush1.msra.mxu0 0.0
      %2341 = vmatprep.subr.mxu0 0.0
      %2342 = vmatpush1.msra.mxu0 0.0
      %2343 = vmatprep.subr.mxu0 0.0
      %2344 = vmatpush1.msra.mxu0 0.0
      %2345 = vmatprep.subr.mxu0 0.0
      %2346 = vmatpush1.msra.mxu0 0.0
      %2347 = vmatprep.subr.mxu0 0.0
      %2348 = vmatpush1.msra.mxu0 0.0
      %2349 = vmatprep.subr.mxu0 0.0
      %2350 = vmatpush1.msra.mxu0 0.0
      %2351 = vmatprep.subr.mxu0 0.0
      %2352 = vmatpush1.msra.mxu0 0.0
      %2353 = vmatprep.subr.mxu0 0.0
      %2354 = vmatpush1.msra.mxu0 0.0
      %2355 = vmatprep.subr.mxu0 0.0
      %2356 = vmatpush1.msra.mxu0 0.0
      %2357 = vmatprep.subr.mxu0 0.0
      %2358 = vmatpush1.msra.mxu0 0.0
      %2359 = vmatprep.subr.mxu0 0.0
      %2360 = vmatpush1.msra.mxu0 0.0
      %2361 = vmatprep.subr.mxu0 0.0
      %2362 = vmatpush1.msra.mxu0 0.0
      %2363 = vmatprep.mubr.f32.mxu0 0.0
      %2364 = vmatmul.mubr.f32.gmra.mrb[0].mxu0 %v2280
      %v2365 = vpop.f32.mrb[0].mxu0
      %v2366 = vadd.f32 0.0, %v2365
      %v2367 = vpop.f32.mrb[0].mxu0
      %2368 = vmatprep.mubr.f32.mxu0 0.0
      %2369 = vmatmul.mubr.f32.gmra.mrb[0].mxu0 %v2282
      %v2370 = vpop.f32.mrb[0].mxu0
      %v2371 = vadd.f32 0.0, %v2370
      %v2372 = vpop.f32.mrb[0].mxu0
      %2373 = vmatprep.mubr.f32.mxu0 0.0
      %2374 = vmatmul.mubr.f32.gmra.mrb[0].mxu0 %v2284
      %v2375 = vpop.f32.mrb[0].mxu0
      %v2376 = vadd.f32 0.0, %v2375
      %v2377 = vpop.f32.mrb[0].mxu0
      %2378 = vmatprep.mubr.f32.mxu0 0.0
      %2379 = vmatmul.mubr.f32.gmra.mrb[0].mxu0 %v2286
      %v2380 = vpop.f32.mrb[0].mxu0
      %v2381 = vadd.f32 0.0, %v2380
      %v2382 = vpop.f32.mrb[0].mxu0
      %2383 = vmatprep.mubr.f32.mxu0 0.0
      %2384 = vmatmul.mubr.f32.gmra.mrb[0].mxu0 %v2288
      %v2385 = vpop.f32.mrb[0].mxu0
      %v2386 = vadd.f32 0.0, %v2385
      %v2387 = vpop.f32.mrb[0].mxu0
      %2388 = vmatprep.mubr.f32.mxu0 0.0
      %2389 = vmatmul.mubr.f32.gmra.mrb[0].mxu0 %v2290
      %v2390 = vpop.f32.mrb[0].mxu0
      %v2391 = vadd.f32 0.0, %v2390
      %v2392 = vpop.f32.mrb[0].mxu0
      %2393 = vmatprep.mubr.f32.mxu0 0.0
      %2394 = vmatmul.mubr.f32.gmra.mrb[0].mxu0 %v2292
      %v2395 = vpop.f32.mrb[0].mxu0
      %v2396 = vadd.f32 0.0, %v2395
      %v2397 = vpop.f32.mrb[0].mxu0
      %2398 = vmatprep.mubr.f32.mxu0 0.0
      %2399 = vmatmul.mubr.f32.gmra.mrb[0].mxu0 %v2294
      %v2400 = vpop.f32.mrb[0].mxu0
      %v2401 = vadd.f32 0.0, %v2400
      %v2402 = vpop.f32.mrb[0].mxu0
      %2403 = vdwg.mxu0
      %v2404 = vadd.f32 %v2221, %v2366
      %v2405 = vadd.f32 %v2222, %v2371
      %v2406 = vadd.f32 %v2223, %v2376
      %v2407 = vadd.f32 %v2224, %v2381
      %v2408 = vadd.f32 %v2225, %v2386
      %v2409 = vadd.f32 %v2226, %v2391
      %v2410 = vadd.f32 %v2227, %v2396
      %v2411 = vadd.f32 %v2228, %v2401
      %s2412 = scalar_lea.vmem %s244, 24
      %v2413 = vld [vmem:[%s2412] sm:$0xf]
      %v2414 = vld [vmem:[%s2412 + $0x8] sm:$0xf]
      %v2415 = vld [vmem:[%s2412 + $0x10] sm:$0xf]
      %v2416 = vld [vmem:[%s2412 + $0x18] sm:$0xf]
      %v2417 = vld [vmem:[%s2412 + $0x20] sm:$0xf]
      %v2418 = vld [vmem:[%s2412 + $0x28] sm:$0xf]
      %v2419 = vld [vmem:[%s2412 + $0x30] sm:$0xf]
      %v2420 = vld [vmem:[%s2412 + $0x38] sm:$0xf]
      %v2421 = vunpack.c.l.bf16 %v2413
      %v2422 = vunpack.c.l.bf16 %v2414
      %v2423 = vunpack.c.l.bf16 %v2415
      %v2424 = vunpack.c.l.bf16 %v2416
      %v2425 = vunpack.c.l.bf16 %v2417
      %v2426 = vunpack.c.l.bf16 %v2418
      %v2427 = vunpack.c.l.bf16 %v2419
      %v2428 = vunpack.c.l.bf16 %v2420
      %s2429 = scalar_lea.vmem %s1, 192
      %v2430 = vld [vmem:[%s2429] sm:$0xff]
      %v2431 = vld [vmem:[%s2429 + $0x8] sm:$0xf]
      %v2433 = vsel %vm328, %v2421, 0
      %v2436 = vsel %vm328, %v2422, 0
      %v2439 = vsel %vm328, %v2423, 0
      %v2442 = vsel %vm328, %v2424, 0
      %v2445 = vsel %vm328, %v2425, 0
      %v2448 = vsel %vm328, %v2426, 0
      %v2451 = vsel %vm328, %v2427, 0
      %v2454 = vsel %vm328, %v2428, 0
      %v2457 = vsel %vm345, %v2431, 0
      %2459 = vmatprep.subr.mxu0 0.0
      %2460 = vmatpush1.msra.mxu0 %v2430
      %2461 = vmatprep.subr.mxu0 0.0
      %2462 = vmatpush1.msra.mxu0 %v2457
      %2463 = vmatprep.subr.mxu0 0.0
      %2464 = vmatpush1.msra.mxu0 0.0
      %2465 = vmatprep.subr.mxu0 0.0
      %2466 = vmatpush1.msra.mxu0 0.0
      %2467 = vmatprep.subr.mxu0 0.0
      %2468 = vmatpush1.msra.mxu0 0.0
      %2469 = vmatprep.subr.mxu0 0.0
      %2470 = vmatpush1.msra.mxu0 0.0
      %2471 = vmatprep.subr.mxu0 0.0
      %2472 = vmatpush1.msra.mxu0 0.0
      %2473 = vmatprep.subr.mxu0 0.0
      %2474 = vmatpush1.msra.mxu0 0.0
      %2475 = vmatprep.subr.mxu0 0.0
      %2476 = vmatpush1.msra.mxu0 0.0
      %2477 = vmatprep.subr.mxu0 0.0
      %2478 = vmatpush1.msra.mxu0 0.0
      %2479 = vmatprep.subr.mxu0 0.0
      %2480 = vmatpush1.msra.mxu0 0.0
      %2481 = vmatprep.subr.mxu0 0.0
      %2482 = vmatpush1.msra.mxu0 0.0
      %2483 = vmatprep.subr.mxu0 0.0
      %2484 = vmatpush1.msra.mxu0 0.0
      %2485 = vmatprep.subr.mxu0 0.0
      %2486 = vmatpush1.msra.mxu0 0.0
      %2487 = vmatprep.subr.mxu0 0.0
      %2488 = vmatpush1.msra.mxu0 0.0
      %2489 = vmatprep.subr.mxu0 0.0
      %2490 = vmatpush1.msra.mxu0 0.0
      %2491 = vmatprep.subr.mxu0 0.0
      %2492 = vmatpush1.msra.mxu0 0.0
      %2493 = vmatprep.subr.mxu0 0.0
      %2494 = vmatpush1.msra.mxu0 0.0
      %2495 = vmatprep.subr.mxu0 0.0
      %2496 = vmatpush1.msra.mxu0 0.0
      %2497 = vmatprep.subr.mxu0 0.0
      %2498 = vmatpush1.msra.mxu0 0.0
      %2499 = vmatprep.subr.mxu0 0.0
      %2500 = vmatpush1.msra.mxu0 0.0
      %2501 = vmatprep.subr.mxu0 0.0
      %2502 = vmatpush1.msra.mxu0 0.0
      %2503 = vmatprep.subr.mxu0 0.0
      %2504 = vmatpush1.msra.mxu0 0.0
      %2505 = vmatprep.subr.mxu0 0.0
      %2506 = vmatpush1.msra.mxu0 0.0
      %2507 = vmatprep.subr.mxu0 0.0
      %2508 = vmatpush1.msra.mxu0 0.0
      %2509 = vmatprep.subr.mxu0 0.0
      %2510 = vmatpush1.msra.mxu0 0.0
      %2511 = vmatprep.subr.mxu0 0.0
      %2512 = vmatpush1.msra.mxu0 0.0
      %2513 = vmatprep.subr.mxu0 0.0
      %2514 = vmatpush1.msra.mxu0 0.0
      %2515 = vmatprep.subr.mxu0 0.0
      %2516 = vmatpush1.msra.mxu0 0.0
      %2517 = vmatprep.subr.mxu0 0.0
      %2518 = vmatpush1.msra.mxu0 0.0
      %2519 = vmatprep.subr.mxu0 0.0
      %2520 = vmatpush1.msra.mxu0 0.0
      %2521 = vmatprep.subr.mxu0 0.0
      %2522 = vmatpush1.msra.mxu0 0.0
      %2523 = vmatprep.mubr.f32.mxu0 0.0
      %2524 = vmatmul.mubr.f32.gmra.mrb[0].mxu0 %v2433
      %v2525 = vpop.f32.mrb[0].mxu0
      %v2526 = vadd.f32 0.0, %v2525
      %v2527 = vpop.f32.mrb[0].mxu0
      %2528 = vmatprep.mubr.f32.mxu0 0.0
      %2529 = vmatmul.mubr.f32.gmra.mrb[0].mxu0 %v2436
      %v2530 = vpop.f32.mrb[0].mxu0
      %v2531 = vadd.f32 0.0, %v2530
      %v2532 = vpop.f32.mrb[0].mxu0
      %2533 = vmatprep.mubr.f32.mxu0 0.0
      %2534 = vmatmul.mubr.f32.gmra.mrb[0].mxu0 %v2439
      %v2535 = vpop.f32.mrb[0].mxu0
      %v2536 = vadd.f32 0.0, %v2535
      %v2537 = vpop.f32.mrb[0].mxu0
      %2538 = vmatprep.mubr.f32.mxu0 0.0
      %2539 = vmatmul.mubr.f32.gmra.mrb[0].mxu0 %v2442
      %v2540 = vpop.f32.mrb[0].mxu0
      %v2541 = vadd.f32 0.0, %v2540
      %v2542 = vpop.f32.mrb[0].mxu0
      %2543 = vmatprep.mubr.f32.mxu0 0.0
      %2544 = vmatmul.mubr.f32.gmra.mrb[0].mxu0 %v2445
      %v2545 = vpop.f32.mrb[0].mxu0
      %v2546 = vadd.f32 0.0, %v2545
      %v2547 = vpop.f32.mrb[0].mxu0
      %2548 = vmatprep.mubr.f32.mxu0 0.0
      %2549 = vmatmul.mubr.f32.gmra.mrb[0].mxu0 %v2448
      %v2550 = vpop.f32.mrb[0].mxu0
      %v2551 = vadd.f32 0.0, %v2550
      %v2552 = vpop.f32.mrb[0].mxu0
      %2553 = vmatprep.mubr.f32.mxu0 0.0
      %2554 = vmatmul.mubr.f32.gmra.mrb[0].mxu0 %v2451
      %v2555 = vpop.f32.mrb[0].mxu0
      %v2556 = vadd.f32 0.0, %v2555
      %v2557 = vpop.f32.mrb[0].mxu0
      %2558 = vmatprep.mubr.f32.mxu0 0.0
      %2559 = vmatmul.mubr.f32.gmra.mrb[0].mxu0 %v2454
      %v2560 = vpop.f32.mrb[0].mxu0
      %v2561 = vadd.f32 0.0, %v2560
      %v2562 = vpop.f32.mrb[0].mxu0
      %2563 = vdwg.mxu0
      %v2564 = vadd.f32 %v2404, %v2526
      %v2565 = vadd.f32 %v2405, %v2531
      %v2566 = vadd.f32 %v2406, %v2536
      %v2567 = vadd.f32 %v2407, %v2541
      %v2568 = vadd.f32 %v2408, %v2546
      %v2569 = vadd.f32 %v2409, %v2551
      %v2570 = vadd.f32 %v2410, %v2556
      %v2571 = vadd.f32 %v2411, %v2561
      %v2572 = vld [vmem:[%s2412] sm:$0xf]
      %v2573 = vld [vmem:[%s2412 + $0x4] sm:$0x1]
      %v2574 = vld [vmem:[%s2412 + $0x8] sm:$0xf]
      %v2575 = vld [vmem:[%s2412 + $0xc] sm:$0x1]
      %v2576 = vld [vmem:[%s2412 + $0x10] sm:$0xf]
      %v2577 = vld [vmem:[%s2412 + $0x14] sm:$0x1]
      %v2578 = vld [vmem:[%s2412 + $0x18] sm:$0xf]
      %v2579 = vld [vmem:[%s2412 + $0x1c] sm:$0x1]
      %v2580 = vld [vmem:[%s2412 + $0x20] sm:$0xf]
      %v2581 = vld [vmem:[%s2412 + $0x24] sm:$0x1]
      %v2582 = vld [vmem:[%s2412 + $0x28] sm:$0xf]
      %v2583 = vld [vmem:[%s2412 + $0x2c] sm:$0x1]
      %v2584 = vld [vmem:[%s2412 + $0x30] sm:$0xf]
      %v2585 = vld [vmem:[%s2412 + $0x34] sm:$0x1]
      %v2586 = vld [vmem:[%s2412 + $0x38] sm:$0xf]
      %v2587 = vld [vmem:[%s2412 + $0x3c] sm:$0x1]
      %v2588 = vunpack.c.l.bf16 %v2572
      %v2589 = vunpack.c.l.bf16 %v2573
      %v2590 = vunpack.c.l.bf16 %v2574
      %v2591 = vunpack.c.l.bf16 %v2575
      %v2592 = vunpack.c.l.bf16 %v2576
      %v2593 = vunpack.c.l.bf16 %v2577
      %v2594 = vunpack.c.l.bf16 %v2578
      %v2595 = vunpack.c.l.bf16 %v2579
      %v2596 = vunpack.c.l.bf16 %v2580
      %v2597 = vunpack.c.l.bf16 %v2581
      %v2598 = vunpack.c.l.bf16 %v2582
      %v2599 = vunpack.c.l.bf16 %v2583
      %v2600 = vunpack.c.l.bf16 %v2584
      %v2601 = vunpack.c.l.bf16 %v2585
      %v2602 = vunpack.c.l.bf16 %v2586
      %v2603 = vunpack.c.l.bf16 %v2587
      %v2620 = vrot.slane %v2588, 1
      %v2621 = vrot.slane %v2589, 1
      %v2622 = vsel %vm300, %v2620, %v2621
      %v2623 = vrot.slane %v2590, 1
      %v2624 = vrot.slane %v2591, 1
      %v2625 = vsel %vm300, %v2623, %v2624
      %v2626 = vrot.slane %v2592, 1
      %v2627 = vrot.slane %v2593, 1
      %v2628 = vsel %vm300, %v2626, %v2627
      %v2629 = vrot.slane %v2594, 1
      %v2630 = vrot.slane %v2595, 1
      %v2631 = vsel %vm300, %v2629, %v2630
      %v2632 = vrot.slane %v2596, 1
      %v2633 = vrot.slane %v2597, 1
      %v2634 = vsel %vm300, %v2632, %v2633
      %v2635 = vrot.slane %v2598, 1
      %v2636 = vrot.slane %v2599, 1
      %v2637 = vsel %vm300, %v2635, %v2636
      %v2638 = vrot.slane %v2600, 1
      %v2639 = vrot.slane %v2601, 1
      %v2640 = vsel %vm300, %v2638, %v2639
      %v2641 = vrot.slane %v2602, 1
      %v2642 = vrot.slane %v2603, 1
      %v2643 = vsel %vm300, %v2641, %v2642
      %s2644 = scalar_lea.vmem %s1, 208
      %v2645 = vld [vmem:[%s2644] sm:$0xff]
      %v2646 = vld [vmem:[%s2644 + $0x8] sm:$0xf]
      %v2647 = vsel %vm328, %v2622, 0
      %v2649 = vsel %vm328, %v2625, 0
      %v2651 = vsel %vm328, %v2628, 0
      %v2653 = vsel %vm328, %v2631, 0
      %v2655 = vsel %vm328, %v2634, 0
      %v2657 = vsel %vm328, %v2637, 0
      %v2659 = vsel %vm328, %v2640, 0
      %v2661 = vsel %vm328, %v2643, 0
      %v2664 = vsel %vm345, %v2646, 0
      %2666 = vmatprep.subr.mxu0 0.0
      %2667 = vmatpush1.msra.mxu0 %v2645
      %2668 = vmatprep.subr.mxu0 0.0
      %2669 = vmatpush1.msra.mxu0 %v2664
      %2670 = vmatprep.subr.mxu0 0.0
      %2671 = vmatpush1.msra.mxu0 0.0
      %2672 = vmatprep.subr.mxu0 0.0
      %2673 = vmatpush1.msra.mxu0 0.0
      %2674 = vmatprep.subr.mxu0 0.0
      %2675 = vmatpush1.msra.mxu0 0.0
      %2676 = vmatprep.subr.mxu0 0.0
      %2677 = vmatpush1.msra.mxu0 0.0
      %2678 = vmatprep.subr.mxu0 0.0
      %2679 = vmatpush1.msra.mxu0 0.0
      %2680 = vmatprep.subr.mxu0 0.0
      %2681 = vmatpush1.msra.mxu0 0.0
      %2682 = vmatprep.subr.mxu0 0.0
      %2683 = vmatpush1.msra.mxu0 0.0
      %2684 = vmatprep.subr.mxu0 0.0
      %2685 = vmatpush1.msra.mxu0 0.0
      %2686 = vmatprep.subr.mxu0 0.0
      %2687 = vmatpush1.msra.mxu0 0.0
      %2688 = vmatprep.subr.mxu0 0.0
      %2689 = vmatpush1.msra.mxu0 0.0
      %2690 = vmatprep.subr.mxu0 0.0
      %2691 = vmatpush1.msra.mxu0 0.0
      %2692 = vmatprep.subr.mxu0 0.0
      %2693 = vmatpush1.msra.mxu0 0.0
      %2694 = vmatprep.subr.mxu0 0.0
      %2695 = vmatpush1.msra.mxu0 0.0
      %2696 = vmatprep.subr.mxu0 0.0
      %2697 = vmatpush1.msra.mxu0 0.0
      %2698 = vmatprep.subr.mxu0 0.0
      %2699 = vmatpush1.msra.mxu0 0.0
      %2700 = vmatprep.subr.mxu0 0.0
      %2701 = vmatpush1.msra.mxu0 0.0
      %2702 = vmatprep.subr.mxu0 0.0
      %2703 = vmatpush1.msra.mxu0 0.0
      %2704 = vmatprep.subr.mxu0 0.0
      %2705 = vmatpush1.msra.mxu0 0.0
      %2706 = vmatprep.subr.mxu0 0.0
      %2707 = vmatpush1.msra.mxu0 0.0
      %2708 = vmatprep.subr.mxu0 0.0
      %2709 = vmatpush1.msra.mxu0 0.0
      %2710 = vmatprep.subr.mxu0 0.0
      %2711 = vmatpush1.msra.mxu0 0.0
      %2712 = vmatprep.subr.mxu0 0.0
      %2713 = vmatpush1.msra.mxu0 0.0
      %2714 = vmatprep.subr.mxu0 0.0
      %2715 = vmatpush1.msra.mxu0 0.0
      %2716 = vmatprep.subr.mxu0 0.0
      %2717 = vmatpush1.msra.mxu0 0.0
      %2718 = vmatprep.subr.mxu0 0.0
      %2719 = vmatpush1.msra.mxu0 0.0
      %2720 = vmatprep.subr.mxu0 0.0
      %2721 = vmatpush1.msra.mxu0 0.0
      %2722 = vmatprep.subr.mxu0 0.0
      %2723 = vmatpush1.msra.mxu0 0.0
      %2724 = vmatprep.subr.mxu0 0.0
      %2725 = vmatpush1.msra.mxu0 0.0
      %2726 = vmatprep.subr.mxu0 0.0
      %2727 = vmatpush1.msra.mxu0 0.0
      %2728 = vmatprep.subr.mxu0 0.0
      %2729 = vmatpush1.msra.mxu0 0.0
      %2730 = vmatprep.mubr.f32.mxu0 0.0
      %2731 = vmatmul.mubr.f32.gmra.mrb[0].mxu0 %v2647
      %v2732 = vpop.f32.mrb[0].mxu0
      %v2733 = vadd.f32 0.0, %v2732
      %v2734 = vpop.f32.mrb[0].mxu0
      %2735 = vmatprep.mubr.f32.mxu0 0.0
      %2736 = vmatmul.mubr.f32.gmra.mrb[0].mxu0 %v2649
      %v2737 = vpop.f32.mrb[0].mxu0
      %v2738 = vadd.f32 0.0, %v2737
      %v2739 = vpop.f32.mrb[0].mxu0
      %2740 = vmatprep.mubr.f32.mxu0 0.0
      %2741 = vmatmul.mubr.f32.gmra.mrb[0].mxu0 %v2651
      %v2742 = vpop.f32.mrb[0].mxu0
      %v2743 = vadd.f32 0.0, %v2742
      %v2744 = vpop.f32.mrb[0].mxu0
      %2745 = vmatprep.mubr.f32.mxu0 0.0
      %2746 = vmatmul.mubr.f32.gmra.mrb[0].mxu0 %v2653
      %v2747 = vpop.f32.mrb[0].mxu0
      %v2748 = vadd.f32 0.0, %v2747
      %v2749 = vpop.f32.mrb[0].mxu0
      %2750 = vmatprep.mubr.f32.mxu0 0.0
      %2751 = vmatmul.mubr.f32.gmra.mrb[0].mxu0 %v2655
      %v2752 = vpop.f32.mrb[0].mxu0
      %v2753 = vadd.f32 0.0, %v2752
      %v2754 = vpop.f32.mrb[0].mxu0
      %2755 = vmatprep.mubr.f32.mxu0 0.0
      %2756 = vmatmul.mubr.f32.gmra.mrb[0].mxu0 %v2657
      %v2757 = vpop.f32.mrb[0].mxu0
      %v2758 = vadd.f32 0.0, %v2757
      %v2759 = vpop.f32.mrb[0].mxu0
      %2760 = vmatprep.mubr.f32.mxu0 0.0
      %2761 = vmatmul.mubr.f32.gmra.mrb[0].mxu0 %v2659
      %v2762 = vpop.f32.mrb[0].mxu0
      %v2763 = vadd.f32 0.0, %v2762
      %v2764 = vpop.f32.mrb[0].mxu0
      %2765 = vmatprep.mubr.f32.mxu0 0.0
      %2766 = vmatmul.mubr.f32.gmra.mrb[0].mxu0 %v2661
      %v2767 = vpop.f32.mrb[0].mxu0
      %v2768 = vadd.f32 0.0, %v2767
      %v2769 = vpop.f32.mrb[0].mxu0
      %2770 = vdwg.mxu0
      %v2771 = vadd.f32 %v2564, %v2733
      %v2772 = vadd.f32 %v2565, %v2738
      %v2773 = vadd.f32 %v2566, %v2743
      %v2774 = vadd.f32 %v2567, %v2748
      %v2775 = vadd.f32 %v2568, %v2753
      %v2776 = vadd.f32 %v2569, %v2758
      %v2777 = vadd.f32 %v2570, %v2763
      %v2778 = vadd.f32 %v2571, %v2768
      %v2779 = vld [vmem:[%s2412] sm:$0xe]
      %v2780 = vld [vmem:[%s2412 + $0x8] sm:$0xe]
      %v2781 = vld [vmem:[%s2412 + $0x10] sm:$0xe]
      %v2782 = vld [vmem:[%s2412 + $0x18] sm:$0xe]
      %v2783 = vld [vmem:[%s2412 + $0x20] sm:$0xe]
      %v2784 = vld [vmem:[%s2412 + $0x28] sm:$0xe]
      %v2785 = vld [vmem:[%s2412 + $0x30] sm:$0xe]
      %v2786 = vld [vmem:[%s2412 + $0x38] sm:$0xe]
      %v2787 = vunpack.c.l.bf16 %v2779
      %v2788 = vunpack.c.l.bf16 %v2780
      %v2789 = vunpack.c.l.bf16 %v2781
      %v2790 = vunpack.c.l.bf16 %v2782
      %v2791 = vunpack.c.l.bf16 %v2783
      %v2792 = vunpack.c.l.bf16 %v2784
      %v2793 = vunpack.c.l.bf16 %v2785
      %v2794 = vunpack.c.l.bf16 %v2786
      %v2803 = vrot.slane %v2787, 2
      %v2804 = vrot.slane %v2589, 2
      %v2805 = vsel %vm602, %v2803, %v2804
      %v2806 = vrot.slane %v2788, 2
      %v2807 = vrot.slane %v2591, 2
      %v2808 = vsel %vm602, %v2806, %v2807
      %v2809 = vrot.slane %v2789, 2
      %v2810 = vrot.slane %v2593, 2
      %v2811 = vsel %vm602, %v2809, %v2810
      %v2812 = vrot.slane %v2790, 2
      %v2813 = vrot.slane %v2595, 2
      %v2814 = vsel %vm602, %v2812, %v2813
      %v2815 = vrot.slane %v2791, 2
      %v2816 = vrot.slane %v2597, 2
      %v2817 = vsel %vm602, %v2815, %v2816
      %v2818 = vrot.slane %v2792, 2
      %v2819 = vrot.slane %v2599, 2
      %v2820 = vsel %vm602, %v2818, %v2819
      %v2821 = vrot.slane %v2793, 2
      %v2822 = vrot.slane %v2601, 2
      %v2823 = vsel %vm602, %v2821, %v2822
      %v2824 = vrot.slane %v2794, 2
      %v2825 = vrot.slane %v2603, 2
      %v2826 = vsel %vm602, %v2824, %v2825
      %s2827 = scalar_lea.vmem %s1, 224
      %v2828 = vld [vmem:[%s2827] sm:$0xff]
      %v2829 = vld [vmem:[%s2827 + $0x8] sm:$0xf]
      %v2830 = vsel %vm328, %v2805, 0
      %v2832 = vsel %vm328, %v2808, 0
      %v2834 = vsel %vm328, %v2811, 0
      %v2836 = vsel %vm328, %v2814, 0
      %v2838 = vsel %vm328, %v2817, 0
      %v2840 = vsel %vm328, %v2820, 0
      %v2842 = vsel %vm328, %v2823, 0
      %v2844 = vsel %vm328, %v2826, 0
      %v2847 = vsel %vm345, %v2829, 0
      %2849 = vmatprep.subr.mxu0 0.0
      %2850 = vmatpush1.msra.mxu0 %v2828
      %2851 = vmatprep.subr.mxu0 0.0
      %2852 = vmatpush1.msra.mxu0 %v2847
      %2853 = vmatprep.subr.mxu0 0.0
      %2854 = vmatpush1.msra.mxu0 0.0
      %2855 = vmatprep.subr.mxu0 0.0
      %2856 = vmatpush1.msra.mxu0 0.0
      %2857 = vmatprep.subr.mxu0 0.0
      %2858 = vmatpush1.msra.mxu0 0.0
      %2859 = vmatprep.subr.mxu0 0.0
      %2860 = vmatpush1.msra.mxu0 0.0
      %2861 = vmatprep.subr.mxu0 0.0
      %2862 = vmatpush1.msra.mxu0 0.0
      %2863 = vmatprep.subr.mxu0 0.0
      %2864 = vmatpush1.msra.mxu0 0.0
      %2865 = vmatprep.subr.mxu0 0.0
      %2866 = vmatpush1.msra.mxu0 0.0
      %2867 = vmatprep.subr.mxu0 0.0
      %2868 = vmatpush1.msra.mxu0 0.0
      %2869 = vmatprep.subr.mxu0 0.0
      %2870 = vmatpush1.msra.mxu0 0.0
      %2871 = vmatprep.subr.mxu0 0.0
      %2872 = vmatpush1.msra.mxu0 0.0
      %2873 = vmatprep.subr.mxu0 0.0
      %2874 = vmatpush1.msra.mxu0 0.0
      %2875 = vmatprep.subr.mxu0 0.0
      %2876 = vmatpush1.msra.mxu0 0.0
      %2877 = vmatprep.subr.mxu0 0.0
      %2878 = vmatpush1.msra.mxu0 0.0
      %2879 = vmatprep.subr.mxu0 0.0
      %2880 = vmatpush1.msra.mxu0 0.0
      %2881 = vmatprep.subr.mxu0 0.0
      %2882 = vmatpush1.msra.mxu0 0.0
      %2883 = vmatprep.subr.mxu0 0.0
      %2884 = vmatpush1.msra.mxu0 0.0
      %2885 = vmatprep.subr.mxu0 0.0
      %2886 = vmatpush1.msra.mxu0 0.0
      %2887 = vmatprep.subr.mxu0 0.0
      %2888 = vmatpush1.msra.mxu0 0.0
      %2889 = vmatprep.subr.mxu0 0.0
      %2890 = vmatpush1.msra.mxu0 0.0
      %2891 = vmatprep.subr.mxu0 0.0
      %2892 = vmatpush1.msra.mxu0 0.0
      %2893 = vmatprep.subr.mxu0 0.0
      %2894 = vmatpush1.msra.mxu0 0.0
      %2895 = vmatprep.subr.mxu0 0.0
      %2896 = vmatpush1.msra.mxu0 0.0
      %2897 = vmatprep.subr.mxu0 0.0
      %2898 = vmatpush1.msra.mxu0 0.0
      %2899 = vmatprep.subr.mxu0 0.0
      %2900 = vmatpush1.msra.mxu0 0.0
      %2901 = vmatprep.subr.mxu0 0.0
      %2902 = vmatpush1.msra.mxu0 0.0
      %2903 = vmatprep.subr.mxu0 0.0
      %2904 = vmatpush1.msra.mxu0 0.0
      %2905 = vmatprep.subr.mxu0 0.0
      %2906 = vmatpush1.msra.mxu0 0.0
      %2907 = vmatprep.subr.mxu0 0.0
      %2908 = vmatpush1.msra.mxu0 0.0
      %2909 = vmatprep.subr.mxu0 0.0
      %2910 = vmatpush1.msra.mxu0 0.0
      %2911 = vmatprep.subr.mxu0 0.0
      %2912 = vmatpush1.msra.mxu0 0.0
      %2913 = vmatprep.mubr.f32.mxu0 0.0
      %2914 = vmatmul.mubr.f32.gmra.mrb[0].mxu0 %v2830
      %v2915 = vpop.f32.mrb[0].mxu0
      %v2916 = vadd.f32 0.0, %v2915
      %v2917 = vpop.f32.mrb[0].mxu0
      %2918 = vmatprep.mubr.f32.mxu0 0.0
      %2919 = vmatmul.mubr.f32.gmra.mrb[0].mxu0 %v2832
      %v2920 = vpop.f32.mrb[0].mxu0
      %v2921 = vadd.f32 0.0, %v2920
      %v2922 = vpop.f32.mrb[0].mxu0
      %2923 = vmatprep.mubr.f32.mxu0 0.0
      %2924 = vmatmul.mubr.f32.gmra.mrb[0].mxu0 %v2834
      %v2925 = vpop.f32.mrb[0].mxu0
      %v2926 = vadd.f32 0.0, %v2925
      %v2927 = vpop.f32.mrb[0].mxu0
      %2928 = vmatprep.mubr.f32.mxu0 0.0
      %2929 = vmatmul.mubr.f32.gmra.mrb[0].mxu0 %v2836
      %v2930 = vpop.f32.mrb[0].mxu0
      %v2931 = vadd.f32 0.0, %v2930
      %v2932 = vpop.f32.mrb[0].mxu0
      %2933 = vmatprep.mubr.f32.mxu0 0.0
      %2934 = vmatmul.mubr.f32.gmra.mrb[0].mxu0 %v2838
      %v2935 = vpop.f32.mrb[0].mxu0
      %v2936 = vadd.f32 0.0, %v2935
      %v2937 = vpop.f32.mrb[0].mxu0
      %2938 = vmatprep.mubr.f32.mxu0 0.0
      %2939 = vmatmul.mubr.f32.gmra.mrb[0].mxu0 %v2840
      %v2940 = vpop.f32.mrb[0].mxu0
      %v2941 = vadd.f32 0.0, %v2940
      %v2942 = vpop.f32.mrb[0].mxu0
      %2943 = vmatprep.mubr.f32.mxu0 0.0
      %2944 = vmatmul.mubr.f32.gmra.mrb[0].mxu0 %v2842
      %v2945 = vpop.f32.mrb[0].mxu0
      %v2946 = vadd.f32 0.0, %v2945
      %v2947 = vpop.f32.mrb[0].mxu0
      %2948 = vmatprep.mubr.f32.mxu0 0.0
      %2949 = vmatmul.mubr.f32.gmra.mrb[0].mxu0 %v2844
      %v2950 = vpop.f32.mrb[0].mxu0
      %v2951 = vadd.f32 0.0, %v2950
      %v2952 = vpop.f32.mrb[0].mxu0
      %2953 = vdwg.mxu0
      %v2954 = vadd.f32 %v2771, %v2916
      %v2955 = vadd.f32 %v2772, %v2921
      %v2956 = vadd.f32 %v2773, %v2926
      %v2957 = vadd.f32 %v2774, %v2931
      %v2958 = vadd.f32 %v2775, %v2936
      %v2959 = vadd.f32 %v2776, %v2941
      %v2960 = vadd.f32 %v2777, %v2946
      %v2961 = vadd.f32 %v2778, %v2951
      %v2962 = vld [vmem:[%s2412 + $0x4] sm:$0x3]
      %v2963 = vld [vmem:[%s2412 + $0xc] sm:$0x3]
      %v2964 = vld [vmem:[%s2412 + $0x14] sm:$0x3]
      %v2965 = vld [vmem:[%s2412 + $0x1c] sm:$0x3]
      %v2966 = vld [vmem:[%s2412 + $0x24] sm:$0x3]
      %v2967 = vld [vmem:[%s2412 + $0x2c] sm:$0x3]
      %v2968 = vld [vmem:[%s2412 + $0x34] sm:$0x3]
      %v2969 = vld [vmem:[%s2412 + $0x3c] sm:$0x3]
      %v2970 = vunpack.c.l.bf16 %v2962
      %v2971 = vunpack.c.l.bf16 %v2963
      %v2972 = vunpack.c.l.bf16 %v2964
      %v2973 = vunpack.c.l.bf16 %v2965
      %v2974 = vunpack.c.l.bf16 %v2966
      %v2975 = vunpack.c.l.bf16 %v2967
      %v2976 = vunpack.c.l.bf16 %v2968
      %v2977 = vunpack.c.l.bf16 %v2969
      %v2986 = vrot.slane %v2787, 3
      %v2987 = vrot.slane %v2970, 3
      %v2988 = vsel %vm786, %v2986, %v2987
      %v2989 = vrot.slane %v2788, 3
      %v2990 = vrot.slane %v2971, 3
      %v2991 = vsel %vm786, %v2989, %v2990
      %v2992 = vrot.slane %v2789, 3
      %v2993 = vrot.slane %v2972, 3
      %v2994 = vsel %vm786, %v2992, %v2993
      %v2995 = vrot.slane %v2790, 3
      %v2996 = vrot.slane %v2973, 3
      %v2997 = vsel %vm786, %v2995, %v2996
      %v2998 = vrot.slane %v2791, 3
      %v2999 = vrot.slane %v2974, 3
      %v3000 = vsel %vm786, %v2998, %v2999
      %v3001 = vrot.slane %v2792, 3
      %v3002 = vrot.slane %v2975, 3
      %v3003 = vsel %vm786, %v3001, %v3002
      %v3004 = vrot.slane %v2793, 3
      %v3005 = vrot.slane %v2976, 3
      %v3006 = vsel %vm786, %v3004, %v3005
      %v3007 = vrot.slane %v2794, 3
      %v3008 = vrot.slane %v2977, 3
      %v3009 = vsel %vm786, %v3007, %v3008
      %s3010 = scalar_lea.vmem %s1, 240
      %v3011 = vld [vmem:[%s3010] sm:$0xff]
      %v3012 = vld [vmem:[%s3010 + $0x8] sm:$0xf]
      %v3013 = vsel %vm328, %v2988, 0
      %v3015 = vsel %vm328, %v2991, 0
      %v3017 = vsel %vm328, %v2994, 0
      %v3019 = vsel %vm328, %v2997, 0
      %v3021 = vsel %vm328, %v3000, 0
      %v3023 = vsel %vm328, %v3003, 0
      %v3025 = vsel %vm328, %v3006, 0
      %v3027 = vsel %vm328, %v3009, 0
      %v3030 = vsel %vm345, %v3012, 0
      %3032 = vmatprep.subr.mxu0 0.0
      %3033 = vmatpush1.msra.mxu0 %v3011
      %3034 = vmatprep.subr.mxu0 0.0
      %3035 = vmatpush1.msra.mxu0 %v3030
      %3036 = vmatprep.subr.mxu0 0.0
      %3037 = vmatpush1.msra.mxu0 0.0
      %3038 = vmatprep.subr.mxu0 0.0
      %3039 = vmatpush1.msra.mxu0 0.0
      %3040 = vmatprep.subr.mxu0 0.0
      %3041 = vmatpush1.msra.mxu0 0.0
      %3042 = vmatprep.subr.mxu0 0.0
      %3043 = vmatpush1.msra.mxu0 0.0
      %3044 = vmatprep.subr.mxu0 0.0
      %3045 = vmatpush1.msra.mxu0 0.0
      %3046 = vmatprep.subr.mxu0 0.0
      %3047 = vmatpush1.msra.mxu0 0.0
      %3048 = vmatprep.subr.mxu0 0.0
      %3049 = vmatpush1.msra.mxu0 0.0
      %3050 = vmatprep.subr.mxu0 0.0
      %3051 = vmatpush1.msra.mxu0 0.0
      %3052 = vmatprep.subr.mxu0 0.0
      %3053 = vmatpush1.msra.mxu0 0.0
      %3054 = vmatprep.subr.mxu0 0.0
      %3055 = vmatpush1.msra.mxu0 0.0
      %3056 = vmatprep.subr.mxu0 0.0
      %3057 = vmatpush1.msra.mxu0 0.0
      %3058 = vmatprep.subr.mxu0 0.0
      %3059 = vmatpush1.msra.mxu0 0.0
      %3060 = vmatprep.subr.mxu0 0.0
      %3061 = vmatpush1.msra.mxu0 0.0
      %3062 = vmatprep.subr.mxu0 0.0
      %3063 = vmatpush1.msra.mxu0 0.0
      %3064 = vmatprep.subr.mxu0 0.0
      %3065 = vmatpush1.msra.mxu0 0.0
      %3066 = vmatprep.subr.mxu0 0.0
      %3067 = vmatpush1.msra.mxu0 0.0
      %3068 = vmatprep.subr.mxu0 0.0
      %3069 = vmatpush1.msra.mxu0 0.0
      %3070 = vmatprep.subr.mxu0 0.0
      %3071 = vmatpush1.msra.mxu0 0.0
      %3072 = vmatprep.subr.mxu0 0.0
      %3073 = vmatpush1.msra.mxu0 0.0
      %3074 = vmatprep.subr.mxu0 0.0
      %3075 = vmatpush1.msra.mxu0 0.0
      %3076 = vmatprep.subr.mxu0 0.0
      %3077 = vmatpush1.msra.mxu0 0.0
      %3078 = vmatprep.subr.mxu0 0.0
      %3079 = vmatpush1.msra.mxu0 0.0
      %3080 = vmatprep.subr.mxu0 0.0
      %3081 = vmatpush1.msra.mxu0 0.0
      %3082 = vmatprep.subr.mxu0 0.0
      %3083 = vmatpush1.msra.mxu0 0.0
      %3084 = vmatprep.subr.mxu0 0.0
      %3085 = vmatpush1.msra.mxu0 0.0
      %3086 = vmatprep.subr.mxu0 0.0
      %3087 = vmatpush1.msra.mxu0 0.0
      %3088 = vmatprep.subr.mxu0 0.0
      %3089 = vmatpush1.msra.mxu0 0.0
      %3090 = vmatprep.subr.mxu0 0.0
      %3091 = vmatpush1.msra.mxu0 0.0
      %3092 = vmatprep.subr.mxu0 0.0
      %3093 = vmatpush1.msra.mxu0 0.0
      %3094 = vmatprep.subr.mxu0 0.0
      %3095 = vmatpush1.msra.mxu0 0.0
      %3096 = vmatprep.mubr.f32.mxu0 0.0
      %3097 = vmatmul.mubr.f32.gmra.mrb[0].mxu0 %v3013
      %v3098 = vpop.f32.mrb[0].mxu0
      %v3099 = vadd.f32 0.0, %v3098
      %v3100 = vpop.f32.mrb[0].mxu0
      %3101 = vmatprep.mubr.f32.mxu0 0.0
      %3102 = vmatmul.mubr.f32.gmra.mrb[0].mxu0 %v3015
      %v3103 = vpop.f32.mrb[0].mxu0
      %v3104 = vadd.f32 0.0, %v3103
      %v3105 = vpop.f32.mrb[0].mxu0
      %3106 = vmatprep.mubr.f32.mxu0 0.0
      %3107 = vmatmul.mubr.f32.gmra.mrb[0].mxu0 %v3017
      %v3108 = vpop.f32.mrb[0].mxu0
      %v3109 = vadd.f32 0.0, %v3108
      %v3110 = vpop.f32.mrb[0].mxu0
      %3111 = vmatprep.mubr.f32.mxu0 0.0
      %3112 = vmatmul.mubr.f32.gmra.mrb[0].mxu0 %v3019
      %v3113 = vpop.f32.mrb[0].mxu0
      %v3114 = vadd.f32 0.0, %v3113
      %v3115 = vpop.f32.mrb[0].mxu0
      %3116 = vmatprep.mubr.f32.mxu0 0.0
      %3117 = vmatmul.mubr.f32.gmra.mrb[0].mxu0 %v3021
      %v3118 = vpop.f32.mrb[0].mxu0
      %v3119 = vadd.f32 0.0, %v3118
      %v3120 = vpop.f32.mrb[0].mxu0
      %3121 = vmatprep.mubr.f32.mxu0 0.0
      %3122 = vmatmul.mubr.f32.gmra.mrb[0].mxu0 %v3023
      %v3123 = vpop.f32.mrb[0].mxu0
      %v3124 = vadd.f32 0.0, %v3123
      %v3125 = vpop.f32.mrb[0].mxu0
      %3126 = vmatprep.mubr.f32.mxu0 0.0
      %3127 = vmatmul.mubr.f32.gmra.mrb[0].mxu0 %v3025
      %v3128 = vpop.f32.mrb[0].mxu0
      %v3129 = vadd.f32 0.0, %v3128
      %v3130 = vpop.f32.mrb[0].mxu0
      %3131 = vmatprep.mubr.f32.mxu0 0.0
      %3132 = vmatmul.mubr.f32.gmra.mrb[0].mxu0 %v3027
      %v3133 = vpop.f32.mrb[0].mxu0
      %v3134 = vadd.f32 0.0, %v3133
      %v3135 = vpop.f32.mrb[0].mxu0
      %3136 = vdwg.mxu0
      %v3137 = vadd.f32 %v2954, %v3099
      %v3138 = vadd.f32 %v2955, %v3104
      %v3139 = vadd.f32 %v2956, %v3109
      %v3140 = vadd.f32 %v2957, %v3114
      %v3141 = vadd.f32 %v2958, %v3119
      %v3142 = vadd.f32 %v2959, %v3124
      %v3143 = vadd.f32 %v2960, %v3129
      %v3144 = vadd.f32 %v2961, %v3134
      %v3146 = vlaneseq
      %v3147 = vshrl.u32 %v3146, 7
      %v3148 = vsub.s32 0, %v3147
      %v3149 = vrot.slane %v248, %v3148
      %v3151 = vmul.f32 %v3137, %v3149
      %v3152 = vmul.f32 %v3138, %v3149
      %v3153 = vmul.f32 %v3139, %v3149
      %v3154 = vmul.f32 %v3140, %v3149
      %v3155 = vmul.f32 %v3141, %v3149
      %v3156 = vmul.f32 %v3142, %v3149
      %v3157 = vmul.f32 %v3143, %v3149
      %v3158 = vmul.f32 %v3144, %v3149
      %v3160 = vlaneseq
      %v3161 = vshrl.u32 %v3160, 7
      %v3162 = vsub.s32 0, %v3161
      %v3163 = vrot.slane %v249, %v3162
      %v3165 = vadd.f32 %v3151, %v3163
      %v3166 = vadd.f32 %v3152, %v3163
      %v3167 = vadd.f32 %v3153, %v3163
      %v3168 = vadd.f32 %v3154, %v3163
      %v3169 = vadd.f32 %v3155, %v3163
      %v3170 = vadd.f32 %v3156, %v3163
      %v3171 = vadd.f32 %v3157, %v3163
      %v3172 = vadd.f32 %v3158, %v3163
      %v3173 = vmax.f32 %v3165, 0.0
      %v3174 = vmax.f32 %v3166, 0.0
      %v3175 = vmax.f32 %v3167, 0.0
      %v3176 = vmax.f32 %v3168, 0.0
      %v3177 = vmax.f32 %v3169, 0.0
      %v3178 = vmax.f32 %v3170, 0.0
      %v3179 = vmax.f32 %v3171, 0.0
      %v3180 = vmax.f32 %v3172, 0.0
      %v3181 = vadd.f32 %v3173, %v3174
      %v3182 = vadd.f32 %v3181, %v3175
      %v3183 = vadd.f32 %v3182, %v3176
      %v3184 = vadd.f32 %v3183, %v3177
      %v3185 = vadd.f32 %v3184, %v3178
      %v3186 = vadd.f32 %v3185, %v3179
      %v3187 = vadd.f32 %v3186, %v3180
      %v3188 = vrot.slane %v3187, 4
      %v3189 = vadd.f32 %v3187, %v3188
      %v3190 = vrot.slane %v3189, 2
      %v3191 = vadd.f32 %v3189, %v3190
      %v3192 = vrot.slane %v3191, 1
      %v3193 = vadd.f32 %v3191, %v3192
      %v3194 = vadd.f32 %v3193, 0.0
      %v3195 = vmul.f32 %v3194, 0.015625
      %v3196 = vld [vmem:[%s4] sm:$0xff]
      %v3197 = vld [vmem:[%s4 + $0x8] sm:$0xff]
      %v3198 = vld [vmem:[%s4 + $0x10] sm:$0xff]
      %v3199 = vld [vmem:[%s4 + $0x18] sm:$0xff]
      %v3200 = vld [vmem:[%s4 + $0x20] sm:$0xff]
      %v3201 = vld [vmem:[%s4 + $0x28] sm:$0xff]
      %v3202 = vld [vmem:[%s4 + $0x30] sm:$0xff]
      %v3203 = vld [vmem:[%s4 + $0x38] sm:$0xff]
      %v3204 = vld [vmem:[%s4 + $0x40] sm:$0xff]
      %v3205 = vld [vmem:[%s4 + $0x48] sm:$0xff]
      %v3206 = vld [vmem:[%s4 + $0x50] sm:$0xff]
      %v3207 = vld [vmem:[%s4 + $0x58] sm:$0xff]
      %v3208 = vld [vmem:[%s4 + $0x60] sm:$0xff]
      %v3209 = vld [vmem:[%s4 + $0x68] sm:$0xff]
      %v3210 = vld [vmem:[%s4 + $0x70] sm:$0xff]
      %v3211 = vld [vmem:[%s4 + $0x78] sm:$0xff]
      %v3212 = vld [vmem:[%s5] sm:$0x1]
      %3213 = vmatprep.subr.mxu0 0.0
      %3214 = vmatpush1.msra.mxu0 %v3196
      %3215 = vmatprep.subr.mxu0 0.0
      %3216 = vmatpush1.msra.mxu0 %v3197
      %3217 = vmatprep.subr.mxu0 0.0
      %3218 = vmatpush1.msra.mxu0 %v3198
      %3219 = vmatprep.subr.mxu0 0.0
      %3220 = vmatpush1.msra.mxu0 %v3199
      %3221 = vmatprep.subr.mxu0 0.0
      %3222 = vmatpush1.msra.mxu0 %v3200
      %3223 = vmatprep.subr.mxu0 0.0
      %3224 = vmatpush1.msra.mxu0 %v3201
      %3225 = vmatprep.subr.mxu0 0.0
      %3226 = vmatpush1.msra.mxu0 %v3202
      %3227 = vmatprep.subr.mxu0 0.0
      %3228 = vmatpush1.msra.mxu0 %v3203
      %3229 = vmatprep.subr.mxu0 0.0
      %3230 = vmatpush1.msra.mxu0 %v3204
      %3231 = vmatprep.subr.mxu0 0.0
      %3232 = vmatpush1.msra.mxu0 %v3205
      %3233 = vmatprep.subr.mxu0 0.0
      %3234 = vmatpush1.msra.mxu0 %v3206
      %3235 = vmatprep.subr.mxu0 0.0
      %3236 = vmatpush1.msra.mxu0 %v3207
      %3237 = vmatprep.subr.mxu0 0.0
      %3238 = vmatpush1.msra.mxu0 %v3208
      %3239 = vmatprep.subr.mxu0 0.0
      %3240 = vmatpush1.msra.mxu0 %v3209
      %3241 = vmatprep.subr.mxu0 0.0
      %3242 = vmatpush1.msra.mxu0 %v3210
      %3243 = vmatprep.subr.mxu0 0.0
      %3244 = vmatpush1.msra.mxu0 %v3211
      %3245 = vmatprep.subr.mxu0 0.0
      %3246 = vmatpush1.msra.mxu0 0.0
      %3247 = vmatprep.subr.mxu0 0.0
      %3248 = vmatpush1.msra.mxu0 0.0
      %3249 = vmatprep.subr.mxu0 0.0
      %3250 = vmatpush1.msra.mxu0 0.0
      %3251 = vmatprep.subr.mxu0 0.0
      %3252 = vmatpush1.msra.mxu0 0.0
      %3253 = vmatprep.subr.mxu0 0.0
      %3254 = vmatpush1.msra.mxu0 0.0
      %3255 = vmatprep.subr.mxu0 0.0
      %3256 = vmatpush1.msra.mxu0 0.0
      %3257 = vmatprep.subr.mxu0 0.0
      %3258 = vmatpush1.msra.mxu0 0.0
      %3259 = vmatprep.subr.mxu0 0.0
      %3260 = vmatpush1.msra.mxu0 0.0
      %3261 = vmatprep.subr.mxu0 0.0
      %3262 = vmatpush1.msra.mxu0 0.0
      %3263 = vmatprep.subr.mxu0 0.0
      %3264 = vmatpush1.msra.mxu0 0.0
      %3265 = vmatprep.subr.mxu0 0.0
      %3266 = vmatpush1.msra.mxu0 0.0
      %3267 = vmatprep.subr.mxu0 0.0
      %3268 = vmatpush1.msra.mxu0 0.0
      %3269 = vmatprep.subr.mxu0 0.0
      %3270 = vmatpush1.msra.mxu0 0.0
      %3271 = vmatprep.subr.mxu0 0.0
      %3272 = vmatpush1.msra.mxu0 0.0
      %3273 = vmatprep.subr.mxu0 0.0
      %3274 = vmatpush1.msra.mxu0 0.0
      %3275 = vmatprep.subr.mxu0 0.0
      %3276 = vmatpush1.msra.mxu0 0.0
      %3277 = vmatprep.mubr.f32.mxu0 0.0
      %3278 = vmatmul.mubr.f32.gmra.mrb[0].mxu0 %v3195
      %v3279 = vpop.f32.mrb[0].mxu0
      %v3280 = vadd.f32 %v3212, %v3279
      %v3281 = vpop.f32.mrb[0].mxu0
      %3282 = vdwg.mxu0
      %3283 = vst [vmem:[%s247] sm:$0x1] %v3280
      %p3284 = scmp.lt.s32.totalorder %s17, 7
      %s3285 = scalar_select %p3284, %s17, 7
      %s3286 = scalar_lea.vmem %s6, %s3285
      // Predicated region
      $region45: #{tsn_forward.1} parent=43 // pred_check
        %p3287 = pneg %p166
      $region46: #{tsn_forward.1} parent=43 // pred_check_branch
        %3289 = sbr.rel (%p3287) target = $region48
      $region47: #{tsn_forward.1} parent=43 // pred_region
        _
      $region48: #{tsn_forward.1} parent=43 // pred_fallthru
        _
    $region44: #{tsn_forward.1} parent=5 // pred_fallthru
      _
    %p3290 = scmp.le.s32.totalorder 2, %s12
    // Predicated region
    $region49: #{tsn_forward.1} parent=5 // pred_check
      %p3291 = pneg %p3290
    $region50: #{tsn_forward.1} parent=5 // pred_check_branch
      %3293 = sbr.rel (%p3291) target = $region52
    $region51: #{tsn_forward.1} parent=5 // pred_region
      %s3294 = ssub.s32 %s12, 2
      // Predicated region
      $region53: #{tsn_forward.1} parent=51 // pred_check
        %p3295 = pneg %p172
      $region54: #{tsn_forward.1} parent=51 // pred_check_branch
        %3297 = sbr.rel (%p3295) target = $region56
      $region55: #{tsn_forward.1} parent=51 // pred_region
        %p3298 = scmp.lt.s32.totalorder %s18, 7
        %s3299 = scalar_select %p3298, %s18, 7
        %s3300 = scalar_lea.vmem %s6, %s3299
      $region56: #{tsn_forward.1} parent=51 // pred_fallthru
        _
    $region52: #{tsn_forward.1} parent=5 // pred_fallthru
      _
  $region6: #{tsn_forward.1} parent=0 // loop_footer
    %s16 = sadd.s32 1, %s12
  $region7: #{tsn_forward.1} parent=0 // loop_footer_branch
    %11 = sbr.rel target = $region3
  $region8: #{tsn_forward.1} parent=0 // loop_exit
    _

</llo_original>
